<compile_context>
chip_gen: v7x
topology: tpu7x:2x2x1
jax: 0.10.0
libtpu: 0.0.40
codegen_flags: <defaults>
</compile_context>

<pallas_src>
import functools
import math

import jax
import jax.numpy as jnp
from jax import lax
from jax.experimental import pallas as pl
from jax.experimental.pallas import tpu as pltpu

# ------------------------- tiny BERT config -------------------------
VOCAB = 100
MAX_POS = 16
TYPE_VOCAB = 2
HIDDEN = 32
N_HEADS = 2
HEAD_DIM = HIDDEN // N_HEADS
INTERMEDIATE = 64
N_LAYERS = 2
NUM_CLASSES = 3
LN_EPS = 1e-12

B = 2   # batch
S = 8   # sequence length


# ------------------------- fused Pallas kernel -------------------------
def _layernorm(h, g, b):
    mean = jnp.mean(h, axis=-1, keepdims=True)
    var = jnp.mean((h - mean) ** 2, axis=-1, keepdims=True)
    return (h - mean) * lax.rsqrt(var + LN_EPS) * g + b


def _bert_kernel(emb_ref, mask_ref, labels_ref,
                 emb_ln_g_ref, emb_ln_b_ref,
                 wqkv_ref, bqkv_ref, wo_ref, bo_ref,
                 ln1_g_ref, ln1_b_ref,
                 w1_ref, b1_ref, w2_ref, b2_ref,
                 ln2_g_ref, ln2_b_ref,
                 wp_ref, bp_ref, wc_ref, bc_ref,
                 probs_ref, loss_ref,
                 *, batch, seq, n_layers, n_heads, head_dim, hidden):
    f32 = jnp.float32
    scale = 1.0 / math.sqrt(head_dim)

    # Embedding LayerNorm (residual-free; no zero residual materialized).
    x = _layernorm(emb_ref[...], emb_ln_g_ref[...], emb_ln_b_ref[...])      # (B*S, H)

    # Additive attention mask built in-kernel from the raw (B, S) mask (HF convention).
    add_mask = (1.0 - mask_ref[...]) * -10000.0                              # (B, S)

    # NOTE: dropout layers are inference no-ops (deterministic forward).
    for l in range(n_layers):
        # Fused QKV projection: single MXU matmul against [H, 3H].
        qkv = jnp.dot(x, wqkv_ref[l], preferred_element_type=f32) + bqkv_ref[l]  # (B*S, 3H)
        wo_l = wo_ref[l]                                                     # (H, H)

        attn_rows = []
        for b in range(batch):
            r0, r1 = b * seq, (b + 1) * seq
            m_b = add_mask[b:b + 1, :]                                       # (1, S)
            out_b = None
            for h in range(n_heads):
                c0 = h * head_dim
                q_bh = qkv[r0:r1, c0:c0 + head_dim]                          # (S, Dh)
                k_bh = qkv[r0:r1, hidden + c0: hidden + c0 + head_dim]       # (S, Dh)
                v_bh = qkv[r0:r1, 2 * hidden + c0: 2 * hidden + c0 + head_dim]
                # NT matmul (contract last dims) — no explicit k.T transpose.
                scores = lax.dot_general(
                    q_bh, k_bh, (((1,), (1,)), ((), ())),
                    preferred_element_type=f32) * scale + m_b                # (S, S)
                scores = scores - jnp.max(scores, axis=-1, keepdims=True)
                p = jnp.exp(scores)
                p = p / jnp.sum(p, axis=-1, keepdims=True)
                ctx_bh = jnp.dot(p, v_bh, preferred_element_type=f32)        # (S, Dh)
                # Output projection folded per-head: sum_h ctx_h @ Wo[h*Dh:(h+1)*Dh, :].
                contrib = jnp.dot(ctx_bh, wo_l[c0:c0 + head_dim, :],
                                  preferred_element_type=f32)                # (S, H)
                out_b = contrib if out_b is None else out_b + contrib
            attn_rows.append(out_b)
        attn_out = jnp.concatenate(attn_rows, axis=0) + bo_ref[l]            # (B*S, H)

        # Residual add + LayerNorm fused as the matmul epilogue.
        x = _layernorm(attn_out + x, ln1_g_ref[l], ln1_b_ref[l])

        # FFN: w1 + gelu, w2, residual + LN — all VMEM-resident.
        inter = jnp.dot(x, w1_ref[l], preferred_element_type=f32) + b1_ref[l]
        # TODO(synk): HF BERT default 'gelu' is erf-based; tanh approximation used for
        # robust Mosaic lowering (numerically very close).
        inter = jax.nn.gelu(inter, approximate=True)
        ffn = jnp.dot(inter, w2_ref[l], preferred_element_type=f32) + b2_ref[l]
        x = _layernorm(ffn + x, ln2_g_ref[l], ln2_b_ref[l])

    # Gather the [CLS] row of each sequence (row b*S) with a one-hot selection matmul.
    col = lax.broadcasted_iota(jnp.int32, (batch, batch * seq), 1)
    row = lax.broadcasted_iota(jnp.int32, (batch, batch * seq), 0)
    sel = (col == row * seq).astype(f32)                                     # (B, B*S)
    cls = jnp.dot(sel, x, preferred_element_type=f32)                        # (B, H)

    # BERT pooler -> classifier -> sigmoid -> BCE, all fused.
    pooled = jnp.tanh(jnp.dot(cls, wp_ref[...], preferred_element_type=f32) + bp_ref[...])
    logits = jnp.dot(pooled, wc_ref[...], preferred_element_type=f32) + bc_ref[...]
    probs = jax.nn.sigmoid(logits)
    probs_ref[...] = probs

    y = labels_ref[...]
    # PyTorch BCELoss clamps each log term at -100.
    log_p = jnp.maximum(jnp.log(probs), -100.0)
    log_1mp = jnp.maximum(jnp.log(1.0 - probs), -100.0)
    loss_ref[...] = -jnp.mean(y * log_p + (1.0 - y) * log_1mp, keepdims=True).reshape(1, 1)


def _full_spec(shape):
    nd = len(shape)
    return pl.BlockSpec(shape, lambda i, nd=nd: (0,) * nd)


def _fused_forward(params, emb, mask, labels):
    bsz, seq = mask.shape
    args = (emb, mask, labels,
            params["emb_ln_g"], params["emb_ln_b"],
            params["wqkv"], params["bqkv"], params["wo"], params["bo"],
            params["ln1_g"], params["ln1_b"],
            params["w1"], params["b1"], params["w2"], params["b2"],
            params["ln2_g"], params["ln2_b"],
            params["wp"], params["bp"], params["wc"], params["bc"])
    kernel = functools.partial(
        _bert_kernel, batch=bsz, seq=seq, n_layers=N_LAYERS,
        n_heads=N_HEADS, head_dim=HEAD_DIM, hidden=HIDDEN)
    probs, loss2d = pl.pallas_call(
        kernel,
        out_shape=(jax.ShapeDtypeStruct((bsz, NUM_CLASSES), jnp.float32),
                   jax.ShapeDtypeStruct((1, 1), jnp.float32)),
        grid=(1,),
        in_specs=[_full_spec(a.shape) for a in args],
        out_specs=(_full_spec((bsz, NUM_CLASSES)), _full_spec((1, 1))),
        compiler_params=pltpu.CompilerParams(dimension_semantics=("arbitrary",)),
    )(*args)
    return probs, loss2d


# ------------------------- parameter init (deterministic, synthetic) -------------------------
def init_params(key):
    keys = iter(jax.random.split(key, 64))

    def normal(shape):
        return 0.02 * jax.random.normal(next(keys), shape, jnp.float32)

    L = N_LAYERS
    return {
        "word_emb": normal((VOCAB, HIDDEN)),
        "pos_emb": normal((MAX_POS, HIDDEN)),
        "type_emb": normal((TYPE_VOCAB, HIDDEN)),
        "emb_ln_g": jnp.ones((1, HIDDEN), jnp.float32),
        "emb_ln_b": jnp.zeros((1, HIDDEN), jnp.float32),
        # Per-layer weights stacked on a leading layer axis; Q/K/V fused into [H, 3H].
        "wqkv": normal((L, HIDDEN, 3 * HIDDEN)),
        "bqkv": jnp.zeros((L, 1, 3 * HIDDEN), jnp.float32),
        "wo": normal((L, HIDDEN, HIDDEN)),
        "bo": jnp.zeros((L, 1, HIDDEN), jnp.float32),
        "ln1_g": jnp.ones((L, 1, HIDDEN), jnp.float32),
        "ln1_b": jnp.zeros((L, 1, HIDDEN), jnp.float32),
        "w1": normal((L, HIDDEN, INTERMEDIATE)),
        "b1": jnp.zeros((L, 1, INTERMEDIATE), jnp.float32),
        "w2": normal((L, INTERMEDIATE, HIDDEN)),
        "b2": jnp.zeros((L, 1, HIDDEN), jnp.float32),
        "ln2_g": jnp.ones((L, 1, HIDDEN), jnp.float32),
        "ln2_b": jnp.zeros((L, 1, HIDDEN), jnp.float32),
        "wp": normal((HIDDEN, HIDDEN)),
        "bp": jnp.zeros((1, HIDDEN), jnp.float32),
        "wc": normal((HIDDEN, NUM_CLASSES)),
        "bc": jnp.zeros((1, NUM_CLASSES), jnp.float32),
    }


# ------------------------- forward pass (BertClassifier.forward) -------------------------
def bert_classifier_forward(params, input_ids, attention_mask=None, token_type_ids=None,
                            position_ids=None, head_mask=None, labels=None):
    del head_mask  # HF default None; not modeled.
    bsz, seq = input_ids.shape
    if attention_mask is None:
        attention_mask = jnp.ones((bsz, seq), jnp.float32)
    if token_type_ids is None:
        token_type_ids = jnp.zeros((bsz, seq), jnp.int32)
    if position_ids is None:
        position_ids = jnp.broadcast_to(jnp.arange(seq, dtype=jnp.int32), (bsz, seq))

    # Embedding gathers are data-dependent; kept as XLA glue scheduled under jit.
    emb = (params["word_emb"][input_ids]
           + params["pos_emb"][position_ids]
           + params["type_emb"][token_type_ids]).reshape(bsz * seq, HIDDEN).astype(jnp.float32)

    has_labels = labels is not None
    lbl = (labels.astype(jnp.float32) if has_labels
           else jnp.zeros((bsz, NUM_CLASSES), jnp.float32))

    probs, loss2d = _fused_forward(params, emb, attention_mask.astype(jnp.float32), lbl)
    loss = loss2d[0, 0] if has_labels else jnp.float32(0.0)
    return loss, probs


# ------------------------- demo -------------------------
if __name__ == "__main__":
    key = jax.random.PRNGKey(0)
    k_param, k_ids, k_lbl = jax.random.split(key, 3)

    params = init_params(k_param)
    input_ids = jax.random.randint(k_ids, (B, S), 0, VOCAB, dtype=jnp.int32)
    attention_mask = jnp.ones((B, S), jnp.float32)
    labels = jax.random.uniform(k_lbl, (B, NUM_CLASSES), jnp.float32)   # BCE targets in [0,1]

    fwd = jax.jit(bert_classifier_forward)
    loss, probs = fwd(params, input_ids, attention_mask=attention_mask, labels=labels)
    jax.block_until_ready((loss, probs))
    assert probs.shape == (B, NUM_CLASSES)
    assert bool(jnp.isfinite(loss))
    print("KERNEL_OK")
</pallas_src>

<mosaic_0001>
module attributes {stable_mosaic.version = 11 : i64} {
  func.func @_bert_kernel(%arg0: i32, %arg1: memref<16x32xf32, #tpu.memory_space<vmem>>, %arg2: memref<2x8xf32, #tpu.memory_space<vmem>>, %arg3: memref<2x3xf32, #tpu.memory_space<vmem>>, %arg4: memref<1x32xf32, #tpu.memory_space<vmem>>, %arg5: memref<1x32xf32, #tpu.memory_space<vmem>>, %arg6: memref<2x32x96xf32, #tpu.memory_space<vmem>>, %arg7: memref<2x1x96xf32, #tpu.memory_space<vmem>>, %arg8: memref<2x32x32xf32, #tpu.memory_space<vmem>>, %arg9: memref<2x1x32xf32, #tpu.memory_space<vmem>>, %arg10: memref<2x1x32xf32, #tpu.memory_space<vmem>>, %arg11: memref<2x1x32xf32, #tpu.memory_space<vmem>>, %arg12: memref<2x32x64xf32, #tpu.memory_space<vmem>>, %arg13: memref<2x1x64xf32, #tpu.memory_space<vmem>>, %arg14: memref<2x64x32xf32, #tpu.memory_space<vmem>>, %arg15: memref<2x1x32xf32, #tpu.memory_space<vmem>>, %arg16: memref<2x1x32xf32, #tpu.memory_space<vmem>>, %arg17: memref<2x1x32xf32, #tpu.memory_space<vmem>>, %arg18: memref<32x32xf32, #tpu.memory_space<vmem>>, %arg19: memref<1x32xf32, #tpu.memory_space<vmem>>, %arg20: memref<32x3xf32, #tpu.memory_space<vmem>>, %arg21: memref<1x3xf32, #tpu.memory_space<vmem>>, %arg22: memref<2x3xf32, #tpu.memory_space<vmem>>, %arg23: memref<1x1xf32, #tpu.memory_space<vmem>>) attributes {dimension_semantics = [#tpu.dimension_semantics<arbitrary>], iteration_bounds = array<i64: 1>, scalar_prefetch = 0 : i64, scratch_operands = 0 : i64, tpu.core_type = #tpu.core_type<tc>, window_params = [{pipeline_mode = #tpu.pipeline_mode<synchronous>, transform_indices = @transform_0, window_bounds = array<i64: 16, 32>}, {pipeline_mode = #tpu.pipeline_mode<synchronous>, transform_indices = @transform_1, window_bounds = array<i64: 2, 8>}, {pipeline_mode = #tpu.pipeline_mode<synchronous>, transform_indices = @transform_2, window_bounds = array<i64: 2, 3>}, {pipeline_mode = #tpu.pipeline_mode<synchronous>, transform_indices = @transform_3, window_bounds = array<i64: 1, 32>}, {pipeline_mode = #tpu.pipeline_mode<synchronous>, transform_indices = @transform_4, window_bounds = array<i64: 1, 32>}, {pipeline_mode = #tpu.pipeline_mode<synchronous>, transform_indices = @transform_5, window_bounds = array<i64: 2, 32, 96>}, {pipeline_mode = #tpu.pipeline_mode<synchronous>, transform_indices = @transform_6, window_bounds = array<i64: 2, 1, 96>}, {pipeline_mode = #tpu.pipeline_mode<synchronous>, transform_indices = @transform_7, window_bounds = array<i64: 2, 32, 32>}, {pipeline_mode = #tpu.pipeline_mode<synchronous>, transform_indices = @transform_8, window_bounds = array<i64: 2, 1, 32>}, {pipeline_mode = #tpu.pipeline_mode<synchronous>, transform_indices = @transform_9, window_bounds = array<i64: 2, 1, 32>}, {pipeline_mode = #tpu.pipeline_mode<synchronous>, transform_indices = @transform_10, window_bounds = array<i64: 2, 1, 32>}, {pipeline_mode = #tpu.pipeline_mode<synchronous>, transform_indices = @transform_11, window_bounds = array<i64: 2, 32, 64>}, {pipeline_mode = #tpu.pipeline_mode<synchronous>, transform_indices = @transform_12, window_bounds = array<i64: 2, 1, 64>}, {pipeline_mode = #tpu.pipeline_mode<synchronous>, transform_indices = @transform_13, window_bounds = array<i64: 2, 64, 32>}, {pipeline_mode = #tpu.pipeline_mode<synchronous>, transform_indices = @transform_14, window_bounds = array<i64: 2, 1, 32>}, {pipeline_mode = #tpu.pipeline_mode<synchronous>, transform_indices = @transform_15, window_bounds = array<i64: 2, 1, 32>}, {pipeline_mode = #tpu.pipeline_mode<synchronous>, transform_indices = @transform_16, window_bounds = array<i64: 2, 1, 32>}, {pipeline_mode = #tpu.pipeline_mode<synchronous>, transform_indices = @transform_17, window_bounds = array<i64: 32, 32>}, {pipeline_mode = #tpu.pipeline_mode<synchronous>, transform_indices = @transform_18, window_bounds = array<i64: 1, 32>}, {pipeline_mode = #tpu.pipeline_mode<synchronous>, transform_indices = @transform_19, window_bounds = array<i64: 32, 3>}, {pipeline_mode = #tpu.pipeline_mode<synchronous>, transform_indices = @transform_20, window_bounds = array<i64: 1, 3>}, {pipeline_mode = #tpu.pipeline_mode<synchronous>, transform_indices = @transform_21, window_bounds = array<i64: 2, 3>}, {pipeline_mode = #tpu.pipeline_mode<synchronous>, transform_indices = @transform_22, window_bounds = array<i64: 1, 1>}]} {
    %c0 = arith.constant 0 : index
    %c0_0 = arith.constant 0 : index
    %0 = vector.load %arg1[%c0, %c0_0] : memref<16x32xf32, #tpu.memory_space<vmem>>, vector<16x32xf32>
    %c0_1 = arith.constant 0 : index
    %c0_2 = arith.constant 0 : index
    %1 = vector.load %arg4[%c0_1, %c0_2] : memref<1x32xf32, #tpu.memory_space<vmem>>, vector<1x32xf32>
    %c0_3 = arith.constant 0 : index
    %c0_4 = arith.constant 0 : index
    %2 = vector.load %arg5[%c0_3, %c0_4] : memref<1x32xf32, #tpu.memory_space<vmem>>, vector<1x32xf32>
    %cst = arith.constant dense<0.000000e+00> : vector<16xf32>
    %3 = vector.multi_reduction <add>, %0, %cst [1] : vector<16x32xf32> to vector<16xf32>
    %4 = vector.shape_cast %3 : vector<16xf32> to vector<16x1xf32>
    %cst_5 = arith.constant 3.200000e+01 : f32
    %5 = vector.broadcast %cst_5 : f32 to vector<16x1xf32>
    %6 = arith.divf %4, %5 : vector<16x1xf32>
    %7 = vector.broadcast %6 : vector<16x1xf32> to vector<16x32xf32>
    %8 = arith.subf %0, %7 : vector<16x32xf32>
    %9 = arith.mulf %8, %8 : vector<16x32xf32>
    %cst_6 = arith.constant dense<0.000000e+00> : vector<16xf32>
    %10 = vector.multi_reduction <add>, %9, %cst_6 [1] : vector<16x32xf32> to vector<16xf32>
    %11 = vector.shape_cast %10 : vector<16xf32> to vector<16x1xf32>
    %cst_7 = arith.constant 3.200000e+01 : f32
    %12 = vector.broadcast %cst_7 : f32 to vector<16x1xf32>
    %13 = arith.divf %11, %12 : vector<16x1xf32>
    %14 = vector.broadcast %6 : vector<16x1xf32> to vector<16x32xf32>
    %15 = arith.subf %0, %14 : vector<16x32xf32>
    %cst_8 = arith.constant 9.99999996E-13 : f32
    %16 = vector.broadcast %cst_8 : f32 to vector<16x1xf32>
    %17 = arith.addf %13, %16 : vector<16x1xf32>
    %18 = math.rsqrt %17 : vector<16x1xf32>
    %19 = vector.broadcast %18 : vector<16x1xf32> to vector<16x32xf32>
    %20 = arith.mulf %15, %19 : vector<16x32xf32>
    %21 = vector.broadcast %1 : vector<1x32xf32> to vector<16x32xf32>
    %22 = arith.mulf %20, %21 : vector<16x32xf32>
    %23 = vector.broadcast %2 : vector<1x32xf32> to vector<16x32xf32>
    %24 = arith.addf %22, %23 : vector<16x32xf32>
    %c0_9 = arith.constant 0 : index
    %c0_10 = arith.constant 0 : index
    %25 = vector.load %arg2[%c0_9, %c0_10] : memref<2x8xf32, #tpu.memory_space<vmem>>, vector<2x8xf32>
    %cst_11 = arith.constant 1.000000e+00 : f32
    %26 = vector.broadcast %cst_11 : f32 to vector<2x8xf32>
    %27 = arith.subf %26, %25 : vector<2x8xf32>
    %cst_12 = arith.constant -1.000000e+04 : f32
    %28 = vector.broadcast %cst_12 : f32 to vector<2x8xf32>
    %29 = arith.mulf %27, %28 : vector<2x8xf32>
    %c0_13 = arith.constant 0 : index
    %c0_14 = arith.constant 0 : index
    %c0_15 = arith.constant 0 : index
    %30 = vector.load %arg6[%c0_13, %c0_14, %c0_15] : memref<2x32x96xf32, #tpu.memory_space<vmem>>, vector<1x32x96xf32>
    %31 = vector.shape_cast %30 : vector<1x32x96xf32> to vector<32x96xf32>
    %cst_16 = arith.constant dense<0.000000e+00> : vector<16x96xf32>
    %32 = tpu.matmul %24, %31, %cst_16 {dimension_numbers = #tpu.dot_dimension_numbers<[1], [0], [0], [1], [0, 0, 1, 1], [], []>} : vector<16x32xf32>, vector<32x96xf32>, vector<16x96xf32> -> vector<16x96xf32>
    %c0_17 = arith.constant 0 : index
    %c0_18 = arith.constant 0 : index
    %c0_19 = arith.constant 0 : index
    %33 = vector.load %arg7[%c0_17, %c0_18, %c0_19] : memref<2x1x96xf32, #tpu.memory_space<vmem>>, vector<1x1x96xf32>
    %34 = vector.shape_cast %33 : vector<1x1x96xf32> to vector<1x96xf32>
    %35 = vector.broadcast %34 : vector<1x96xf32> to vector<16x96xf32>
    %36 = arith.addf %32, %35 : vector<16x96xf32>
    %c0_20 = arith.constant 0 : index
    %c0_21 = arith.constant 0 : index
    %c0_22 = arith.constant 0 : index
    %37 = vector.load %arg8[%c0_20, %c0_21, %c0_22] : memref<2x32x32xf32, #tpu.memory_space<vmem>>, vector<1x32x32xf32>
    %38 = vector.shape_cast %37 : vector<1x32x32xf32> to vector<32x32xf32>
    %39 = vector.extract_strided_slice %29 {offsets = [0, 0], sizes = [1, 8], strides = [1, 1]} : vector<2x8xf32> to vector<1x8xf32>
    %40 = vector.extract_strided_slice %36 {offsets = [0, 0], sizes = [8, 16], strides = [1, 1]} : vector<16x96xf32> to vector<8x16xf32>
    %41 = vector.extract_strided_slice %36 {offsets = [0, 32], sizes = [8, 16], strides = [1, 1]} : vector<16x96xf32> to vector<8x16xf32>
    %42 = vector.extract_strided_slice %36 {offsets = [0, 64], sizes = [8, 16], strides = [1, 1]} : vector<16x96xf32> to vector<8x16xf32>
    %cst_23 = arith.constant dense<0.000000e+00> : vector<8x8xf32>
    %43 = tpu.matmul %40, %41, %cst_23 {dimension_numbers = #tpu.dot_dimension_numbers<[1], [1], [0], [0], [0, 0, 1, 0], [], []>} : vector<8x16xf32>, vector<8x16xf32>, vector<8x8xf32> -> vector<8x8xf32>
    %cst_24 = arith.constant 2.500000e-01 : f32
    %44 = vector.broadcast %cst_24 : f32 to vector<8x8xf32>
    %45 = arith.mulf %43, %44 : vector<8x8xf32>
    %46 = vector.broadcast %39 : vector<1x8xf32> to vector<8x8xf32>
    %47 = arith.addf %45, %46 : vector<8x8xf32>
    %cst_25 = arith.constant dense<0xFF800000> : vector<8xf32>
    %48 = vector.multi_reduction <maximumf>, %47, %cst_25 [1] : vector<8x8xf32> to vector<8xf32>
    %49 = vector.shape_cast %48 : vector<8xf32> to vector<8x1xf32>
    %50 = vector.broadcast %49 : vector<8x1xf32> to vector<8x8xf32>
    %51 = arith.subf %47, %50 : vector<8x8xf32>
    %52 = math.exp %51 : vector<8x8xf32>
    %cst_26 = arith.constant dense<0.000000e+00> : vector<8xf32>
    %53 = vector.multi_reduction <add>, %52, %cst_26 [1] : vector<8x8xf32> to vector<8xf32>
    %54 = vector.shape_cast %53 : vector<8xf32> to vector<8x1xf32>
    %55 = vector.broadcast %54 : vector<8x1xf32> to vector<8x8xf32>
    %56 = arith.divf %52, %55 : vector<8x8xf32>
    %cst_27 = arith.constant dense<0.000000e+00> : vector<8x16xf32>
    %57 = tpu.matmul %56, %42, %cst_27 {dimension_numbers = #tpu.dot_dimension_numbers<[1], [0], [0], [1], [0, 0, 1, 1], [], []>} : vector<8x8xf32>, vector<8x16xf32>, vector<8x16xf32> -> vector<8x16xf32>
    %58 = vector.extract_strided_slice %38 {offsets = [0, 0], sizes = [16, 32], strides = [1, 1]} : vector<32x32xf32> to vector<16x32xf32>
    %cst_28 = arith.constant dense<0.000000e+00> : vector<8x32xf32>
    %59 = tpu.matmul %57, %58, %cst_28 {dimension_numbers = #tpu.dot_dimension_numbers<[1], [0], [0], [1], [0, 0, 1, 1], [], []>} : vector<8x16xf32>, vector<16x32xf32>, vector<8x32xf32> -> vector<8x32xf32>
    %60 = vector.extract_strided_slice %36 {offsets = [0, 16], sizes = [8, 16], strides = [1, 1]} : vector<16x96xf32> to vector<8x16xf32>
    %61 = vector.extract_strided_slice %36 {offsets = [0, 48], sizes = [8, 16], strides = [1, 1]} : vector<16x96xf32> to vector<8x16xf32>
    %62 = vector.extract_strided_slice %36 {offsets = [0, 80], sizes = [8, 16], strides = [1, 1]} : vector<16x96xf32> to vector<8x16xf32>
    %cst_29 = arith.constant dense<0.000000e+00> : vector<8x8xf32>
    %63 = tpu.matmul %60, %61, %cst_29 {dimension_numbers = #tpu.dot_dimension_numbers<[1], [1], [0], [0], [0, 0, 1, 0], [], []>} : vector<8x16xf32>, vector<8x16xf32>, vector<8x8xf32> -> vector<8x8xf32>
    %cst_30 = arith.constant 2.500000e-01 : f32
    %64 = vector.broadcast %cst_30 : f32 to vector<8x8xf32>
    %65 = arith.mulf %63, %64 : vector<8x8xf32>
    %66 = vector.broadcast %39 : vector<1x8xf32> to vector<8x8xf32>
    %67 = arith.addf %65, %66 : vector<8x8xf32>
    %cst_31 = arith.constant dense<0xFF800000> : vector<8xf32>
    %68 = vector.multi_reduction <maximumf>, %67, %cst_31 [1] : vector<8x8xf32> to vector<8xf32>
    %69 = vector.shape_cast %68 : vector<8xf32> to vector<8x1xf32>
    %70 = vector.broadcast %69 : vector<8x1xf32> to vector<8x8xf32>
    %71 = arith.subf %67, %70 : vector<8x8xf32>
    %72 = math.exp %71 : vector<8x8xf32>
    %cst_32 = arith.constant dense<0.000000e+00> : vector<8xf32>
    %73 = vector.multi_reduction <add>, %72, %cst_32 [1] : vector<8x8xf32> to vector<8xf32>
    %74 = vector.shape_cast %73 : vector<8xf32> to vector<8x1xf32>
    %75 = vector.broadcast %74 : vector<8x1xf32> to vector<8x8xf32>
    %76 = arith.divf %72, %75 : vector<8x8xf32>
    %cst_33 = arith.constant dense<0.000000e+00> : vector<8x16xf32>
    %77 = tpu.matmul %76, %62, %cst_33 {dimension_numbers = #tpu.dot_dimension_numbers<[1], [0], [0], [1], [0, 0, 1, 1], [], []>} : vector<8x8xf32>, vector<8x16xf32>, vector<8x16xf32> -> vector<8x16xf32>
    %78 = vector.extract_strided_slice %38 {offsets = [16, 0], sizes = [16, 32], strides = [1, 1]} : vector<32x32xf32> to vector<16x32xf32>
    %cst_34 = arith.constant dense<0.000000e+00> : vector<8x32xf32>
    %79 = tpu.matmul %77, %78, %cst_34 {dimension_numbers = #tpu.dot_dimension_numbers<[1], [0], [0], [1], [0, 0, 1, 1], [], []>} : vector<8x16xf32>, vector<16x32xf32>, vector<8x32xf32> -> vector<8x32xf32>
    %80 = arith.addf %59, %79 : vector<8x32xf32>
    %81 = vector.extract_strided_slice %29 {offsets = [1, 0], sizes = [1, 8], strides = [1, 1]} : vector<2x8xf32> to vector<1x8xf32>
    %82 = vector.extract_strided_slice %36 {offsets = [8, 0], sizes = [8, 16], strides = [1, 1]} : vector<16x96xf32> to vector<8x16xf32>
    %83 = vector.extract_strided_slice %36 {offsets = [8, 32], sizes = [8, 16], strides = [1, 1]} : vector<16x96xf32> to vector<8x16xf32>
    %84 = vector.extract_strided_slice %36 {offsets = [8, 64], sizes = [8, 16], strides = [1, 1]} : vector<16x96xf32> to vector<8x16xf32>
    %cst_35 = arith.constant dense<0.000000e+00> : vector<8x8xf32>
    %85 = tpu.matmul %82, %83, %cst_35 {dimension_numbers = #tpu.dot_dimension_numbers<[1], [1], [0], [0], [0, 0, 1, 0], [], []>} : vector<8x16xf32>, vector<8x16xf32>, vector<8x8xf32> -> vector<8x8xf32>
    %cst_36 = arith.constant 2.500000e-01 : f32
    %86 = vector.broadcast %cst_36 : f32 to vector<8x8xf32>
    %87 = arith.mulf %85, %86 : vector<8x8xf32>
    %88 = vector.broadcast %81 : vector<1x8xf32> to vector<8x8xf32>
    %89 = arith.addf %87, %88 : vector<8x8xf32>
    %cst_37 = arith.constant dense<0xFF800000> : vector<8xf32>
    %90 = vector.multi_reduction <maximumf>, %89, %cst_37 [1] : vector<8x8xf32> to vector<8xf32>
    %91 = vector.shape_cast %90 : vector<8xf32> to vector<8x1xf32>
    %92 = vector.broadcast %91 : vector<8x1xf32> to vector<8x8xf32>
    %93 = arith.subf %89, %92 : vector<8x8xf32>
    %94 = math.exp %93 : vector<8x8xf32>
    %cst_38 = arith.constant dense<0.000000e+00> : vector<8xf32>
    %95 = vector.multi_reduction <add>, %94, %cst_38 [1] : vector<8x8xf32> to vector<8xf32>
    %96 = vector.shape_cast %95 : vector<8xf32> to vector<8x1xf32>
    %97 = vector.broadcast %96 : vector<8x1xf32> to vector<8x8xf32>
    %98 = arith.divf %94, %97 : vector<8x8xf32>
    %cst_39 = arith.constant dense<0.000000e+00> : vector<8x16xf32>
    %99 = tpu.matmul %98, %84, %cst_39 {dimension_numbers = #tpu.dot_dimension_numbers<[1], [0], [0], [1], [0, 0, 1, 1], [], []>} : vector<8x8xf32>, vector<8x16xf32>, vector<8x16xf32> -> vector<8x16xf32>
    %100 = vector.extract_strided_slice %38 {offsets = [0, 0], sizes = [16, 32], strides = [1, 1]} : vector<32x32xf32> to vector<16x32xf32>
    %cst_40 = arith.constant dense<0.000000e+00> : vector<8x32xf32>
    %101 = tpu.matmul %99, %100, %cst_40 {dimension_numbers = #tpu.dot_dimension_numbers<[1], [0], [0], [1], [0, 0, 1, 1], [], []>} : vector<8x16xf32>, vector<16x32xf32>, vector<8x32xf32> -> vector<8x32xf32>
    %102 = vector.extract_strided_slice %36 {offsets = [8, 16], sizes = [8, 16], strides = [1, 1]} : vector<16x96xf32> to vector<8x16xf32>
    %103 = vector.extract_strided_slice %36 {offsets = [8, 48], sizes = [8, 16], strides = [1, 1]} : vector<16x96xf32> to vector<8x16xf32>
    %104 = vector.extract_strided_slice %36 {offsets = [8, 80], sizes = [8, 16], strides = [1, 1]} : vector<16x96xf32> to vector<8x16xf32>
    %cst_41 = arith.constant dense<0.000000e+00> : vector<8x8xf32>
    %105 = tpu.matmul %102, %103, %cst_41 {dimension_numbers = #tpu.dot_dimension_numbers<[1], [1], [0], [0], [0, 0, 1, 0], [], []>} : vector<8x16xf32>, vector<8x16xf32>, vector<8x8xf32> -> vector<8x8xf32>
    %cst_42 = arith.constant 2.500000e-01 : f32
    %106 = vector.broadcast %cst_42 : f32 to vector<8x8xf32>
    %107 = arith.mulf %105, %106 : vector<8x8xf32>
    %108 = vector.broadcast %81 : vector<1x8xf32> to vector<8x8xf32>
    %109 = arith.addf %107, %108 : vector<8x8xf32>
    %cst_43 = arith.constant dense<0xFF800000> : vector<8xf32>
    %110 = vector.multi_reduction <maximumf>, %109, %cst_43 [1] : vector<8x8xf32> to vector<8xf32>
    %111 = vector.shape_cast %110 : vector<8xf32> to vector<8x1xf32>
    %112 = vector.broadcast %111 : vector<8x1xf32> to vector<8x8xf32>
    %113 = arith.subf %109, %112 : vector<8x8xf32>
    %114 = math.exp %113 : vector<8x8xf32>
    %cst_44 = arith.constant dense<0.000000e+00> : vector<8xf32>
    %115 = vector.multi_reduction <add>, %114, %cst_44 [1] : vector<8x8xf32> to vector<8xf32>
    %116 = vector.shape_cast %115 : vector<8xf32> to vector<8x1xf32>
    %117 = vector.broadcast %116 : vector<8x1xf32> to vector<8x8xf32>
    %118 = arith.divf %114, %117 : vector<8x8xf32>
    %cst_45 = arith.constant dense<0.000000e+00> : vector<8x16xf32>
    %119 = tpu.matmul %118, %104, %cst_45 {dimension_numbers = #tpu.dot_dimension_numbers<[1], [0], [0], [1], [0, 0, 1, 1], [], []>} : vector<8x8xf32>, vector<8x16xf32>, vector<8x16xf32> -> vector<8x16xf32>
    %120 = vector.extract_strided_slice %38 {offsets = [16, 0], sizes = [16, 32], strides = [1, 1]} : vector<32x32xf32> to vector<16x32xf32>
    %cst_46 = arith.constant dense<0.000000e+00> : vector<8x32xf32>
    %121 = tpu.matmul %119, %120, %cst_46 {dimension_numbers = #tpu.dot_dimension_numbers<[1], [0], [0], [1], [0, 0, 1, 1], [], []>} : vector<8x16xf32>, vector<16x32xf32>, vector<8x32xf32> -> vector<8x32xf32>
    %122 = arith.addf %101, %121 : vector<8x32xf32>
    %123 = tpu.concatenate %80, %122 in 0 : vector<8x32xf32>, vector<8x32xf32> -> vector<16x32xf32>
    %c0_47 = arith.constant 0 : index
    %c0_48 = arith.constant 0 : index
    %c0_49 = arith.constant 0 : index
    %124 = vector.load %arg9[%c0_47, %c0_48, %c0_49] : memref<2x1x32xf32, #tpu.memory_space<vmem>>, vector<1x1x32xf32>
    %125 = vector.shape_cast %124 : vector<1x1x32xf32> to vector<1x32xf32>
    %126 = vector.broadcast %125 : vector<1x32xf32> to vector<16x32xf32>
    %127 = arith.addf %123, %126 : vector<16x32xf32>
    %128 = arith.addf %127, %24 : vector<16x32xf32>
    %c0_50 = arith.constant 0 : index
    %c0_51 = arith.constant 0 : index
    %c0_52 = arith.constant 0 : index
    %129 = vector.load %arg10[%c0_50, %c0_51, %c0_52] : memref<2x1x32xf32, #tpu.memory_space<vmem>>, vector<1x1x32xf32>
    %130 = vector.shape_cast %129 : vector<1x1x32xf32> to vector<1x32xf32>
    %c0_53 = arith.constant 0 : index
    %c0_54 = arith.constant 0 : index
    %c0_55 = arith.constant 0 : index
    %131 = vector.load %arg11[%c0_53, %c0_54, %c0_55] : memref<2x1x32xf32, #tpu.memory_space<vmem>>, vector<1x1x32xf32>
    %132 = vector.shape_cast %131 : vector<1x1x32xf32> to vector<1x32xf32>
    %cst_56 = arith.constant dense<0.000000e+00> : vector<16xf32>
    %133 = vector.multi_reduction <add>, %128, %cst_56 [1] : vector<16x32xf32> to vector<16xf32>
    %134 = vector.shape_cast %133 : vector<16xf32> to vector<16x1xf32>
    %cst_57 = arith.constant 3.200000e+01 : f32
    %135 = vector.broadcast %cst_57 : f32 to vector<16x1xf32>
    %136 = arith.divf %134, %135 : vector<16x1xf32>
    %137 = vector.broadcast %136 : vector<16x1xf32> to vector<16x32xf32>
    %138 = arith.subf %128, %137 : vector<16x32xf32>
    %139 = arith.mulf %138, %138 : vector<16x32xf32>
    %cst_58 = arith.constant dense<0.000000e+00> : vector<16xf32>
    %140 = vector.multi_reduction <add>, %139, %cst_58 [1] : vector<16x32xf32> to vector<16xf32>
    %141 = vector.shape_cast %140 : vector<16xf32> to vector<16x1xf32>
    %cst_59 = arith.constant 3.200000e+01 : f32
    %142 = vector.broadcast %cst_59 : f32 to vector<16x1xf32>
    %143 = arith.divf %141, %142 : vector<16x1xf32>
    %144 = vector.broadcast %136 : vector<16x1xf32> to vector<16x32xf32>
    %145 = arith.subf %128, %144 : vector<16x32xf32>
    %cst_60 = arith.constant 9.99999996E-13 : f32
    %146 = vector.broadcast %cst_60 : f32 to vector<16x1xf32>
    %147 = arith.addf %143, %146 : vector<16x1xf32>
    %148 = math.rsqrt %147 : vector<16x1xf32>
    %149 = vector.broadcast %148 : vector<16x1xf32> to vector<16x32xf32>
    %150 = arith.mulf %145, %149 : vector<16x32xf32>
    %151 = vector.broadcast %130 : vector<1x32xf32> to vector<16x32xf32>
    %152 = arith.mulf %150, %151 : vector<16x32xf32>
    %153 = vector.broadcast %132 : vector<1x32xf32> to vector<16x32xf32>
    %154 = arith.addf %152, %153 : vector<16x32xf32>
    %c0_61 = arith.constant 0 : index
    %c0_62 = arith.constant 0 : index
    %c0_63 = arith.constant 0 : index
    %155 = vector.load %arg12[%c0_61, %c0_62, %c0_63] : memref<2x32x64xf32, #tpu.memory_space<vmem>>, vector<1x32x64xf32>
    %156 = vector.shape_cast %155 : vector<1x32x64xf32> to vector<32x64xf32>
    %cst_64 = arith.constant dense<0.000000e+00> : vector<16x64xf32>
    %157 = tpu.matmul %154, %156, %cst_64 {dimension_numbers = #tpu.dot_dimension_numbers<[1], [0], [0], [1], [0, 0, 1, 1], [], []>} : vector<16x32xf32>, vector<32x64xf32>, vector<16x64xf32> -> vector<16x64xf32>
    %c0_65 = arith.constant 0 : index
    %c0_66 = arith.constant 0 : index
    %c0_67 = arith.constant 0 : index
    %158 = vector.load %arg13[%c0_65, %c0_66, %c0_67] : memref<2x1x64xf32, #tpu.memory_space<vmem>>, vector<1x1x64xf32>
    %159 = vector.shape_cast %158 : vector<1x1x64xf32> to vector<1x64xf32>
    %160 = vector.broadcast %159 : vector<1x64xf32> to vector<16x64xf32>
    %161 = arith.addf %157, %160 : vector<16x64xf32>
    %162 = arith.mulf %161, %161 : vector<16x64xf32>
    %163 = arith.mulf %161, %162 : vector<16x64xf32>
    %cst_68 = arith.constant 4.471500e-02 : f32
    %164 = vector.broadcast %cst_68 : f32 to vector<16x64xf32>
    %165 = arith.mulf %164, %163 : vector<16x64xf32>
    %166 = arith.addf %161, %165 : vector<16x64xf32>
    %cst_69 = arith.constant 0.797884583 : f32
    %167 = vector.broadcast %cst_69 : f32 to vector<16x64xf32>
    %168 = arith.mulf %167, %166 : vector<16x64xf32>
    %169 = math.tanh %168 : vector<16x64xf32>
    %cst_70 = arith.constant 1.000000e+00 : f32
    %170 = vector.broadcast %cst_70 : f32 to vector<16x64xf32>
    %171 = arith.addf %170, %169 : vector<16x64xf32>
    %cst_71 = arith.constant 5.000000e-01 : f32
    %172 = vector.broadcast %cst_71 : f32 to vector<16x64xf32>
    %173 = arith.mulf %172, %171 : vector<16x64xf32>
    %174 = arith.mulf %161, %173 : vector<16x64xf32>
    %c0_72 = arith.constant 0 : index
    %c0_73 = arith.constant 0 : index
    %c0_74 = arith.constant 0 : index
    %175 = vector.load %arg14[%c0_72, %c0_73, %c0_74] : memref<2x64x32xf32, #tpu.memory_space<vmem>>, vector<1x64x32xf32>
    %176 = vector.shape_cast %175 : vector<1x64x32xf32> to vector<64x32xf32>
    %cst_75 = arith.constant dense<0.000000e+00> : vector<16x32xf32>
    %177 = tpu.matmul %174, %176, %cst_75 {dimension_numbers = #tpu.dot_dimension_numbers<[1], [0], [0], [1], [0, 0, 1, 1], [], []>} : vector<16x64xf32>, vector<64x32xf32>, vector<16x32xf32> -> vector<16x32xf32>
    %c0_76 = arith.constant 0 : index
    %c0_77 = arith.constant 0 : index
    %c0_78 = arith.constant 0 : index
    %178 = vector.load %arg15[%c0_76, %c0_77, %c0_78] : memref<2x1x32xf32, #tpu.memory_space<vmem>>, vector<1x1x32xf32>
    %179 = vector.shape_cast %178 : vector<1x1x32xf32> to vector<1x32xf32>
    %180 = vector.broadcast %179 : vector<1x32xf32> to vector<16x32xf32>
    %181 = arith.addf %177, %180 : vector<16x32xf32>
    %182 = arith.addf %181, %154 : vector<16x32xf32>
    %c0_79 = arith.constant 0 : index
    %c0_80 = arith.constant 0 : index
    %c0_81 = arith.constant 0 : index
    %183 = vector.load %arg16[%c0_79, %c0_80, %c0_81] : memref<2x1x32xf32, #tpu.memory_space<vmem>>, vector<1x1x32xf32>
    %184 = vector.shape_cast %183 : vector<1x1x32xf32> to vector<1x32xf32>
    %c0_82 = arith.constant 0 : index
    %c0_83 = arith.constant 0 : index
    %c0_84 = arith.constant 0 : index
    %185 = vector.load %arg17[%c0_82, %c0_83, %c0_84] : memref<2x1x32xf32, #tpu.memory_space<vmem>>, vector<1x1x32xf32>
    %186 = vector.shape_cast %185 : vector<1x1x32xf32> to vector<1x32xf32>
    %cst_85 = arith.constant dense<0.000000e+00> : vector<16xf32>
    %187 = vector.multi_reduction <add>, %182, %cst_85 [1] : vector<16x32xf32> to vector<16xf32>
    %188 = vector.shape_cast %187 : vector<16xf32> to vector<16x1xf32>
    %cst_86 = arith.constant 3.200000e+01 : f32
    %189 = vector.broadcast %cst_86 : f32 to vector<16x1xf32>
    %190 = arith.divf %188, %189 : vector<16x1xf32>
    %191 = vector.broadcast %190 : vector<16x1xf32> to vector<16x32xf32>
    %192 = arith.subf %182, %191 : vector<16x32xf32>
    %193 = arith.mulf %192, %192 : vector<16x32xf32>
    %cst_87 = arith.constant dense<0.000000e+00> : vector<16xf32>
    %194 = vector.multi_reduction <add>, %193, %cst_87 [1] : vector<16x32xf32> to vector<16xf32>
    %195 = vector.shape_cast %194 : vector<16xf32> to vector<16x1xf32>
    %cst_88 = arith.constant 3.200000e+01 : f32
    %196 = vector.broadcast %cst_88 : f32 to vector<16x1xf32>
    %197 = arith.divf %195, %196 : vector<16x1xf32>
    %198 = vector.broadcast %190 : vector<16x1xf32> to vector<16x32xf32>
    %199 = arith.subf %182, %198 : vector<16x32xf32>
    %cst_89 = arith.constant 9.99999996E-13 : f32
    %200 = vector.broadcast %cst_89 : f32 to vector<16x1xf32>
    %201 = arith.addf %197, %200 : vector<16x1xf32>
    %202 = math.rsqrt %201 : vector<16x1xf32>
    %203 = vector.broadcast %202 : vector<16x1xf32> to vector<16x32xf32>
    %204 = arith.mulf %199, %203 : vector<16x32xf32>
    %205 = vector.broadcast %184 : vector<1x32xf32> to vector<16x32xf32>
    %206 = arith.mulf %204, %205 : vector<16x32xf32>
    %207 = vector.broadcast %186 : vector<1x32xf32> to vector<16x32xf32>
    %208 = arith.addf %206, %207 : vector<16x32xf32>
    %c1 = arith.constant 1 : index
    %c0_90 = arith.constant 0 : index
    %c0_91 = arith.constant 0 : index
    %209 = vector.load %arg6[%c1, %c0_90, %c0_91] : memref<2x32x96xf32, #tpu.memory_space<vmem>>, vector<1x32x96xf32>
    %210 = vector.shape_cast %209 : vector<1x32x96xf32> to vector<32x96xf32>
    %cst_92 = arith.constant dense<0.000000e+00> : vector<16x96xf32>
    %211 = tpu.matmul %208, %210, %cst_92 {dimension_numbers = #tpu.dot_dimension_numbers<[1], [0], [0], [1], [0, 0, 1, 1], [], []>} : vector<16x32xf32>, vector<32x96xf32>, vector<16x96xf32> -> vector<16x96xf32>
    %c1_93 = arith.constant 1 : index
    %c0_94 = arith.constant 0 : index
    %c0_95 = arith.constant 0 : index
    %212 = vector.load %arg7[%c1_93, %c0_94, %c0_95] : memref<2x1x96xf32, #tpu.memory_space<vmem>>, vector<1x1x96xf32>
    %213 = vector.shape_cast %212 : vector<1x1x96xf32> to vector<1x96xf32>
    %214 = vector.broadcast %213 : vector<1x96xf32> to vector<16x96xf32>
    %215 = arith.addf %211, %214 : vector<16x96xf32>
    %c1_96 = arith.constant 1 : index
    %c0_97 = arith.constant 0 : index
    %c0_98 = arith.constant 0 : index
    %216 = vector.load %arg8[%c1_96, %c0_97, %c0_98] : memref<2x32x32xf32, #tpu.memory_space<vmem>>, vector<1x32x32xf32>
    %217 = vector.shape_cast %216 : vector<1x32x32xf32> to vector<32x32xf32>
    %218 = vector.extract_strided_slice %29 {offsets = [0, 0], sizes = [1, 8], strides = [1, 1]} : vector<2x8xf32> to vector<1x8xf32>
    %219 = vector.extract_strided_slice %215 {offsets = [0, 0], sizes = [8, 16], strides = [1, 1]} : vector<16x96xf32> to vector<8x16xf32>
    %220 = vector.extract_strided_slice %215 {offsets = [0, 32], sizes = [8, 16], strides = [1, 1]} : vector<16x96xf32> to vector<8x16xf32>
    %221 = vector.extract_strided_slice %215 {offsets = [0, 64], sizes = [8, 16], strides = [1, 1]} : vector<16x96xf32> to vector<8x16xf32>
    %cst_99 = arith.constant dense<0.000000e+00> : vector<8x8xf32>
    %222 = tpu.matmul %219, %220, %cst_99 {dimension_numbers = #tpu.dot_dimension_numbers<[1], [1], [0], [0], [0, 0, 1, 0], [], []>} : vector<8x16xf32>, vector<8x16xf32>, vector<8x8xf32> -> vector<8x8xf32>
    %cst_100 = arith.constant 2.500000e-01 : f32
    %223 = vector.broadcast %cst_100 : f32 to vector<8x8xf32>
    %224 = arith.mulf %222, %223 : vector<8x8xf32>
    %225 = vector.broadcast %218 : vector<1x8xf32> to vector<8x8xf32>
    %226 = arith.addf %224, %225 : vector<8x8xf32>
    %cst_101 = arith.constant dense<0xFF800000> : vector<8xf32>
    %227 = vector.multi_reduction <maximumf>, %226, %cst_101 [1] : vector<8x8xf32> to vector<8xf32>
    %228 = vector.shape_cast %227 : vector<8xf32> to vector<8x1xf32>
    %229 = vector.broadcast %228 : vector<8x1xf32> to vector<8x8xf32>
    %230 = arith.subf %226, %229 : vector<8x8xf32>
    %231 = math.exp %230 : vector<8x8xf32>
    %cst_102 = arith.constant dense<0.000000e+00> : vector<8xf32>
    %232 = vector.multi_reduction <add>, %231, %cst_102 [1] : vector<8x8xf32> to vector<8xf32>
    %233 = vector.shape_cast %232 : vector<8xf32> to vector<8x1xf32>
    %234 = vector.broadcast %233 : vector<8x1xf32> to vector<8x8xf32>
    %235 = arith.divf %231, %234 : vector<8x8xf32>
    %cst_103 = arith.constant dense<0.000000e+00> : vector<8x16xf32>
    %236 = tpu.matmul %235, %221, %cst_103 {dimension_numbers = #tpu.dot_dimension_numbers<[1], [0], [0], [1], [0, 0, 1, 1], [], []>} : vector<8x8xf32>, vector<8x16xf32>, vector<8x16xf32> -> vector<8x16xf32>
    %237 = vector.extract_strided_slice %217 {offsets = [0, 0], sizes = [16, 32], strides = [1, 1]} : vector<32x32xf32> to vector<16x32xf32>
    %cst_104 = arith.constant dense<0.000000e+00> : vector<8x32xf32>
    %238 = tpu.matmul %236, %237, %cst_104 {dimension_numbers = #tpu.dot_dimension_numbers<[1], [0], [0], [1], [0, 0, 1, 1], [], []>} : vector<8x16xf32>, vector<16x32xf32>, vector<8x32xf32> -> vector<8x32xf32>
    %239 = vector.extract_strided_slice %215 {offsets = [0, 16], sizes = [8, 16], strides = [1, 1]} : vector<16x96xf32> to vector<8x16xf32>
    %240 = vector.extract_strided_slice %215 {offsets = [0, 48], sizes = [8, 16], strides = [1, 1]} : vector<16x96xf32> to vector<8x16xf32>
    %241 = vector.extract_strided_slice %215 {offsets = [0, 80], sizes = [8, 16], strides = [1, 1]} : vector<16x96xf32> to vector<8x16xf32>
    %cst_105 = arith.constant dense<0.000000e+00> : vector<8x8xf32>
    %242 = tpu.matmul %239, %240, %cst_105 {dimension_numbers = #tpu.dot_dimension_numbers<[1], [1], [0], [0], [0, 0, 1, 0], [], []>} : vector<8x16xf32>, vector<8x16xf32>, vector<8x8xf32> -> vector<8x8xf32>
    %cst_106 = arith.constant 2.500000e-01 : f32
    %243 = vector.broadcast %cst_106 : f32 to vector<8x8xf32>
    %244 = arith.mulf %242, %243 : vector<8x8xf32>
    %245 = vector.broadcast %218 : vector<1x8xf32> to vector<8x8xf32>
    %246 = arith.addf %244, %245 : vector<8x8xf32>
    %cst_107 = arith.constant dense<0xFF800000> : vector<8xf32>
    %247 = vector.multi_reduction <maximumf>, %246, %cst_107 [1] : vector<8x8xf32> to vector<8xf32>
    %248 = vector.shape_cast %247 : vector<8xf32> to vector<8x1xf32>
    %249 = vector.broadcast %248 : vector<8x1xf32> to vector<8x8xf32>
    %250 = arith.subf %246, %249 : vector<8x8xf32>
    %251 = math.exp %250 : vector<8x8xf32>
    %cst_108 = arith.constant dense<0.000000e+00> : vector<8xf32>
    %252 = vector.multi_reduction <add>, %251, %cst_108 [1] : vector<8x8xf32> to vector<8xf32>
    %253 = vector.shape_cast %252 : vector<8xf32> to vector<8x1xf32>
    %254 = vector.broadcast %253 : vector<8x1xf32> to vector<8x8xf32>
    %255 = arith.divf %251, %254 : vector<8x8xf32>
    %cst_109 = arith.constant dense<0.000000e+00> : vector<8x16xf32>
    %256 = tpu.matmul %255, %241, %cst_109 {dimension_numbers = #tpu.dot_dimension_numbers<[1], [0], [0], [1], [0, 0, 1, 1], [], []>} : vector<8x8xf32>, vector<8x16xf32>, vector<8x16xf32> -> vector<8x16xf32>
    %257 = vector.extract_strided_slice %217 {offsets = [16, 0], sizes = [16, 32], strides = [1, 1]} : vector<32x32xf32> to vector<16x32xf32>
    %cst_110 = arith.constant dense<0.000000e+00> : vector<8x32xf32>
    %258 = tpu.matmul %256, %257, %cst_110 {dimension_numbers = #tpu.dot_dimension_numbers<[1], [0], [0], [1], [0, 0, 1, 1], [], []>} : vector<8x16xf32>, vector<16x32xf32>, vector<8x32xf32> -> vector<8x32xf32>
    %259 = arith.addf %238, %258 : vector<8x32xf32>
    %260 = vector.extract_strided_slice %29 {offsets = [1, 0], sizes = [1, 8], strides = [1, 1]} : vector<2x8xf32> to vector<1x8xf32>
    %261 = vector.extract_strided_slice %215 {offsets = [8, 0], sizes = [8, 16], strides = [1, 1]} : vector<16x96xf32> to vector<8x16xf32>
    %262 = vector.extract_strided_slice %215 {offsets = [8, 32], sizes = [8, 16], strides = [1, 1]} : vector<16x96xf32> to vector<8x16xf32>
    %263 = vector.extract_strided_slice %215 {offsets = [8, 64], sizes = [8, 16], strides = [1, 1]} : vector<16x96xf32> to vector<8x16xf32>
    %cst_111 = arith.constant dense<0.000000e+00> : vector<8x8xf32>
    %264 = tpu.matmul %261, %262, %cst_111 {dimension_numbers = #tpu.dot_dimension_numbers<[1], [1], [0], [0], [0, 0, 1, 0], [], []>} : vector<8x16xf32>, vector<8x16xf32>, vector<8x8xf32> -> vector<8x8xf32>
    %cst_112 = arith.constant 2.500000e-01 : f32
    %265 = vector.broadcast %cst_112 : f32 to vector<8x8xf32>
    %266 = arith.mulf %264, %265 : vector<8x8xf32>
    %267 = vector.broadcast %260 : vector<1x8xf32> to vector<8x8xf32>
    %268 = arith.addf %266, %267 : vector<8x8xf32>
    %cst_113 = arith.constant dense<0xFF800000> : vector<8xf32>
    %269 = vector.multi_reduction <maximumf>, %268, %cst_113 [1] : vector<8x8xf32> to vector<8xf32>
    %270 = vector.shape_cast %269 : vector<8xf32> to vector<8x1xf32>
    %271 = vector.broadcast %270 : vector<8x1xf32> to vector<8x8xf32>
    %272 = arith.subf %268, %271 : vector<8x8xf32>
    %273 = math.exp %272 : vector<8x8xf32>
    %cst_114 = arith.constant dense<0.000000e+00> : vector<8xf32>
    %274 = vector.multi_reduction <add>, %273, %cst_114 [1] : vector<8x8xf32> to vector<8xf32>
    %275 = vector.shape_cast %274 : vector<8xf32> to vector<8x1xf32>
    %276 = vector.broadcast %275 : vector<8x1xf32> to vector<8x8xf32>
    %277 = arith.divf %273, %276 : vector<8x8xf32>
    %cst_115 = arith.constant dense<0.000000e+00> : vector<8x16xf32>
    %278 = tpu.matmul %277, %263, %cst_115 {dimension_numbers = #tpu.dot_dimension_numbers<[1], [0], [0], [1], [0, 0, 1, 1], [], []>} : vector<8x8xf32>, vector<8x16xf32>, vector<8x16xf32> -> vector<8x16xf32>
    %279 = vector.extract_strided_slice %217 {offsets = [0, 0], sizes = [16, 32], strides = [1, 1]} : vector<32x32xf32> to vector<16x32xf32>
    %cst_116 = arith.constant dense<0.000000e+00> : vector<8x32xf32>
    %280 = tpu.matmul %278, %279, %cst_116 {dimension_numbers = #tpu.dot_dimension_numbers<[1], [0], [0], [1], [0, 0, 1, 1], [], []>} : vector<8x16xf32>, vector<16x32xf32>, vector<8x32xf32> -> vector<8x32xf32>
    %281 = vector.extract_strided_slice %215 {offsets = [8, 16], sizes = [8, 16], strides = [1, 1]} : vector<16x96xf32> to vector<8x16xf32>
    %282 = vector.extract_strided_slice %215 {offsets = [8, 48], sizes = [8, 16], strides = [1, 1]} : vector<16x96xf32> to vector<8x16xf32>
    %283 = vector.extract_strided_slice %215 {offsets = [8, 80], sizes = [8, 16], strides = [1, 1]} : vector<16x96xf32> to vector<8x16xf32>
    %cst_117 = arith.constant dense<0.000000e+00> : vector<8x8xf32>
    %284 = tpu.matmul %281, %282, %cst_117 {dimension_numbers = #tpu.dot_dimension_numbers<[1], [1], [0], [0], [0, 0, 1, 0], [], []>} : vector<8x16xf32>, vector<8x16xf32>, vector<8x8xf32> -> vector<8x8xf32>
    %cst_118 = arith.constant 2.500000e-01 : f32
    %285 = vector.broadcast %cst_118 : f32 to vector<8x8xf32>
    %286 = arith.mulf %284, %285 : vector<8x8xf32>
    %287 = vector.broadcast %260 : vector<1x8xf32> to vector<8x8xf32>
    %288 = arith.addf %286, %287 : vector<8x8xf32>
    %cst_119 = arith.constant dense<0xFF800000> : vector<8xf32>
    %289 = vector.multi_reduction <maximumf>, %288, %cst_119 [1] : vector<8x8xf32> to vector<8xf32>
    %290 = vector.shape_cast %289 : vector<8xf32> to vector<8x1xf32>
    %291 = vector.broadcast %290 : vector<8x1xf32> to vector<8x8xf32>
    %292 = arith.subf %288, %291 : vector<8x8xf32>
    %293 = math.exp %292 : vector<8x8xf32>
    %cst_120 = arith.constant dense<0.000000e+00> : vector<8xf32>
    %294 = vector.multi_reduction <add>, %293, %cst_120 [1] : vector<8x8xf32> to vector<8xf32>
    %295 = vector.shape_cast %294 : vector<8xf32> to vector<8x1xf32>
    %296 = vector.broadcast %295 : vector<8x1xf32> to vector<8x8xf32>
    %297 = arith.divf %293, %296 : vector<8x8xf32>
    %cst_121 = arith.constant dense<0.000000e+00> : vector<8x16xf32>
    %298 = tpu.matmul %297, %283, %cst_121 {dimension_numbers = #tpu.dot_dimension_numbers<[1], [0], [0], [1], [0, 0, 1, 1], [], []>} : vector<8x8xf32>, vector<8x16xf32>, vector<8x16xf32> -> vector<8x16xf32>
    %299 = vector.extract_strided_slice %217 {offsets = [16, 0], sizes = [16, 32], strides = [1, 1]} : vector<32x32xf32> to vector<16x32xf32>
    %cst_122 = arith.constant dense<0.000000e+00> : vector<8x32xf32>
    %300 = tpu.matmul %298, %299, %cst_122 {dimension_numbers = #tpu.dot_dimension_numbers<[1], [0], [0], [1], [0, 0, 1, 1], [], []>} : vector<8x16xf32>, vector<16x32xf32>, vector<8x32xf32> -> vector<8x32xf32>
    %301 = arith.addf %280, %300 : vector<8x32xf32>
    %302 = tpu.concatenate %259, %301 in 0 : vector<8x32xf32>, vector<8x32xf32> -> vector<16x32xf32>
    %c1_123 = arith.constant 1 : index
    %c0_124 = arith.constant 0 : index
    %c0_125 = arith.constant 0 : index
    %303 = vector.load %arg9[%c1_123, %c0_124, %c0_125] : memref<2x1x32xf32, #tpu.memory_space<vmem>>, vector<1x1x32xf32>
    %304 = vector.shape_cast %303 : vector<1x1x32xf32> to vector<1x32xf32>
    %305 = vector.broadcast %304 : vector<1x32xf32> to vector<16x32xf32>
    %306 = arith.addf %302, %305 : vector<16x32xf32>
    %307 = arith.addf %306, %208 : vector<16x32xf32>
    %c1_126 = arith.constant 1 : index
    %c0_127 = arith.constant 0 : index
    %c0_128 = arith.constant 0 : index
    %308 = vector.load %arg10[%c1_126, %c0_127, %c0_128] : memref<2x1x32xf32, #tpu.memory_space<vmem>>, vector<1x1x32xf32>
    %309 = vector.shape_cast %308 : vector<1x1x32xf32> to vector<1x32xf32>
    %c1_129 = arith.constant 1 : index
    %c0_130 = arith.constant 0 : index
    %c0_131 = arith.constant 0 : index
    %310 = vector.load %arg11[%c1_129, %c0_130, %c0_131] : memref<2x1x32xf32, #tpu.memory_space<vmem>>, vector<1x1x32xf32>
    %311 = vector.shape_cast %310 : vector<1x1x32xf32> to vector<1x32xf32>
    %cst_132 = arith.constant dense<0.000000e+00> : vector<16xf32>
    %312 = vector.multi_reduction <add>, %307, %cst_132 [1] : vector<16x32xf32> to vector<16xf32>
    %313 = vector.shape_cast %312 : vector<16xf32> to vector<16x1xf32>
    %cst_133 = arith.constant 3.200000e+01 : f32
    %314 = vector.broadcast %cst_133 : f32 to vector<16x1xf32>
    %315 = arith.divf %313, %314 : vector<16x1xf32>
    %316 = vector.broadcast %315 : vector<16x1xf32> to vector<16x32xf32>
    %317 = arith.subf %307, %316 : vector<16x32xf32>
    %318 = arith.mulf %317, %317 : vector<16x32xf32>
    %cst_134 = arith.constant dense<0.000000e+00> : vector<16xf32>
    %319 = vector.multi_reduction <add>, %318, %cst_134 [1] : vector<16x32xf32> to vector<16xf32>
    %320 = vector.shape_cast %319 : vector<16xf32> to vector<16x1xf32>
    %cst_135 = arith.constant 3.200000e+01 : f32
    %321 = vector.broadcast %cst_135 : f32 to vector<16x1xf32>
    %322 = arith.divf %320, %321 : vector<16x1xf32>
    %323 = vector.broadcast %315 : vector<16x1xf32> to vector<16x32xf32>
    %324 = arith.subf %307, %323 : vector<16x32xf32>
    %cst_136 = arith.constant 9.99999996E-13 : f32
    %325 = vector.broadcast %cst_136 : f32 to vector<16x1xf32>
    %326 = arith.addf %322, %325 : vector<16x1xf32>
    %327 = math.rsqrt %326 : vector<16x1xf32>
    %328 = vector.broadcast %327 : vector<16x1xf32> to vector<16x32xf32>
    %329 = arith.mulf %324, %328 : vector<16x32xf32>
    %330 = vector.broadcast %309 : vector<1x32xf32> to vector<16x32xf32>
    %331 = arith.mulf %329, %330 : vector<16x32xf32>
    %332 = vector.broadcast %311 : vector<1x32xf32> to vector<16x32xf32>
    %333 = arith.addf %331, %332 : vector<16x32xf32>
    %c1_137 = arith.constant 1 : index
    %c0_138 = arith.constant 0 : index
    %c0_139 = arith.constant 0 : index
    %334 = vector.load %arg12[%c1_137, %c0_138, %c0_139] : memref<2x32x64xf32, #tpu.memory_space<vmem>>, vector<1x32x64xf32>
    %335 = vector.shape_cast %334 : vector<1x32x64xf32> to vector<32x64xf32>
    %cst_140 = arith.constant dense<0.000000e+00> : vector<16x64xf32>
    %336 = tpu.matmul %333, %335, %cst_140 {dimension_numbers = #tpu.dot_dimension_numbers<[1], [0], [0], [1], [0, 0, 1, 1], [], []>} : vector<16x32xf32>, vector<32x64xf32>, vector<16x64xf32> -> vector<16x64xf32>
    %c1_141 = arith.constant 1 : index
    %c0_142 = arith.constant 0 : index
    %c0_143 = arith.constant 0 : index
    %337 = vector.load %arg13[%c1_141, %c0_142, %c0_143] : memref<2x1x64xf32, #tpu.memory_space<vmem>>, vector<1x1x64xf32>
    %338 = vector.shape_cast %337 : vector<1x1x64xf32> to vector<1x64xf32>
    %339 = vector.broadcast %338 : vector<1x64xf32> to vector<16x64xf32>
    %340 = arith.addf %336, %339 : vector<16x64xf32>
    %341 = arith.mulf %340, %340 : vector<16x64xf32>
    %342 = arith.mulf %340, %341 : vector<16x64xf32>
    %cst_144 = arith.constant 4.471500e-02 : f32
    %343 = vector.broadcast %cst_144 : f32 to vector<16x64xf32>
    %344 = arith.mulf %343, %342 : vector<16x64xf32>
    %345 = arith.addf %340, %344 : vector<16x64xf32>
    %cst_145 = arith.constant 0.797884583 : f32
    %346 = vector.broadcast %cst_145 : f32 to vector<16x64xf32>
    %347 = arith.mulf %346, %345 : vector<16x64xf32>
    %348 = math.tanh %347 : vector<16x64xf32>
    %cst_146 = arith.constant 1.000000e+00 : f32
    %349 = vector.broadcast %cst_146 : f32 to vector<16x64xf32>
    %350 = arith.addf %349, %348 : vector<16x64xf32>
    %cst_147 = arith.constant 5.000000e-01 : f32
    %351 = vector.broadcast %cst_147 : f32 to vector<16x64xf32>
    %352 = arith.mulf %351, %350 : vector<16x64xf32>
    %353 = arith.mulf %340, %352 : vector<16x64xf32>
    %c1_148 = arith.constant 1 : index
    %c0_149 = arith.constant 0 : index
    %c0_150 = arith.constant 0 : index
    %354 = vector.load %arg14[%c1_148, %c0_149, %c0_150] : memref<2x64x32xf32, #tpu.memory_space<vmem>>, vector<1x64x32xf32>
    %355 = vector.shape_cast %354 : vector<1x64x32xf32> to vector<64x32xf32>
    %cst_151 = arith.constant dense<0.000000e+00> : vector<16x32xf32>
    %356 = tpu.matmul %353, %355, %cst_151 {dimension_numbers = #tpu.dot_dimension_numbers<[1], [0], [0], [1], [0, 0, 1, 1], [], []>} : vector<16x64xf32>, vector<64x32xf32>, vector<16x32xf32> -> vector<16x32xf32>
    %c1_152 = arith.constant 1 : index
    %c0_153 = arith.constant 0 : index
    %c0_154 = arith.constant 0 : index
    %357 = vector.load %arg15[%c1_152, %c0_153, %c0_154] : memref<2x1x32xf32, #tpu.memory_space<vmem>>, vector<1x1x32xf32>
    %358 = vector.shape_cast %357 : vector<1x1x32xf32> to vector<1x32xf32>
    %359 = vector.broadcast %358 : vector<1x32xf32> to vector<16x32xf32>
    %360 = arith.addf %356, %359 : vector<16x32xf32>
    %361 = arith.addf %360, %333 : vector<16x32xf32>
    %c1_155 = arith.constant 1 : index
    %c0_156 = arith.constant 0 : index
    %c0_157 = arith.constant 0 : index
    %362 = vector.load %arg16[%c1_155, %c0_156, %c0_157] : memref<2x1x32xf32, #tpu.memory_space<vmem>>, vector<1x1x32xf32>
    %363 = vector.shape_cast %362 : vector<1x1x32xf32> to vector<1x32xf32>
    %c1_158 = arith.constant 1 : index
    %c0_159 = arith.constant 0 : index
    %c0_160 = arith.constant 0 : index
    %364 = vector.load %arg17[%c1_158, %c0_159, %c0_160] : memref<2x1x32xf32, #tpu.memory_space<vmem>>, vector<1x1x32xf32>
    %365 = vector.shape_cast %364 : vector<1x1x32xf32> to vector<1x32xf32>
    %cst_161 = arith.constant dense<0.000000e+00> : vector<16xf32>
    %366 = vector.multi_reduction <add>, %361, %cst_161 [1] : vector<16x32xf32> to vector<16xf32>
    %367 = vector.shape_cast %366 : vector<16xf32> to vector<16x1xf32>
    %cst_162 = arith.constant 3.200000e+01 : f32
    %368 = vector.broadcast %cst_162 : f32 to vector<16x1xf32>
    %369 = arith.divf %367, %368 : vector<16x1xf32>
    %370 = vector.broadcast %369 : vector<16x1xf32> to vector<16x32xf32>
    %371 = arith.subf %361, %370 : vector<16x32xf32>
    %372 = arith.mulf %371, %371 : vector<16x32xf32>
    %cst_163 = arith.constant dense<0.000000e+00> : vector<16xf32>
    %373 = vector.multi_reduction <add>, %372, %cst_163 [1] : vector<16x32xf32> to vector<16xf32>
    %374 = vector.shape_cast %373 : vector<16xf32> to vector<16x1xf32>
    %cst_164 = arith.constant 3.200000e+01 : f32
    %375 = vector.broadcast %cst_164 : f32 to vector<16x1xf32>
    %376 = arith.divf %374, %375 : vector<16x1xf32>
    %377 = vector.broadcast %369 : vector<16x1xf32> to vector<16x32xf32>
    %378 = arith.subf %361, %377 : vector<16x32xf32>
    %cst_165 = arith.constant 9.99999996E-13 : f32
    %379 = vector.broadcast %cst_165 : f32 to vector<16x1xf32>
    %380 = arith.addf %376, %379 : vector<16x1xf32>
    %381 = math.rsqrt %380 : vector<16x1xf32>
    %382 = vector.broadcast %381 : vector<16x1xf32> to vector<16x32xf32>
    %383 = arith.mulf %378, %382 : vector<16x32xf32>
    %384 = vector.broadcast %363 : vector<1x32xf32> to vector<16x32xf32>
    %385 = arith.mulf %383, %384 : vector<16x32xf32>
    %386 = vector.broadcast %365 : vector<1x32xf32> to vector<16x32xf32>
    %387 = arith.addf %385, %386 : vector<16x32xf32>
    %388 = tpu.iota {dimensions = array<i32: 1>} : vector<2x16xi32>
    %389 = tpu.iota {dimensions = array<i32: 0>} : vector<2x16xi32>
    %c8_i32 = arith.constant 8 : i32
    %390 = vector.broadcast %c8_i32 : i32 to vector<2x16xi32>
    %391 = arith.muli %389, %390 : vector<2x16xi32>
    %392 = arith.cmpi eq, %388, %391 : vector<2x16xi32>
    %393 = arith.extui %392 : vector<2x16xi1> to vector<2x16xi32>
    %394 = arith.sitofp %393 : vector<2x16xi32> to vector<2x16xf32>
    %cst_166 = arith.constant dense<0.000000e+00> : vector<2x32xf32>
    %395 = tpu.matmul %394, %387, %cst_166 {dimension_numbers = #tpu.dot_dimension_numbers<[1], [0], [0], [1], [0, 0, 1, 1], [], []>} : vector<2x16xf32>, vector<16x32xf32>, vector<2x32xf32> -> vector<2x32xf32>
    %c0_167 = arith.constant 0 : index
    %c0_168 = arith.constant 0 : index
    %396 = vector.load %arg18[%c0_167, %c0_168] : memref<32x32xf32, #tpu.memory_space<vmem>>, vector<32x32xf32>
    %cst_169 = arith.constant dense<0.000000e+00> : vector<2x32xf32>
    %397 = tpu.matmul %395, %396, %cst_169 {dimension_numbers = #tpu.dot_dimension_numbers<[1], [0], [0], [1], [0, 0, 1, 1], [], []>} : vector<2x32xf32>, vector<32x32xf32>, vector<2x32xf32> -> vector<2x32xf32>
    %c0_170 = arith.constant 0 : index
    %c0_171 = arith.constant 0 : index
    %398 = vector.load %arg19[%c0_170, %c0_171] : memref<1x32xf32, #tpu.memory_space<vmem>>, vector<1x32xf32>
    %399 = vector.broadcast %398 : vector<1x32xf32> to vector<2x32xf32>
    %400 = arith.addf %397, %399 : vector<2x32xf32>
    %401 = math.tanh %400 : vector<2x32xf32>
    %c0_172 = arith.constant 0 : index
    %c0_173 = arith.constant 0 : index
    %402 = vector.load %arg20[%c0_172, %c0_173] : memref<32x3xf32, #tpu.memory_space<vmem>>, vector<32x3xf32>
    %cst_174 = arith.constant dense<0.000000e+00> : vector<2x3xf32>
    %403 = tpu.matmul %401, %402, %cst_174 {dimension_numbers = #tpu.dot_dimension_numbers<[1], [0], [0], [1], [0, 0, 1, 1], [], []>} : vector<2x32xf32>, vector<32x3xf32>, vector<2x3xf32> -> vector<2x3xf32>
    %c0_175 = arith.constant 0 : index
    %c0_176 = arith.constant 0 : index
    %404 = vector.load %arg21[%c0_175, %c0_176] : memref<1x3xf32, #tpu.memory_space<vmem>>, vector<1x3xf32>
    %405 = vector.broadcast %404 : vector<1x3xf32> to vector<2x3xf32>
    %406 = arith.addf %403, %405 : vector<2x3xf32>
    %407 = arith.negf %406 : vector<2x3xf32>
    %408 = math.exp %407 : vector<2x3xf32>
    %cst_177 = arith.constant 1.000000e+00 : f32
    %409 = vector.broadcast %cst_177 : f32 to vector<2x3xf32>
    %410 = arith.addf %409, %408 : vector<2x3xf32>
    %411 = arith.divf %409, %410 : vector<2x3xf32>
    %c0_178 = arith.constant 0 : index
    %c0_179 = arith.constant 0 : index
    %412 = vector.load %arg22[%c0_178, %c0_179] : memref<2x3xf32, #tpu.memory_space<vmem>>, vector<2x3xf32>
    tpu.vector_store %arg22[%c0_178, %c0_179], %411 {strides = array<i32>} : memref<2x3xf32, #tpu.memory_space<vmem>>, vector<2x3xf32>,
    %c0_180 = arith.constant 0 : index
    %c0_181 = arith.constant 0 : index
    %413 = vector.load %arg3[%c0_180, %c0_181] : memref<2x3xf32, #tpu.memory_space<vmem>>, vector<2x3xf32>
    %414 = math.log %411 : vector<2x3xf32>
    %cst_182 = arith.constant -1.000000e+02 : f32
    %415 = vector.broadcast %cst_182 : f32 to vector<2x3xf32>
    %416 = arith.maximumf %414, %415 : vector<2x3xf32>
    %cst_183 = arith.constant 1.000000e+00 : f32
    %417 = vector.broadcast %cst_183 : f32 to vector<2x3xf32>
    %418 = arith.subf %417, %411 : vector<2x3xf32>
    %419 = math.log %418 : vector<2x3xf32>
    %cst_184 = arith.constant -1.000000e+02 : f32
    %420 = vector.broadcast %cst_184 : f32 to vector<2x3xf32>
    %421 = arith.maximumf %419, %420 : vector<2x3xf32>
    %422 = arith.mulf %413, %416 : vector<2x3xf32>
    %cst_185 = arith.constant 1.000000e+00 : f32
    %423 = vector.broadcast %cst_185 : f32 to vector<2x3xf32>
    %424 = arith.subf %423, %413 : vector<2x3xf32>
    %425 = arith.mulf %424, %421 : vector<2x3xf32>
    %426 = arith.addf %422, %425 : vector<2x3xf32>
    %427 = vector.shape_cast %426 : vector<2x3xf32> to vector<1x2x3xf32>
    %cst_186 = arith.constant dense<0.000000e+00> : vector<1xf32>
    %428 = vector.multi_reduction <add>, %427, %cst_186 [1, 2] : vector<1x2x3xf32> to vector<1xf32>
    %429 = vector.shape_cast %428 : vector<1xf32> to vector<1x1x1xf32>
    %430 = vector.extract %429[0, 0, 0] : f32 from vector<1x1x1xf32>
    %431 = vector.broadcast %430 : f32 to vector<1x1xf32>
    %cst_187 = arith.constant 6.000000e+00 : f32
    %432 = vector.broadcast %cst_187 : f32 to vector<1x1xf32>
    %433 = arith.divf %431, %432 : vector<1x1xf32>
    %cst_188 = arith.constant 0.000000e+00 : f32
    %434 = vector.broadcast %cst_188 : f32 to vector<1x1xf32>
    %435 = arith.subf %434, %433 : vector<1x1xf32>
    %c0_189 = arith.constant 0 : index
    %c0_190 = arith.constant 0 : index
    %436 = vector.load %arg23[%c0_189, %c0_190] : memref<1x1xf32, #tpu.memory_space<vmem>>, vector<1x1xf32>
    tpu.vector_store %arg23[%c0_189, %c0_190], %435 {strides = array<i32>} : memref<1x1xf32, #tpu.memory_space<vmem>>, vector<1x1xf32>,
    return
  }
  func.func @transform_0(%arg0: i32) -> (i32, i32) {
    %c0_i32 = arith.constant 0 : i32
    %c0_i32_0 = arith.constant 0 : i32
    %c0_i32_1 = arith.constant 0 : i32
    return %c0_i32, %c0_i32_0 : i32, i32
  }
  func.func @transform_1(%arg0: i32) -> (i32, i32) {
    %c0_i32 = arith.constant 0 : i32
    %c0_i32_0 = arith.constant 0 : i32
    %c0_i32_1 = arith.constant 0 : i32
    return %c0_i32, %c0_i32_0 : i32, i32
  }
  func.func @transform_2(%arg0: i32) -> (i32, i32) {
    %c0_i32 = arith.constant 0 : i32
    %c0_i32_0 = arith.constant 0 : i32
    %c0_i32_1 = arith.constant 0 : i32
    return %c0_i32, %c0_i32_0 : i32, i32
  }
  func.func @transform_3(%arg0: i32) -> (i32, i32) {
    %c0_i32 = arith.constant 0 : i32
    %c0_i32_0 = arith.constant 0 : i32
    %c0_i32_1 = arith.constant 0 : i32
    return %c0_i32, %c0_i32_0 : i32, i32
  }
  func.func @transform_4(%arg0: i32) -> (i32, i32) {
    %c0_i32 = arith.constant 0 : i32
    %c0_i32_0 = arith.constant 0 : i32
    %c0_i32_1 = arith.constant 0 : i32
    return %c0_i32, %c0_i32_0 : i32, i32
  }
  func.func @transform_5(%arg0: i32) -> (i32, i32, i32) {
    %c0_i32 = arith.constant 0 : i32
    %c0_i32_0 = arith.constant 0 : i32
    %c0_i32_1 = arith.constant 0 : i32
    %c0_i32_2 = arith.constant 0 : i32
    return %c0_i32, %c0_i32_0, %c0_i32_1 : i32, i32, i32
  }
  func.func @transform_6(%arg0: i32) -> (i32, i32, i32) {
    %c0_i32 = arith.constant 0 : i32
    %c0_i32_0 = arith.constant 0 : i32
    %c0_i32_1 = arith.constant 0 : i32
    %c0_i32_2 = arith.constant 0 : i32
    return %c0_i32, %c0_i32_0, %c0_i32_1 : i32, i32, i32
  }
  func.func @transform_7(%arg0: i32) -> (i32, i32, i32) {
    %c0_i32 = arith.constant 0 : i32
    %c0_i32_0 = arith.constant 0 : i32
    %c0_i32_1 = arith.constant 0 : i32
    %c0_i32_2 = arith.constant 0 : i32
    return %c0_i32, %c0_i32_0, %c0_i32_1 : i32, i32, i32
  }
  func.func @transform_8(%arg0: i32) -> (i32, i32, i32) {
    %c0_i32 = arith.constant 0 : i32
    %c0_i32_0 = arith.constant 0 : i32
    %c0_i32_1 = arith.constant 0 : i32
    %c0_i32_2 = arith.constant 0 : i32
    return %c0_i32, %c0_i32_0, %c0_i32_1 : i32, i32, i32
  }
  func.func @transform_9(%arg0: i32) -> (i32, i32, i32) {
    %c0_i32 = arith.constant 0 : i32
    %c0_i32_0 = arith.constant 0 : i32
    %c0_i32_1 = arith.constant 0 : i32
    %c0_i32_2 = arith.constant 0 : i32
    return %c0_i32, %c0_i32_0, %c0_i32_1 : i32, i32, i32
  }
  func.func @transform_10(%arg0: i32) -> (i32, i32, i32) {
    %c0_i32 = arith.constant 0 : i32
    %c0_i32_0 = arith.constant 0 : i32
    %c0_i32_1 = arith.constant 0 : i32
    %c0_i32_2 = arith.constant 0 : i32
    return %c0_i32, %c0_i32_0, %c0_i32_1 : i32, i32, i32
  }
  func.func @transform_11(%arg0: i32) -> (i32, i32, i32) {
    %c0_i32 = arith.constant 0 : i32
    %c0_i32_0 = arith.constant 0 : i32
    %c0_i32_1 = arith.constant 0 : i32
    %c0_i32_2 = arith.constant 0 : i32
    return %c0_i32, %c0_i32_0, %c0_i32_1 : i32, i32, i32
  }
  func.func @transform_12(%arg0: i32) -> (i32, i32, i32) {
    %c0_i32 = arith.constant 0 : i32
    %c0_i32_0 = arith.constant 0 : i32
    %c0_i32_1 = arith.constant 0 : i32
    %c0_i32_2 = arith.constant 0 : i32
    return %c0_i32, %c0_i32_0, %c0_i32_1 : i32, i32, i32
  }
  func.func @transform_13(%arg0: i32) -> (i32, i32, i32) {
    %c0_i32 = arith.constant 0 : i32
    %c0_i32_0 = arith.constant 0 : i32
    %c0_i32_1 = arith.constant 0 : i32
    %c0_i32_2 = arith.constant 0 : i32
    return %c0_i32, %c0_i32_0, %c0_i32_1 : i32, i32, i32
  }
  func.func @transform_14(%arg0: i32) -> (i32, i32, i32) {
    %c0_i32 = arith.constant 0 : i32
    %c0_i32_0 = arith.constant 0 : i32
    %c0_i32_1 = arith.constant 0 : i32
    %c0_i32_2 = arith.constant 0 : i32
    return %c0_i32, %c0_i32_0, %c0_i32_1 : i32, i32, i32
  }
  func.func @transform_15(%arg0: i32) -> (i32, i32, i32) {
    %c0_i32 = arith.constant 0 : i32
    %c0_i32_0 = arith.constant 0 : i32
    %c0_i32_1 = arith.constant 0 : i32
    %c0_i32_2 = arith.constant 0 : i32
    return %c0_i32, %c0_i32_0, %c0_i32_1 : i32, i32, i32
  }
  func.func @transform_16(%arg0: i32) -> (i32, i32, i32) {
    %c0_i32 = arith.constant 0 : i32
    %c0_i32_0 = arith.constant 0 : i32
    %c0_i32_1 = arith.constant 0 : i32
    %c0_i32_2 = arith.constant 0 : i32
    return %c0_i32, %c0_i32_0, %c0_i32_1 : i32, i32, i32
  }
  func.func @transform_17(%arg0: i32) -> (i32, i32) {
    %c0_i32 = arith.constant 0 : i32
    %c0_i32_0 = arith.constant 0 : i32
    %c0_i32_1 = arith.constant 0 : i32
    return %c0_i32, %c0_i32_0 : i32, i32
  }
  func.func @transform_18(%arg0: i32) -> (i32, i32) {
    %c0_i32 = arith.constant 0 : i32
    %c0_i32_0 = arith.constant 0 : i32
    %c0_i32_1 = arith.constant 0 : i32
    return %c0_i32, %c0_i32_0 : i32, i32
  }
  func.func @transform_19(%arg0: i32) -> (i32, i32) {
    %c0_i32 = arith.constant 0 : i32
    %c0_i32_0 = arith.constant 0 : i32
    %c0_i32_1 = arith.constant 0 : i32
    return %c0_i32, %c0_i32_0 : i32, i32
  }
  func.func @transform_20(%arg0: i32) -> (i32, i32) {
    %c0_i32 = arith.constant 0 : i32
    %c0_i32_0 = arith.constant 0 : i32
    %c0_i32_1 = arith.constant 0 : i32
    return %c0_i32, %c0_i32_0 : i32, i32
  }
  func.func @transform_21(%arg0: i32) -> (i32, i32) {
    %c0_i32 = arith.constant 0 : i32
    %c0_i32_0 = arith.constant 0 : i32
    %c0_i32_1 = arith.constant 0 : i32
    return %c0_i32, %c0_i32_0 : i32, i32
  }
  func.func @transform_22(%arg0: i32) -> (i32, i32) {
    %c0_i32 = arith.constant 0 : i32
    %c0_i32_0 = arith.constant 0 : i32
    %c0_i32_1 = arith.constant 0 : i32
    return %c0_i32, %c0_i32_0 : i32, i32
  }
}

</mosaic_0001>

<llo_original>
// kernel: bert_classifier_forward.1
$region0: #{bert_classifier_forward.1}
  #allocation0 [shape = 'u32[]', space=smem, size = 0x4, offset = 0x4, fixed_abs, tag = 'smem constant byte address 0x4 - core index']
  #allocation1 [shape = 'u32[144,128]{1,0:T(1,128)}', space=vmem, size = 0x12000, scoped, tag = 'internal scratch']
  %s0 = inlined_call_operand.vmem [shape: f32[16,32], index: 0, kind: input, shape index: {}]
  %s1 = inlined_call_operand.vmem [shape: f32[2,8], index: 1, kind: input, shape index: {}]
  %s2 = inlined_call_operand.vmem [shape: f32[2,3], index: 2, kind: input, shape index: {}]
  %s3 = inlined_call_operand.vmem [shape: f32[1,32], index: 3, kind: input, shape index: {}]
  %s4 = inlined_call_operand.vmem [shape: f32[1,32], index: 4, kind: input, shape index: {}]
  %s5 = inlined_call_operand.vmem [shape: f32[2,32,96], index: 5, kind: input, shape index: {}]
  %s6 = inlined_call_operand.vmem [shape: f32[2,1,96], index: 6, kind: input, shape index: {}]
  %s7 = inlined_call_operand.vmem [shape: f32[2,32,32], index: 7, kind: input, shape index: {}]
  %s8 = inlined_call_operand.vmem [shape: f32[2,1,32], index: 8, kind: input, shape index: {}]
  %s9 = inlined_call_operand.vmem [shape: f32[2,1,32], index: 9, kind: input, shape index: {}]
  %s10 = inlined_call_operand.vmem [shape: f32[2,1,32], index: 10, kind: input, shape index: {}]
  %s11 = inlined_call_operand.vmem [shape: f32[2,32,64], index: 11, kind: input, shape index: {}]
  %s12 = inlined_call_operand.vmem [shape: f32[2,1,64], index: 12, kind: input, shape index: {}]
  %s13 = inlined_call_operand.vmem [shape: f32[2,64,32], index: 13, kind: input, shape index: {}]
  %s14 = inlined_call_operand.vmem [shape: f32[2,1,32], index: 14, kind: input, shape index: {}]
  %s15 = inlined_call_operand.vmem [shape: f32[2,1,32], index: 15, kind: input, shape index: {}]
  %s16 = inlined_call_operand.vmem [shape: f32[2,1,32], index: 16, kind: input, shape index: {}]
  %s17 = inlined_call_operand.vmem [shape: f32[32,32], index: 17, kind: input, shape index: {}]
  %s18 = inlined_call_operand.vmem [shape: f32[1,32], index: 18, kind: input, shape index: {}]
  %s19 = inlined_call_operand.vmem [shape: f32[32,3], index: 19, kind: input, shape index: {}]
  %s20 = inlined_call_operand.vmem [shape: f32[1,3], index: 20, kind: input, shape index: {}]
  %s21 = inlined_call_operand.hbm [shape: f32[2,3], index: 21, kind: output, shape index: {0}]
  %s22 = inlined_call_operand.hbm [shape: f32[1,1], index: 22, kind: output, shape index: {1}]
  %23 = xla_tuple %s21, %s22
  %s24 = sld [smem:[#allocation0]]
  $region102: #{bert_classifier_forward.1} parent=0
    _
  %s26 = ssub.s32 1, %s24
  %s27 = scalar_select 0, %s26, %s24
  $region1: #{bert_classifier_forward.1} parent=0
    #allocation2 [shape = 'u8[1024]{0}', space=vmem, size = 0x400, scoped, tag = 'output window, operand 0, single buffered']
    #allocation3 [shape = 's32[1]{0}', space=sflag, size = 0x4, scoped, tag = 'scoped memory for bert_classifier_forward.1']
    #allocation4 [shape = 'u8[512]{0}', space=vmem, size = 0x400, scoped, tag = 'output window, operand 1, single buffered']
    #allocation5 [shape = 's32[1]{0}', space=sflag, size = 0x4, scoped, tag = 'scoped memory for bert_classifier_forward.1']
    %28 = vsyncpa [#allocation3], 0
    %29 = vsyncpa [#allocation5], 0
    // Predicated region
    $region2: #{bert_classifier_forward.1} parent=1 // pred_check
      _
    $region3: #{bert_classifier_forward.1} parent=1 // pred_check_branch
      %31 = sbr.rel (0) target = $region5
    $region4: #{bert_classifier_forward.1} parent=1 // pred_region
      _
    $region5: #{bert_classifier_forward.1} parent=1 // pred_fallthru
      _
    // Predicated region
    $region6: #{bert_classifier_forward.1} parent=1 // pred_check
      _
    $region7: #{bert_classifier_forward.1} parent=1 // pred_check_branch
      %33 = sbr.rel (0) target = $region9
    $region8: #{bert_classifier_forward.1} parent=1 // pred_region
      _
    $region9: #{bert_classifier_forward.1} parent=1 // pred_fallthru
      _
    // Predicated region
    $region10: #{bert_classifier_forward.1} parent=1 // pred_check
      _
    $region11: #{bert_classifier_forward.1} parent=1 // pred_check_branch
      %35 = sbr.rel (0) target = $region13
    $region12: #{bert_classifier_forward.1} parent=1 // pred_region
      _
    $region13: #{bert_classifier_forward.1} parent=1 // pred_fallthru
      _
    // Predicated region
    $region14: #{bert_classifier_forward.1} parent=1 // pred_check
      _
    $region15: #{bert_classifier_forward.1} parent=1 // pred_check_branch
      %37 = sbr.rel (0) target = $region17
    $region16: #{bert_classifier_forward.1} parent=1 // pred_region
      _
    $region17: #{bert_classifier_forward.1} parent=1 // pred_fallthru
      _
    // Predicated region
    $region18: #{bert_classifier_forward.1} parent=1 // pred_check
      _
    $region19: #{bert_classifier_forward.1} parent=1 // pred_check_branch
      %39 = sbr.rel (0) target = $region21
    $region20: #{bert_classifier_forward.1} parent=1 // pred_region
      _
    $region21: #{bert_classifier_forward.1} parent=1 // pred_fallthru
      _
    // Predicated region
    $region22: #{bert_classifier_forward.1} parent=1 // pred_check
      _
    $region23: #{bert_classifier_forward.1} parent=1 // pred_check_branch
      %41 = sbr.rel (0) target = $region25
    $region24: #{bert_classifier_forward.1} parent=1 // pred_region
      _
    $region25: #{bert_classifier_forward.1} parent=1 // pred_fallthru
      _
    // Predicated region
    $region26: #{bert_classifier_forward.1} parent=1 // pred_check
      _
    $region27: #{bert_classifier_forward.1} parent=1 // pred_check_branch
      %43 = sbr.rel (0) target = $region29
    $region28: #{bert_classifier_forward.1} parent=1 // pred_region
      _
    $region29: #{bert_classifier_forward.1} parent=1 // pred_fallthru
      _
    // Predicated region
    $region30: #{bert_classifier_forward.1} parent=1 // pred_check
      _
    $region31: #{bert_classifier_forward.1} parent=1 // pred_check_branch
      %45 = sbr.rel (0) target = $region33
    $region32: #{bert_classifier_forward.1} parent=1 // pred_region
      _
    $region33: #{bert_classifier_forward.1} parent=1 // pred_fallthru
      _
    // Predicated region
    $region34: #{bert_classifier_forward.1} parent=1 // pred_check
      _
    $region35: #{bert_classifier_forward.1} parent=1 // pred_check_branch
      %47 = sbr.rel (0) target = $region37
    $region36: #{bert_classifier_forward.1} parent=1 // pred_region
      _
    $region37: #{bert_classifier_forward.1} parent=1 // pred_fallthru
      _
    // Predicated region
    $region38: #{bert_classifier_forward.1} parent=1 // pred_check
      _
    $region39: #{bert_classifier_forward.1} parent=1 // pred_check_branch
      %49 = sbr.rel (0) target = $region41
    $region40: #{bert_classifier_forward.1} parent=1 // pred_region
      _
    $region41: #{bert_classifier_forward.1} parent=1 // pred_fallthru
      _
    // Predicated region
    $region42: #{bert_classifier_forward.1} parent=1 // pred_check
      _
    $region43: #{bert_classifier_forward.1} parent=1 // pred_check_branch
      %51 = sbr.rel (0) target = $region45
    $region44: #{bert_classifier_forward.1} parent=1 // pred_region
      _
    $region45: #{bert_classifier_forward.1} parent=1 // pred_fallthru
      _
    // Predicated region
    $region46: #{bert_classifier_forward.1} parent=1 // pred_check
      _
    $region47: #{bert_classifier_forward.1} parent=1 // pred_check_branch
      %53 = sbr.rel (0) target = $region49
    $region48: #{bert_classifier_forward.1} parent=1 // pred_region
      _
    $region49: #{bert_classifier_forward.1} parent=1 // pred_fallthru
      _
    // Predicated region
    $region50: #{bert_classifier_forward.1} parent=1 // pred_check
      _
    $region51: #{bert_classifier_forward.1} parent=1 // pred_check_branch
      %55 = sbr.rel (0) target = $region53
    $region52: #{bert_classifier_forward.1} parent=1 // pred_region
      _
    $region53: #{bert_classifier_forward.1} parent=1 // pred_fallthru
      _
    // Predicated region
    $region54: #{bert_classifier_forward.1} parent=1 // pred_check
      _
    $region55: #{bert_classifier_forward.1} parent=1 // pred_check_branch
      %57 = sbr.rel (0) target = $region57
    $region56: #{bert_classifier_forward.1} parent=1 // pred_region
      _
    $region57: #{bert_classifier_forward.1} parent=1 // pred_fallthru
      _
    // Predicated region
    $region58: #{bert_classifier_forward.1} parent=1 // pred_check
      _
    $region59: #{bert_classifier_forward.1} parent=1 // pred_check_branch
      %59 = sbr.rel (0) target = $region61
    $region60: #{bert_classifier_forward.1} parent=1 // pred_region
      _
    $region61: #{bert_classifier_forward.1} parent=1 // pred_fallthru
      _
    // Predicated region
    $region62: #{bert_classifier_forward.1} parent=1 // pred_check
      _
    $region63: #{bert_classifier_forward.1} parent=1 // pred_check_branch
      %61 = sbr.rel (0) target = $region65
    $region64: #{bert_classifier_forward.1} parent=1 // pred_region
      _
    $region65: #{bert_classifier_forward.1} parent=1 // pred_fallthru
      _
    // Predicated region
    $region66: #{bert_classifier_forward.1} parent=1 // pred_check
      _
    $region67: #{bert_classifier_forward.1} parent=1 // pred_check_branch
      %63 = sbr.rel (0) target = $region69
    $region68: #{bert_classifier_forward.1} parent=1 // pred_region
      _
    $region69: #{bert_classifier_forward.1} parent=1 // pred_fallthru
      _
    // Predicated region
    $region70: #{bert_classifier_forward.1} parent=1 // pred_check
      _
    $region71: #{bert_classifier_forward.1} parent=1 // pred_check_branch
      %65 = sbr.rel (0) target = $region73
    $region72: #{bert_classifier_forward.1} parent=1 // pred_region
      _
    $region73: #{bert_classifier_forward.1} parent=1 // pred_fallthru
      _
    // Predicated region
    $region74: #{bert_classifier_forward.1} parent=1 // pred_check
      _
    $region75: #{bert_classifier_forward.1} parent=1 // pred_check_branch
      %67 = sbr.rel (0) target = $region77
    $region76: #{bert_classifier_forward.1} parent=1 // pred_region
      _
    $region77: #{bert_classifier_forward.1} parent=1 // pred_fallthru
      _
    // Predicated region
    $region78: #{bert_classifier_forward.1} parent=1 // pred_check
      _
    $region79: #{bert_classifier_forward.1} parent=1 // pred_check_branch
      %69 = sbr.rel (0) target = $region81
    $region80: #{bert_classifier_forward.1} parent=1 // pred_region
      _
    $region81: #{bert_classifier_forward.1} parent=1 // pred_fallthru
      _
    // Predicated region
    $region82: #{bert_classifier_forward.1} parent=1 // pred_check
      _
    $region83: #{bert_classifier_forward.1} parent=1 // pred_check_branch
      %71 = sbr.rel (0) target = $region85
    $region84: #{bert_classifier_forward.1} parent=1 // pred_region
      _
    $region85: #{bert_classifier_forward.1} parent=1 // pred_fallthru
      _
    %v72 = vld [vmem:[%s0] sm:$0xff]
    %v73 = vld [vmem:[%s0 + $0x8] sm:$0xff]
    %v74 = vld [vmem:[%s3] sm:$0x1]
    %v75 = vld [vmem:[%s4] sm:$0x1]
    %vm76 = vcmask 261120
    %v77 = vsel %vm76, %v72, 0.0
    %78 = vadd.xlane.f32.xlu0 %v77
    %v79 = vpop.xlane.xlu0 %78
    %v80 = vsel %vm76, %v73, 0.0
    %81 = vadd.xlane.f32.xlu0 %v80
    %v82 = vpop.xlane.xlu0 %81
    %v83 = vrcp.pop 32.0
    %v84 = vmul.f32 %v79, %v83
    %v85 = vmul.f32 %v82, %v83
    %v86 = vsub.f32 %v72, %v84
    %v87 = vsub.f32 %v73, %v85
    %v88 = vmul.f32 %v86, %v86
    %v89 = vmul.f32 %v87, %v87
    %v90 = vsel %vm76, %v88, 0.0
    %91 = vadd.xlane.f32.xlu0 %v90
    %v92 = vpop.xlane.xlu0 %91
    %v93 = vsel %vm76, %v89, 0.0
    %94 = vadd.xlane.f32.xlu0 %v93
    %v95 = vpop.xlane.xlu0 %94
    %v96 = vmul.f32 %v92, %v83
    %v97 = vmul.f32 %v95, %v83
    %v98 = vadd.f32 %v96, 1e-12
    %v99 = vadd.f32 %v97, 1e-12
    %v100 = vrsqrt.pop %v98
    %v101 = vrsqrt.pop %v99
    %v102 = vmul.f32 %v86, %v100
    %v103 = vmul.f32 %v87, %v101
    %v105 = vlaneseq
    %v106 = vshrl.u32 %v105, 7
    %v107 = vsub.s32 0, %v106
    %v108 = vrot.slane %v74, %v107
    %v110 = vmul.f32 %v102, %v108
    %v111 = vmul.f32 %v103, %v108
    %v113 = vlaneseq
    %v114 = vshrl.u32 %v113, 7
    %v115 = vsub.s32 0, %v114
    %v116 = vrot.slane %v75, %v115
    %v118 = vadd.f32 %v110, %v116
    %v119 = vadd.f32 %v111, %v116
    %v120 = vld [vmem:[%s1] sm:$0x3]
    %v121 = vsub.f32 1.0, %v120
    %v122 = vmul.f32 %v121, -10000.0
    %v123 = vld [vmem:[%s5] sm:$0xff]
    %v124 = vld [vmem:[%s5 + $0x8] sm:$0xff]
    %v125 = vld [vmem:[%s5 + $0x10] sm:$0xff]
    %v126 = vld [vmem:[%s5 + $0x18] sm:$0xff]
    %v127 = vld [vmem:[%s6] sm:$0x1]
    %v129 = vlaneseq
    %v130 = vshrl.u32 %v129, 7
    %v131 = vsub.s32 0, %v130
    %v132 = vrot.slane %v127, %v131
    %v135 = vsel %vm76, %v118, 0
    %v138 = vsel %vm76, %v119, 0
    %140 = vmatprep.subr.mxu0 0.0
    %141 = vmatpush1.msra.mxu0 %v123
    %142 = vmatprep.subr.mxu0 0.0
    %143 = vmatpush1.msra.mxu0 %v124
    %144 = vmatprep.subr.mxu0 0.0
    %145 = vmatpush1.msra.mxu0 %v125
    %146 = vmatprep.subr.mxu0 0.0
    %147 = vmatpush1.msra.mxu0 %v126
    %148 = vmatprep.subr.mxu0 0.0
    %149 = vmatpush1.msra.mxu0 0.0
    %150 = vmatprep.subr.mxu0 0.0
    %151 = vmatpush1.msra.mxu0 0.0
    %152 = vmatprep.subr.mxu0 0.0
    %153 = vmatpush1.msra.mxu0 0.0
    %154 = vmatprep.subr.mxu0 0.0
    %155 = vmatpush1.msra.mxu0 0.0
    %156 = vmatprep.subr.mxu0 0.0
    %157 = vmatpush1.msra.mxu0 0.0
    %158 = vmatprep.subr.mxu0 0.0
    %159 = vmatpush1.msra.mxu0 0.0
    %160 = vmatprep.subr.mxu0 0.0
    %161 = vmatpush1.msra.mxu0 0.0
    %162 = vmatprep.subr.mxu0 0.0
    %163 = vmatpush1.msra.mxu0 0.0
    %164 = vmatprep.subr.mxu0 0.0
    %165 = vmatpush1.msra.mxu0 0.0
    %166 = vmatprep.subr.mxu0 0.0
    %167 = vmatpush1.msra.mxu0 0.0
    %168 = vmatprep.subr.mxu0 0.0
    %169 = vmatpush1.msra.mxu0 0.0
    %170 = vmatprep.subr.mxu0 0.0
    %171 = vmatpush1.msra.mxu0 0.0
    %172 = vmatprep.subr.mxu0 0.0
    %173 = vmatpush1.msra.mxu0 0.0
    %174 = vmatprep.subr.mxu0 0.0
    %175 = vmatpush1.msra.mxu0 0.0
    %176 = vmatprep.subr.mxu0 0.0
    %177 = vmatpush1.msra.mxu0 0.0
    %178 = vmatprep.subr.mxu0 0.0
    %179 = vmatpush1.msra.mxu0 0.0
    %180 = vmatprep.subr.mxu0 0.0
    %181 = vmatpush1.msra.mxu0 0.0
    %182 = vmatprep.subr.mxu0 0.0
    %183 = vmatpush1.msra.mxu0 0.0
    %184 = vmatprep.subr.mxu0 0.0
    %185 = vmatpush1.msra.mxu0 0.0
    %186 = vmatprep.subr.mxu0 0.0
    %187 = vmatpush1.msra.mxu0 0.0
    %188 = vmatprep.subr.mxu0 0.0
    %189 = vmatpush1.msra.mxu0 0.0
    %190 = vmatprep.subr.mxu0 0.0
    %191 = vmatpush1.msra.mxu0 0.0
    %192 = vmatprep.subr.mxu0 0.0
    %193 = vmatpush1.msra.mxu0 0.0
    %194 = vmatprep.subr.mxu0 0.0
    %195 = vmatpush1.msra.mxu0 0.0
    %196 = vmatprep.subr.mxu0 0.0
    %197 = vmatpush1.msra.mxu0 0.0
    %198 = vmatprep.subr.mxu0 0.0
    %199 = vmatpush1.msra.mxu0 0.0
    %200 = vmatprep.subr.mxu0 0.0
    %201 = vmatpush1.msra.mxu0 0.0
    %202 = vmatprep.subr.mxu0 0.0
    %203 = vmatpush1.msra.mxu0 0.0
    %204 = vmatprep.mubr.f32.mxu0 0.0
    %205 = vmatmul.mubr.f32.gmra.mrb[0].mxu0 %v135
    %v206 = vpop.f32.mrb[0].mxu0
    %v207 = vadd.f32 %v132, %v206
    %v208 = vpop.f32.mrb[0].mxu0
    %209 = vmatprep.mubr.f32.mxu0 0.0
    %210 = vmatmul.mubr.f32.gmra.mrb[0].mxu0 %v138
    %v211 = vpop.f32.mrb[0].mxu0
    %v212 = vadd.f32 %v132, %v211
    %v213 = vpop.f32.mrb[0].mxu0
    %214 = vdwg.mxu0
    %v215 = vld [vmem:[%s7] sm:$0xff]
    %v216 = vld [vmem:[%s7 + $0x8] sm:$0xff]
    %v217 = vld [vmem:[%s7 + $0x10] sm:$0xff]
    %v218 = vld [vmem:[%s7 + $0x18] sm:$0xff]
    %220 = vrot.lane.b32.xlu0 %v207, 96
    %v221 = vpop.permute.xlu0 %220
    %vm222 = vcmask 130048
    %v223 = vsel %vm222, %v207, 0
    %v225 = vsel %vm222, %v221, 0
    %227 = vmatprep.subr.mxu0 0.0
    %228 = vmatpush1.xpose.msra.mxu0 %v225
    %229 = vmatprep.subr.mxu0 0.0
    %230 = vmatpush1.xpose.msra.mxu0 0.0
    %231 = vmatprep.subr.mxu0 0.0
    %232 = vmatpush1.xpose.msra.mxu0 0.0
    %233 = vmatprep.subr.mxu0 0.0
    %234 = vmatpush1.xpose.msra.mxu0 0.0
    %235 = vmatprep.subr.mxu0 0.0
    %236 = vmatpush1.xpose.msra.mxu0 0.0
    %237 = vmatprep.subr.mxu0 0.0
    %238 = vmatpush1.xpose.msra.mxu0 0.0
    %239 = vmatprep.subr.mxu0 0.0
    %240 = vmatpush1.xpose.msra.mxu0 0.0
    %241 = vmatprep.subr.mxu0 0.0
    %242 = vmatpush1.xpose.msra.mxu0 0.0
    %243 = vmatprep.subr.mxu0 0.0
    %244 = vmatpush1.xpose.msra.mxu0 0.0
    %245 = vmatprep.subr.mxu0 0.0
    %246 = vmatpush1.xpose.msra.mxu0 0.0
    %247 = vmatprep.subr.mxu0 0.0
    %248 = vmatpush1.xpose.msra.mxu0 0.0
    %249 = vmatprep.subr.mxu0 0.0
    %250 = vmatpush1.xpose.msra.mxu0 0.0
    %251 = vmatprep.subr.mxu0 0.0
    %252 = vmatpush1.xpose.msra.mxu0 0.0
    %253 = vmatprep.subr.mxu0 0.0
    %254 = vmatpush1.xpose.msra.mxu0 0.0
    %255 = vmatprep.subr.mxu0 0.0
    %256 = vmatpush1.xpose.msra.mxu0 0.0
    %257 = vmatprep.subr.mxu0 0.0
    %258 = vmatpush1.xpose.msra.mxu0 0.0
    %259 = vmatprep.subr.mxu0 0.0
    %260 = vmatpush1.xpose.msra.mxu0 0.0
    %261 = vmatprep.subr.mxu0 0.0
    %262 = vmatpush1.xpose.msra.mxu0 0.0
    %263 = vmatprep.subr.mxu0 0.0
    %264 = vmatpush1.xpose.msra.mxu0 0.0
    %265 = vmatprep.subr.mxu0 0.0
    %266 = vmatpush1.xpose.msra.mxu0 0.0
    %267 = vmatprep.subr.mxu0 0.0
    %268 = vmatpush1.xpose.msra.mxu0 0.0
    %269 = vmatprep.subr.mxu0 0.0
    %270 = vmatpush1.xpose.msra.mxu0 0.0
    %271 = vmatprep.subr.mxu0 0.0
    %272 = vmatpush1.xpose.msra.mxu0 0.0
    %273 = vmatprep.subr.mxu0 0.0
    %274 = vmatpush1.xpose.msra.mxu0 0.0
    %275 = vmatprep.subr.mxu0 0.0
    %276 = vmatpush1.xpose.msra.mxu0 0.0
    %277 = vmatprep.subr.mxu0 0.0
    %278 = vmatpush1.xpose.msra.mxu0 0.0
    %279 = vmatprep.subr.mxu0 0.0
    %280 = vmatpush1.xpose.msra.mxu0 0.0
    %281 = vmatprep.subr.mxu0 0.0
    %282 = vmatpush1.xpose.msra.mxu0 0.0
    %283 = vmatprep.subr.mxu0 0.0
    %284 = vmatpush1.xpose.msra.mxu0 0.0
    %285 = vmatprep.subr.mxu0 0.0
    %286 = vmatpush1.xpose.msra.mxu0 0.0
    %287 = vmatprep.subr.mxu0 0.0
    %288 = vmatpush1.xpose.msra.mxu0 0.0
    %289 = vmatprep.subr.mxu0 0.0
    %290 = vmatpush1.xpose.msra.mxu0 0.0
    %291 = vmatprep.mubr.f32.mxu0 0.0
    %292 = vmatmul.mubr.f32.gmra.mrb[0].mxu0 %v223
    %v293 = vpop.f32.mrb[0].mxu0
    %v294 = vadd.f32 0.0, %v293
    %v295 = vpop.f32.mrb[0].mxu0
    %296 = vdwg.mxu0
    %v297 = vmul.f32 %v294, 0.25
    %v298 = vlaneseq
    %v299 = vshrl.u32 %v298, 7
    %v300 = vsub.s32 0, %v299
    %v301 = vrot.slane %v122, %v300
    %v302 = vadd.f32 %v297, %v301
    %vm303 = vcmask 64512
    %v304 = vsel %vm303, %v302, -inf
    %305 = vmax.xlane.f32.xlu0 %v304
    %v306 = vpop.xlane.xlu0 %305
    %v307 = vsub.f32 %v302, %v306
    %v308 = vmul.f32 %v307, 1.442695
    %v309 = vpow.pop %v308
    %v310 = vsel %vm303, %v309, 0.0
    %311 = vadd.xlane.f32.xlu0 %v310
    %v312 = vpop.xlane.xlu0 %311
    %v313 = vrcp.pop %v312
    %v314 = vmul.f32 %v309, %v313
    %315 = vrot.lane.b32.xlu0 %v207, 64
    %v316 = vpop.permute.xlu0 %315
    %v319 = vsel %vm303, %v314, 0
    %321 = vmatprep.subr.mxu0 0.0
    %322 = vmatpush1.msra.mxu0 %v316
    %323 = vmatprep.subr.mxu0 0.0
    %324 = vmatpush1.msra.mxu0 0.0
    %325 = vmatprep.subr.mxu0 0.0
    %326 = vmatpush1.msra.mxu0 0.0
    %327 = vmatprep.subr.mxu0 0.0
    %328 = vmatpush1.msra.mxu0 0.0
    %329 = vmatprep.subr.mxu0 0.0
    %330 = vmatpush1.msra.mxu0 0.0
    %331 = vmatprep.subr.mxu0 0.0
    %332 = vmatpush1.msra.mxu0 0.0
    %333 = vmatprep.subr.mxu0 0.0
    %334 = vmatpush1.msra.mxu0 0.0
    %335 = vmatprep.subr.mxu0 0.0
    %336 = vmatpush1.msra.mxu0 0.0
    %337 = vmatprep.subr.mxu0 0.0
    %338 = vmatpush1.msra.mxu0 0.0
    %339 = vmatprep.subr.mxu0 0.0
    %340 = vmatpush1.msra.mxu0 0.0
    %341 = vmatprep.subr.mxu0 0.0
    %342 = vmatpush1.msra.mxu0 0.0
    %343 = vmatprep.subr.mxu0 0.0
    %344 = vmatpush1.msra.mxu0 0.0
    %345 = vmatprep.subr.mxu0 0.0
    %346 = vmatpush1.msra.mxu0 0.0
    %347 = vmatprep.subr.mxu0 0.0
    %348 = vmatpush1.msra.mxu0 0.0
    %349 = vmatprep.subr.mxu0 0.0
    %350 = vmatpush1.msra.mxu0 0.0
    %351 = vmatprep.subr.mxu0 0.0
    %352 = vmatpush1.msra.mxu0 0.0
    %353 = vmatprep.subr.mxu0 0.0
    %354 = vmatpush1.msra.mxu0 0.0
    %355 = vmatprep.subr.mxu0 0.0
    %356 = vmatpush1.msra.mxu0 0.0
    %357 = vmatprep.subr.mxu0 0.0
    %358 = vmatpush1.msra.mxu0 0.0
    %359 = vmatprep.subr.mxu0 0.0
    %360 = vmatpush1.msra.mxu0 0.0
    %361 = vmatprep.subr.mxu0 0.0
    %362 = vmatpush1.msra.mxu0 0.0
    %363 = vmatprep.subr.mxu0 0.0
    %364 = vmatpush1.msra.mxu0 0.0
    %365 = vmatprep.subr.mxu0 0.0
    %366 = vmatpush1.msra.mxu0 0.0
    %367 = vmatprep.subr.mxu0 0.0
    %368 = vmatpush1.msra.mxu0 0.0
    %369 = vmatprep.subr.mxu0 0.0
    %370 = vmatpush1.msra.mxu0 0.0
    %371 = vmatprep.subr.mxu0 0.0
    %372 = vmatpush1.msra.mxu0 0.0
    %373 = vmatprep.subr.mxu0 0.0
    %374 = vmatpush1.msra.mxu0 0.0
    %375 = vmatprep.subr.mxu0 0.0
    %376 = vmatpush1.msra.mxu0 0.0
    %377 = vmatprep.subr.mxu0 0.0
    %378 = vmatpush1.msra.mxu0 0.0
    %379 = vmatprep.subr.mxu0 0.0
    %380 = vmatpush1.msra.mxu0 0.0
    %381 = vmatprep.subr.mxu0 0.0
    %382 = vmatpush1.msra.mxu0 0.0
    %383 = vmatprep.subr.mxu0 0.0
    %384 = vmatpush1.msra.mxu0 0.0
    %385 = vmatprep.mubr.f32.mxu0 0.0
    %386 = vmatmul.mubr.f32.gmra.mrb[0].mxu0 %v319
    %v387 = vpop.f32.mrb[0].mxu0
    %v388 = vadd.f32 0.0, %v387
    %v389 = vpop.f32.mrb[0].mxu0
    %390 = vdwg.mxu0
    %391 = vrot.lane.b32.xlu0 %v207, 112
    %v392 = vpop.permute.xlu0 %391
    %393 = vrot.lane.b32.xlu0 %v207, 80
    %v394 = vpop.permute.xlu0 %393
    %v395 = vsel %vm222, %v392, 0
    %v397 = vsel %vm222, %v394, 0
    %399 = vmatprep.subr.mxu0 0.0
    %400 = vmatpush1.xpose.msra.mxu0 %v397
    %401 = vmatprep.subr.mxu0 0.0
    %402 = vmatpush1.xpose.msra.mxu0 0.0
    %403 = vmatprep.subr.mxu0 0.0
    %404 = vmatpush1.xpose.msra.mxu0 0.0
    %405 = vmatprep.subr.mxu0 0.0
    %406 = vmatpush1.xpose.msra.mxu0 0.0
    %407 = vmatprep.subr.mxu0 0.0
    %408 = vmatpush1.xpose.msra.mxu0 0.0
    %409 = vmatprep.subr.mxu0 0.0
    %410 = vmatpush1.xpose.msra.mxu0 0.0
    %411 = vmatprep.subr.mxu0 0.0
    %412 = vmatpush1.xpose.msra.mxu0 0.0
    %413 = vmatprep.subr.mxu0 0.0
    %414 = vmatpush1.xpose.msra.mxu0 0.0
    %415 = vmatprep.subr.mxu0 0.0
    %416 = vmatpush1.xpose.msra.mxu0 0.0
    %417 = vmatprep.subr.mxu0 0.0
    %418 = vmatpush1.xpose.msra.mxu0 0.0
    %419 = vmatprep.subr.mxu0 0.0
    %420 = vmatpush1.xpose.msra.mxu0 0.0
    %421 = vmatprep.subr.mxu0 0.0
    %422 = vmatpush1.xpose.msra.mxu0 0.0
    %423 = vmatprep.subr.mxu0 0.0
    %424 = vmatpush1.xpose.msra.mxu0 0.0
    %425 = vmatprep.subr.mxu0 0.0
    %426 = vmatpush1.xpose.msra.mxu0 0.0
    %427 = vmatprep.subr.mxu0 0.0
    %428 = vmatpush1.xpose.msra.mxu0 0.0
    %429 = vmatprep.subr.mxu0 0.0
    %430 = vmatpush1.xpose.msra.mxu0 0.0
    %431 = vmatprep.subr.mxu0 0.0
    %432 = vmatpush1.xpose.msra.mxu0 0.0
    %433 = vmatprep.subr.mxu0 0.0
    %434 = vmatpush1.xpose.msra.mxu0 0.0
    %435 = vmatprep.subr.mxu0 0.0
    %436 = vmatpush1.xpose.msra.mxu0 0.0
    %437 = vmatprep.subr.mxu0 0.0
    %438 = vmatpush1.xpose.msra.mxu0 0.0
    %439 = vmatprep.subr.mxu0 0.0
    %440 = vmatpush1.xpose.msra.mxu0 0.0
    %441 = vmatprep.subr.mxu0 0.0
    %442 = vmatpush1.xpose.msra.mxu0 0.0
    %443 = vmatprep.subr.mxu0 0.0
    %444 = vmatpush1.xpose.msra.mxu0 0.0
    %445 = vmatprep.subr.mxu0 0.0
    %446 = vmatpush1.xpose.msra.mxu0 0.0
    %447 = vmatprep.subr.mxu0 0.0
    %448 = vmatpush1.xpose.msra.mxu0 0.0
    %449 = vmatprep.subr.mxu0 0.0
    %450 = vmatpush1.xpose.msra.mxu0 0.0
    %451 = vmatprep.subr.mxu0 0.0
    %452 = vmatpush1.xpose.msra.mxu0 0.0
    %453 = vmatprep.subr.mxu0 0.0
    %454 = vmatpush1.xpose.msra.mxu0 0.0
    %455 = vmatprep.subr.mxu0 0.0
    %456 = vmatpush1.xpose.msra.mxu0 0.0
    %457 = vmatprep.subr.mxu0 0.0
    %458 = vmatpush1.xpose.msra.mxu0 0.0
    %459 = vmatprep.subr.mxu0 0.0
    %460 = vmatpush1.xpose.msra.mxu0 0.0
    %461 = vmatprep.subr.mxu0 0.0
    %462 = vmatpush1.xpose.msra.mxu0 0.0
    %463 = vmatprep.mubr.f32.mxu0 0.0
    %464 = vmatmul.mubr.f32.gmra.mrb[0].mxu0 %v395
    %v465 = vpop.f32.mrb[0].mxu0
    %v466 = vadd.f32 0.0, %v465
    %v467 = vpop.f32.mrb[0].mxu0
    %468 = vdwg.mxu0
    %v469 = vmul.f32 %v466, 0.25
    %v470 = vadd.f32 %v469, %v301
    %v471 = vsel %vm303, %v470, -inf
    %472 = vmax.xlane.f32.xlu0 %v471
    %v473 = vpop.xlane.xlu0 %472
    %v474 = vsub.f32 %v470, %v473
    %v475 = vmul.f32 %v474, 1.442695
    %v476 = vpow.pop %v475
    %v477 = vsel %vm303, %v476, 0.0
    %478 = vadd.xlane.f32.xlu0 %v477
    %v479 = vpop.xlane.xlu0 %478
    %v480 = vrcp.pop %v479
    %v481 = vmul.f32 %v476, %v480
    %482 = vrot.lane.b32.xlu0 %v207, 48
    %v483 = vpop.permute.xlu0 %482
    %v486 = vsel %vm303, %v481, 0
    %488 = vmatprep.subr.mxu0 0.0
    %489 = vmatpush1.msra.mxu0 %v483
    %490 = vmatprep.subr.mxu0 0.0
    %491 = vmatpush1.msra.mxu0 0.0
    %492 = vmatprep.subr.mxu0 0.0
    %493 = vmatpush1.msra.mxu0 0.0
    %494 = vmatprep.subr.mxu0 0.0
    %495 = vmatpush1.msra.mxu0 0.0
    %496 = vmatprep.subr.mxu0 0.0
    %497 = vmatpush1.msra.mxu0 0.0
    %498 = vmatprep.subr.mxu0 0.0
    %499 = vmatpush1.msra.mxu0 0.0
    %500 = vmatprep.subr.mxu0 0.0
    %501 = vmatpush1.msra.mxu0 0.0
    %502 = vmatprep.subr.mxu0 0.0
    %503 = vmatpush1.msra.mxu0 0.0
    %504 = vmatprep.subr.mxu0 0.0
    %505 = vmatpush1.msra.mxu0 0.0
    %506 = vmatprep.subr.mxu0 0.0
    %507 = vmatpush1.msra.mxu0 0.0
    %508 = vmatprep.subr.mxu0 0.0
    %509 = vmatpush1.msra.mxu0 0.0
    %510 = vmatprep.subr.mxu0 0.0
    %511 = vmatpush1.msra.mxu0 0.0
    %512 = vmatprep.subr.mxu0 0.0
    %513 = vmatpush1.msra.mxu0 0.0
    %514 = vmatprep.subr.mxu0 0.0
    %515 = vmatpush1.msra.mxu0 0.0
    %516 = vmatprep.subr.mxu0 0.0
    %517 = vmatpush1.msra.mxu0 0.0
    %518 = vmatprep.subr.mxu0 0.0
    %519 = vmatpush1.msra.mxu0 0.0
    %520 = vmatprep.subr.mxu0 0.0
    %521 = vmatpush1.msra.mxu0 0.0
    %522 = vmatprep.subr.mxu0 0.0
    %523 = vmatpush1.msra.mxu0 0.0
    %524 = vmatprep.subr.mxu0 0.0
    %525 = vmatpush1.msra.mxu0 0.0
    %526 = vmatprep.subr.mxu0 0.0
    %527 = vmatpush1.msra.mxu0 0.0
    %528 = vmatprep.subr.mxu0 0.0
    %529 = vmatpush1.msra.mxu0 0.0
    %530 = vmatprep.subr.mxu0 0.0
    %531 = vmatpush1.msra.mxu0 0.0
    %532 = vmatprep.subr.mxu0 0.0
    %533 = vmatpush1.msra.mxu0 0.0
    %534 = vmatprep.subr.mxu0 0.0
    %535 = vmatpush1.msra.mxu0 0.0
    %536 = vmatprep.subr.mxu0 0.0
    %537 = vmatpush1.msra.mxu0 0.0
    %538 = vmatprep.subr.mxu0 0.0
    %539 = vmatpush1.msra.mxu0 0.0
    %540 = vmatprep.subr.mxu0 0.0
    %541 = vmatpush1.msra.mxu0 0.0
    %542 = vmatprep.subr.mxu0 0.0
    %543 = vmatpush1.msra.mxu0 0.0
    %544 = vmatprep.subr.mxu0 0.0
    %545 = vmatpush1.msra.mxu0 0.0
    %546 = vmatprep.subr.mxu0 0.0
    %547 = vmatpush1.msra.mxu0 0.0
    %548 = vmatprep.subr.mxu0 0.0
    %549 = vmatpush1.msra.mxu0 0.0
    %550 = vmatprep.subr.mxu0 0.0
    %551 = vmatpush1.msra.mxu0 0.0
    %552 = vmatprep.mubr.f32.mxu0 0.0
    %553 = vmatmul.mubr.f32.gmra.mrb[0].mxu0 %v486
    %v554 = vpop.f32.mrb[0].mxu0
    %v555 = vadd.f32 0.0, %v554
    %v556 = vpop.f32.mrb[0].mxu0
    %557 = vdwg.mxu0
    %v559 = vsel %vm222, %v555, 0
    %561 = vmatprep.subr.mxu0 0.0
    %562 = vmatpush1.msra.mxu0 %v217
    %563 = vmatprep.subr.mxu0 0.0
    %564 = vmatpush1.msra.mxu0 %v218
    %565 = vmatprep.subr.mxu0 0.0
    %566 = vmatpush1.msra.mxu0 0.0
    %567 = vmatprep.subr.mxu0 0.0
    %568 = vmatpush1.msra.mxu0 0.0
    %569 = vmatprep.subr.mxu0 0.0
    %570 = vmatpush1.msra.mxu0 0.0
    %571 = vmatprep.subr.mxu0 0.0
    %572 = vmatpush1.msra.mxu0 0.0
    %573 = vmatprep.subr.mxu0 0.0
    %574 = vmatpush1.msra.mxu0 0.0
    %575 = vmatprep.subr.mxu0 0.0
    %576 = vmatpush1.msra.mxu0 0.0
    %577 = vmatprep.subr.mxu0 0.0
    %578 = vmatpush1.msra.mxu0 0.0
    %579 = vmatprep.subr.mxu0 0.0
    %580 = vmatpush1.msra.mxu0 0.0
    %581 = vmatprep.subr.mxu0 0.0
    %582 = vmatpush1.msra.mxu0 0.0
    %583 = vmatprep.subr.mxu0 0.0
    %584 = vmatpush1.msra.mxu0 0.0
    %585 = vmatprep.subr.mxu0 0.0
    %586 = vmatpush1.msra.mxu0 0.0
    %587 = vmatprep.subr.mxu0 0.0
    %588 = vmatpush1.msra.mxu0 0.0
    %589 = vmatprep.subr.mxu0 0.0
    %590 = vmatpush1.msra.mxu0 0.0
    %591 = vmatprep.subr.mxu0 0.0
    %592 = vmatpush1.msra.mxu0 0.0
    %593 = vmatprep.subr.mxu0 0.0
    %594 = vmatpush1.msra.mxu0 0.0
    %595 = vmatprep.subr.mxu0 0.0
    %596 = vmatpush1.msra.mxu0 0.0
    %597 = vmatprep.subr.mxu0 0.0
    %598 = vmatpush1.msra.mxu0 0.0
    %599 = vmatprep.subr.mxu0 0.0
    %600 = vmatpush1.msra.mxu0 0.0
    %601 = vmatprep.subr.mxu0 0.0
    %602 = vmatpush1.msra.mxu0 0.0
    %603 = vmatprep.subr.mxu0 0.0
    %604 = vmatpush1.msra.mxu0 0.0
    %605 = vmatprep.subr.mxu0 0.0
    %606 = vmatpush1.msra.mxu0 0.0
    %607 = vmatprep.subr.mxu0 0.0
    %608 = vmatpush1.msra.mxu0 0.0
    %609 = vmatprep.subr.mxu0 0.0
    %610 = vmatpush1.msra.mxu0 0.0
    %611 = vmatprep.subr.mxu0 0.0
    %612 = vmatpush1.msra.mxu0 0.0
    %613 = vmatprep.subr.mxu0 0.0
    %614 = vmatpush1.msra.mxu0 0.0
    %615 = vmatprep.subr.mxu0 0.0
    %616 = vmatpush1.msra.mxu0 0.0
    %617 = vmatprep.subr.mxu0 0.0
    %618 = vmatpush1.msra.mxu0 0.0
    %619 = vmatprep.subr.mxu0 0.0
    %620 = vmatpush1.msra.mxu0 0.0
    %621 = vmatprep.subr.mxu0 0.0
    %622 = vmatpush1.msra.mxu0 0.0
    %623 = vmatprep.subr.mxu0 0.0
    %624 = vmatpush1.msra.mxu0 0.0
    %625 = vmatprep.mubr.f32.mxu0 0.0
    %626 = vmatmul.mubr.f32.gmra.mrb[0].mxu0 %v559
    %v627 = vpop.f32.mrb[0].mxu0
    %v628 = vadd.f32 0.0, %v627
    %v629 = vpop.f32.mrb[0].mxu0
    %630 = vdwg.mxu0
    %v632 = vsel %vm222, %v388, 0
    %634 = vmatprep.subr.mxu0 0.0
    %635 = vmatpush1.msra.mxu0 %v215
    %636 = vmatprep.subr.mxu0 0.0
    %637 = vmatpush1.msra.mxu0 %v216
    %638 = vmatprep.subr.mxu0 0.0
    %639 = vmatpush1.msra.mxu0 0.0
    %640 = vmatprep.subr.mxu0 0.0
    %641 = vmatpush1.msra.mxu0 0.0
    %642 = vmatprep.subr.mxu0 0.0
    %643 = vmatpush1.msra.mxu0 0.0
    %644 = vmatprep.subr.mxu0 0.0
    %645 = vmatpush1.msra.mxu0 0.0
    %646 = vmatprep.subr.mxu0 0.0
    %647 = vmatpush1.msra.mxu0 0.0
    %648 = vmatprep.subr.mxu0 0.0
    %649 = vmatpush1.msra.mxu0 0.0
    %650 = vmatprep.subr.mxu0 0.0
    %651 = vmatpush1.msra.mxu0 0.0
    %652 = vmatprep.subr.mxu0 0.0
    %653 = vmatpush1.msra.mxu0 0.0
    %654 = vmatprep.subr.mxu0 0.0
    %655 = vmatpush1.msra.mxu0 0.0
    %656 = vmatprep.subr.mxu0 0.0
    %657 = vmatpush1.msra.mxu0 0.0
    %658 = vmatprep.subr.mxu0 0.0
    %659 = vmatpush1.msra.mxu0 0.0
    %660 = vmatprep.subr.mxu0 0.0
    %661 = vmatpush1.msra.mxu0 0.0
    %662 = vmatprep.subr.mxu0 0.0
    %663 = vmatpush1.msra.mxu0 0.0
    %664 = vmatprep.subr.mxu0 0.0
    %665 = vmatpush1.msra.mxu0 0.0
    %666 = vmatprep.subr.mxu0 0.0
    %667 = vmatpush1.msra.mxu0 0.0
    %668 = vmatprep.subr.mxu0 0.0
    %669 = vmatpush1.msra.mxu0 0.0
    %670 = vmatprep.subr.mxu0 0.0
    %671 = vmatpush1.msra.mxu0 0.0
    %672 = vmatprep.subr.mxu0 0.0
    %673 = vmatpush1.msra.mxu0 0.0
    %674 = vmatprep.subr.mxu0 0.0
    %675 = vmatpush1.msra.mxu0 0.0
    %676 = vmatprep.subr.mxu0 0.0
    %677 = vmatpush1.msra.mxu0 0.0
    %678 = vmatprep.subr.mxu0 0.0
    %679 = vmatpush1.msra.mxu0 0.0
    %680 = vmatprep.subr.mxu0 0.0
    %681 = vmatpush1.msra.mxu0 0.0
    %682 = vmatprep.subr.mxu0 0.0
    %683 = vmatpush1.msra.mxu0 0.0
    %684 = vmatprep.subr.mxu0 0.0
    %685 = vmatpush1.msra.mxu0 0.0
    %686 = vmatprep.subr.mxu0 0.0
    %687 = vmatpush1.msra.mxu0 0.0
    %688 = vmatprep.subr.mxu0 0.0
    %689 = vmatpush1.msra.mxu0 0.0
    %690 = vmatprep.subr.mxu0 0.0
    %691 = vmatpush1.msra.mxu0 0.0
    %692 = vmatprep.subr.mxu0 0.0
    %693 = vmatpush1.msra.mxu0 0.0
    %694 = vmatprep.subr.mxu0 0.0
    %695 = vmatpush1.msra.mxu0 0.0
    %696 = vmatprep.subr.mxu0 0.0
    %697 = vmatpush1.msra.mxu0 0.0
    %698 = vmatprep.mubr.f32.mxu0 0.0
    %699 = vmatmul.mubr.f32.gmra.mrb[0].mxu0 %v632
    %v700 = vpop.f32.mrb[0].mxu0
    %v701 = vadd.f32 %v628, %v700
    %v702 = vpop.f32.mrb[0].mxu0
    %703 = vdwg.mxu0
    %705 = vrot.lane.b32.xlu0 %v212, 96
    %v706 = vpop.permute.xlu0 %705
    %v707 = vsel %vm222, %v212, 0
    %v709 = vsel %vm222, %v706, 0
    %711 = vmatprep.subr.mxu0 0.0
    %712 = vmatpush1.xpose.msra.mxu0 %v709
    %713 = vmatprep.subr.mxu0 0.0
    %714 = vmatpush1.xpose.msra.mxu0 0.0
    %715 = vmatprep.subr.mxu0 0.0
    %716 = vmatpush1.xpose.msra.mxu0 0.0
    %717 = vmatprep.subr.mxu0 0.0
    %718 = vmatpush1.xpose.msra.mxu0 0.0
    %719 = vmatprep.subr.mxu0 0.0
    %720 = vmatpush1.xpose.msra.mxu0 0.0
    %721 = vmatprep.subr.mxu0 0.0
    %722 = vmatpush1.xpose.msra.mxu0 0.0
    %723 = vmatprep.subr.mxu0 0.0
    %724 = vmatpush1.xpose.msra.mxu0 0.0
    %725 = vmatprep.subr.mxu0 0.0
    %726 = vmatpush1.xpose.msra.mxu0 0.0
    %727 = vmatprep.subr.mxu0 0.0
    %728 = vmatpush1.xpose.msra.mxu0 0.0
    %729 = vmatprep.subr.mxu0 0.0
    %730 = vmatpush1.xpose.msra.mxu0 0.0
    %731 = vmatprep.subr.mxu0 0.0
    %732 = vmatpush1.xpose.msra.mxu0 0.0
    %733 = vmatprep.subr.mxu0 0.0
    %734 = vmatpush1.xpose.msra.mxu0 0.0
    %735 = vmatprep.subr.mxu0 0.0
    %736 = vmatpush1.xpose.msra.mxu0 0.0
    %737 = vmatprep.subr.mxu0 0.0
    %738 = vmatpush1.xpose.msra.mxu0 0.0
    %739 = vmatprep.subr.mxu0 0.0
    %740 = vmatpush1.xpose.msra.mxu0 0.0
    %741 = vmatprep.subr.mxu0 0.0
    %742 = vmatpush1.xpose.msra.mxu0 0.0
    %743 = vmatprep.subr.mxu0 0.0
    %744 = vmatpush1.xpose.msra.mxu0 0.0
    %745 = vmatprep.subr.mxu0 0.0
    %746 = vmatpush1.xpose.msra.mxu0 0.0
    %747 = vmatprep.subr.mxu0 0.0
    %748 = vmatpush1.xpose.msra.mxu0 0.0
    %749 = vmatprep.subr.mxu0 0.0
    %750 = vmatpush1.xpose.msra.mxu0 0.0
    %751 = vmatprep.subr.mxu0 0.0
    %752 = vmatpush1.xpose.msra.mxu0 0.0
    %753 = vmatprep.subr.mxu0 0.0
    %754 = vmatpush1.xpose.msra.mxu0 0.0
    %755 = vmatprep.subr.mxu0 0.0
    %756 = vmatpush1.xpose.msra.mxu0 0.0
    %757 = vmatprep.subr.mxu0 0.0
    %758 = vmatpush1.xpose.msra.mxu0 0.0
    %759 = vmatprep.subr.mxu0 0.0
    %760 = vmatpush1.xpose.msra.mxu0 0.0
    %761 = vmatprep.subr.mxu0 0.0
    %762 = vmatpush1.xpose.msra.mxu0 0.0
    %763 = vmatprep.subr.mxu0 0.0
    %764 = vmatpush1.xpose.msra.mxu0 0.0
    %765 = vmatprep.subr.mxu0 0.0
    %766 = vmatpush1.xpose.msra.mxu0 0.0
    %767 = vmatprep.subr.mxu0 0.0
    %768 = vmatpush1.xpose.msra.mxu0 0.0
    %769 = vmatprep.subr.mxu0 0.0
    %770 = vmatpush1.xpose.msra.mxu0 0.0
    %771 = vmatprep.subr.mxu0 0.0
    %772 = vmatpush1.xpose.msra.mxu0 0.0
    %773 = vmatprep.subr.mxu0 0.0
    %774 = vmatpush1.xpose.msra.mxu0 0.0
    %775 = vmatprep.mubr.f32.mxu0 0.0
    %776 = vmatmul.mubr.f32.gmra.mrb[0].mxu0 %v707
    %v777 = vpop.f32.mrb[0].mxu0
    %v778 = vadd.f32 0.0, %v777
    %v779 = vpop.f32.mrb[0].mxu0
    %780 = vdwg.mxu0
    %v781 = vmul.f32 %v778, 0.25
    %v782 = vlaneseq
    %v783 = vshrl.u32 %v782, 7
    %v784 = vsub.s32 1, %v783
    %v785 = vrot.slane %v122, %v784
    %v786 = vadd.f32 %v781, %v785
    %v787 = vsel %vm303, %v786, -inf
    %788 = vmax.xlane.f32.xlu0 %v787
    %v789 = vpop.xlane.xlu0 %788
    %v790 = vsub.f32 %v786, %v789
    %v791 = vmul.f32 %v790, 1.442695
    %v792 = vpow.pop %v791
    %v793 = vsel %vm303, %v792, 0.0
    %794 = vadd.xlane.f32.xlu0 %v793
    %v795 = vpop.xlane.xlu0 %794
    %v796 = vrcp.pop %v795
    %v797 = vmul.f32 %v792, %v796
    %798 = vrot.lane.b32.xlu0 %v212, 64
    %v799 = vpop.permute.xlu0 %798
    %v802 = vsel %vm303, %v797, 0
    %804 = vmatprep.subr.mxu0 0.0
    %805 = vmatpush1.msra.mxu0 %v799
    %806 = vmatprep.subr.mxu0 0.0
    %807 = vmatpush1.msra.mxu0 0.0
    %808 = vmatprep.subr.mxu0 0.0
    %809 = vmatpush1.msra.mxu0 0.0
    %810 = vmatprep.subr.mxu0 0.0
    %811 = vmatpush1.msra.mxu0 0.0
    %812 = vmatprep.subr.mxu0 0.0
    %813 = vmatpush1.msra.mxu0 0.0
    %814 = vmatprep.subr.mxu0 0.0
    %815 = vmatpush1.msra.mxu0 0.0
    %816 = vmatprep.subr.mxu0 0.0
    %817 = vmatpush1.msra.mxu0 0.0
    %818 = vmatprep.subr.mxu0 0.0
    %819 = vmatpush1.msra.mxu0 0.0
    %820 = vmatprep.subr.mxu0 0.0
    %821 = vmatpush1.msra.mxu0 0.0
    %822 = vmatprep.subr.mxu0 0.0
    %823 = vmatpush1.msra.mxu0 0.0
    %824 = vmatprep.subr.mxu0 0.0
    %825 = vmatpush1.msra.mxu0 0.0
    %826 = vmatprep.subr.mxu0 0.0
    %827 = vmatpush1.msra.mxu0 0.0
    %828 = vmatprep.subr.mxu0 0.0
    %829 = vmatpush1.msra.mxu0 0.0
    %830 = vmatprep.subr.mxu0 0.0
    %831 = vmatpush1.msra.mxu0 0.0
    %832 = vmatprep.subr.mxu0 0.0
    %833 = vmatpush1.msra.mxu0 0.0
    %834 = vmatprep.subr.mxu0 0.0
    %835 = vmatpush1.msra.mxu0 0.0
    %836 = vmatprep.subr.mxu0 0.0
    %837 = vmatpush1.msra.mxu0 0.0
    %838 = vmatprep.subr.mxu0 0.0
    %839 = vmatpush1.msra.mxu0 0.0
    %840 = vmatprep.subr.mxu0 0.0
    %841 = vmatpush1.msra.mxu0 0.0
    %842 = vmatprep.subr.mxu0 0.0
    %843 = vmatpush1.msra.mxu0 0.0
    %844 = vmatprep.subr.mxu0 0.0
    %845 = vmatpush1.msra.mxu0 0.0
    %846 = vmatprep.subr.mxu0 0.0
    %847 = vmatpush1.msra.mxu0 0.0
    %848 = vmatprep.subr.mxu0 0.0
    %849 = vmatpush1.msra.mxu0 0.0
    %850 = vmatprep.subr.mxu0 0.0
    %851 = vmatpush1.msra.mxu0 0.0
    %852 = vmatprep.subr.mxu0 0.0
    %853 = vmatpush1.msra.mxu0 0.0
    %854 = vmatprep.subr.mxu0 0.0
    %855 = vmatpush1.msra.mxu0 0.0
    %856 = vmatprep.subr.mxu0 0.0
    %857 = vmatpush1.msra.mxu0 0.0
    %858 = vmatprep.subr.mxu0 0.0
    %859 = vmatpush1.msra.mxu0 0.0
    %860 = vmatprep.subr.mxu0 0.0
    %861 = vmatpush1.msra.mxu0 0.0
    %862 = vmatprep.subr.mxu0 0.0
    %863 = vmatpush1.msra.mxu0 0.0
    %864 = vmatprep.subr.mxu0 0.0
    %865 = vmatpush1.msra.mxu0 0.0
    %866 = vmatprep.subr.mxu0 0.0
    %867 = vmatpush1.msra.mxu0 0.0
    %868 = vmatprep.mubr.f32.mxu0 0.0
    %869 = vmatmul.mubr.f32.gmra.mrb[0].mxu0 %v802
    %v870 = vpop.f32.mrb[0].mxu0
    %v871 = vadd.f32 0.0, %v870
    %v872 = vpop.f32.mrb[0].mxu0
    %873 = vdwg.mxu0
    %874 = vrot.lane.b32.xlu0 %v212, 112
    %v875 = vpop.permute.xlu0 %874
    %876 = vrot.lane.b32.xlu0 %v212, 80
    %v877 = vpop.permute.xlu0 %876
    %v878 = vsel %vm222, %v875, 0
    %v880 = vsel %vm222, %v877, 0
    %882 = vmatprep.subr.mxu0 0.0
    %883 = vmatpush1.xpose.msra.mxu0 %v880
    %884 = vmatprep.subr.mxu0 0.0
    %885 = vmatpush1.xpose.msra.mxu0 0.0
    %886 = vmatprep.subr.mxu0 0.0
    %887 = vmatpush1.xpose.msra.mxu0 0.0
    %888 = vmatprep.subr.mxu0 0.0
    %889 = vmatpush1.xpose.msra.mxu0 0.0
    %890 = vmatprep.subr.mxu0 0.0
    %891 = vmatpush1.xpose.msra.mxu0 0.0
    %892 = vmatprep.subr.mxu0 0.0
    %893 = vmatpush1.xpose.msra.mxu0 0.0
    %894 = vmatprep.subr.mxu0 0.0
    %895 = vmatpush1.xpose.msra.mxu0 0.0
    %896 = vmatprep.subr.mxu0 0.0
    %897 = vmatpush1.xpose.msra.mxu0 0.0
    %898 = vmatprep.subr.mxu0 0.0
    %899 = vmatpush1.xpose.msra.mxu0 0.0
    %900 = vmatprep.subr.mxu0 0.0
    %901 = vmatpush1.xpose.msra.mxu0 0.0
    %902 = vmatprep.subr.mxu0 0.0
    %903 = vmatpush1.xpose.msra.mxu0 0.0
    %904 = vmatprep.subr.mxu0 0.0
    %905 = vmatpush1.xpose.msra.mxu0 0.0
    %906 = vmatprep.subr.mxu0 0.0
    %907 = vmatpush1.xpose.msra.mxu0 0.0
    %908 = vmatprep.subr.mxu0 0.0
    %909 = vmatpush1.xpose.msra.mxu0 0.0
    %910 = vmatprep.subr.mxu0 0.0
    %911 = vmatpush1.xpose.msra.mxu0 0.0
    %912 = vmatprep.subr.mxu0 0.0
    %913 = vmatpush1.xpose.msra.mxu0 0.0
    %914 = vmatprep.subr.mxu0 0.0
    %915 = vmatpush1.xpose.msra.mxu0 0.0
    %916 = vmatprep.subr.mxu0 0.0
    %917 = vmatpush1.xpose.msra.mxu0 0.0
    %918 = vmatprep.subr.mxu0 0.0
    %919 = vmatpush1.xpose.msra.mxu0 0.0
    %920 = vmatprep.subr.mxu0 0.0
    %921 = vmatpush1.xpose.msra.mxu0 0.0
    %922 = vmatprep.subr.mxu0 0.0
    %923 = vmatpush1.xpose.msra.mxu0 0.0
    %924 = vmatprep.subr.mxu0 0.0
    %925 = vmatpush1.xpose.msra.mxu0 0.0
    %926 = vmatprep.subr.mxu0 0.0
    %927 = vmatpush1.xpose.msra.mxu0 0.0
    %928 = vmatprep.subr.mxu0 0.0
    %929 = vmatpush1.xpose.msra.mxu0 0.0
    %930 = vmatprep.subr.mxu0 0.0
    %931 = vmatpush1.xpose.msra.mxu0 0.0
    %932 = vmatprep.subr.mxu0 0.0
    %933 = vmatpush1.xpose.msra.mxu0 0.0
    %934 = vmatprep.subr.mxu0 0.0
    %935 = vmatpush1.xpose.msra.mxu0 0.0
    %936 = vmatprep.subr.mxu0 0.0
    %937 = vmatpush1.xpose.msra.mxu0 0.0
    %938 = vmatprep.subr.mxu0 0.0
    %939 = vmatpush1.xpose.msra.mxu0 0.0
    %940 = vmatprep.subr.mxu0 0.0
    %941 = vmatpush1.xpose.msra.mxu0 0.0
    %942 = vmatprep.subr.mxu0 0.0
    %943 = vmatpush1.xpose.msra.mxu0 0.0
    %944 = vmatprep.subr.mxu0 0.0
    %945 = vmatpush1.xpose.msra.mxu0 0.0
    %946 = vmatprep.mubr.f32.mxu0 0.0
    %947 = vmatmul.mubr.f32.gmra.mrb[0].mxu0 %v878
    %v948 = vpop.f32.mrb[0].mxu0
    %v949 = vadd.f32 0.0, %v948
    %v950 = vpop.f32.mrb[0].mxu0
    %951 = vdwg.mxu0
    %v952 = vmul.f32 %v949, 0.25
    %v953 = vadd.f32 %v952, %v785
    %v954 = vsel %vm303, %v953, -inf
    %955 = vmax.xlane.f32.xlu0 %v954
    %v956 = vpop.xlane.xlu0 %955
    %v957 = vsub.f32 %v953, %v956
    %v958 = vmul.f32 %v957, 1.442695
    %v959 = vpow.pop %v958
    %v960 = vsel %vm303, %v959, 0.0
    %961 = vadd.xlane.f32.xlu0 %v960
    %v962 = vpop.xlane.xlu0 %961
    %v963 = vrcp.pop %v962
    %v964 = vmul.f32 %v959, %v963
    %965 = vrot.lane.b32.xlu0 %v212, 48
    %v966 = vpop.permute.xlu0 %965
    %v969 = vsel %vm303, %v964, 0
    %971 = vmatprep.subr.mxu0 0.0
    %972 = vmatpush1.msra.mxu0 %v966
    %973 = vmatprep.subr.mxu0 0.0
    %974 = vmatpush1.msra.mxu0 0.0
    %975 = vmatprep.subr.mxu0 0.0
    %976 = vmatpush1.msra.mxu0 0.0
    %977 = vmatprep.subr.mxu0 0.0
    %978 = vmatpush1.msra.mxu0 0.0
    %979 = vmatprep.subr.mxu0 0.0
    %980 = vmatpush1.msra.mxu0 0.0
    %981 = vmatprep.subr.mxu0 0.0
    %982 = vmatpush1.msra.mxu0 0.0
    %983 = vmatprep.subr.mxu0 0.0
    %984 = vmatpush1.msra.mxu0 0.0
    %985 = vmatprep.subr.mxu0 0.0
    %986 = vmatpush1.msra.mxu0 0.0
    %987 = vmatprep.subr.mxu0 0.0
    %988 = vmatpush1.msra.mxu0 0.0
    %989 = vmatprep.subr.mxu0 0.0
    %990 = vmatpush1.msra.mxu0 0.0
    %991 = vmatprep.subr.mxu0 0.0
    %992 = vmatpush1.msra.mxu0 0.0
    %993 = vmatprep.subr.mxu0 0.0
    %994 = vmatpush1.msra.mxu0 0.0
    %995 = vmatprep.subr.mxu0 0.0
    %996 = vmatpush1.msra.mxu0 0.0
    %997 = vmatprep.subr.mxu0 0.0
    %998 = vmatpush1.msra.mxu0 0.0
    %999 = vmatprep.subr.mxu0 0.0
    %1000 = vmatpush1.msra.mxu0 0.0
    %1001 = vmatprep.subr.mxu0 0.0
    %1002 = vmatpush1.msra.mxu0 0.0
    %1003 = vmatprep.subr.mxu0 0.0
    %1004 = vmatpush1.msra.mxu0 0.0
    %1005 = vmatprep.subr.mxu0 0.0
    %1006 = vmatpush1.msra.mxu0 0.0
    %1007 = vmatprep.subr.mxu0 0.0
    %1008 = vmatpush1.msra.mxu0 0.0
    %1009 = vmatprep.subr.mxu0 0.0
    %1010 = vmatpush1.msra.mxu0 0.0
    %1011 = vmatprep.subr.mxu0 0.0
    %1012 = vmatpush1.msra.mxu0 0.0
    %1013 = vmatprep.subr.mxu0 0.0
    %1014 = vmatpush1.msra.mxu0 0.0
    %1015 = vmatprep.subr.mxu0 0.0
    %1016 = vmatpush1.msra.mxu0 0.0
    %1017 = vmatprep.subr.mxu0 0.0
    %1018 = vmatpush1.msra.mxu0 0.0
    %1019 = vmatprep.subr.mxu0 0.0
    %1020 = vmatpush1.msra.mxu0 0.0
    %1021 = vmatprep.subr.mxu0 0.0
    %1022 = vmatpush1.msra.mxu0 0.0
    %1023 = vmatprep.subr.mxu0 0.0
    %1024 = vmatpush1.msra.mxu0 0.0
    %1025 = vmatprep.subr.mxu0 0.0
    %1026 = vmatpush1.msra.mxu0 0.0
    %1027 = vmatprep.subr.mxu0 0.0
    %1028 = vmatpush1.msra.mxu0 0.0
    %1029 = vmatprep.subr.mxu0 0.0
    %1030 = vmatpush1.msra.mxu0 0.0
    %1031 = vmatprep.subr.mxu0 0.0
    %1032 = vmatpush1.msra.mxu0 0.0
    %1033 = vmatprep.subr.mxu0 0.0
    %1034 = vmatpush1.msra.mxu0 0.0
    %1035 = vmatprep.mubr.f32.mxu0 0.0
    %1036 = vmatmul.mubr.f32.gmra.mrb[0].mxu0 %v969
    %v1037 = vpop.f32.mrb[0].mxu0
    %v1038 = vadd.f32 0.0, %v1037
    %v1039 = vpop.f32.mrb[0].mxu0
    %1040 = vdwg.mxu0
    %v1042 = vsel %vm222, %v1038, 0
    %1044 = vmatprep.subr.mxu0 0.0
    %1045 = vmatpush1.msra.mxu0 %v217
    %1046 = vmatprep.subr.mxu0 0.0
    %1047 = vmatpush1.msra.mxu0 %v218
    %1048 = vmatprep.subr.mxu0 0.0
    %1049 = vmatpush1.msra.mxu0 0.0
    %1050 = vmatprep.subr.mxu0 0.0
    %1051 = vmatpush1.msra.mxu0 0.0
    %1052 = vmatprep.subr.mxu0 0.0
    %1053 = vmatpush1.msra.mxu0 0.0
    %1054 = vmatprep.subr.mxu0 0.0
    %1055 = vmatpush1.msra.mxu0 0.0
    %1056 = vmatprep.subr.mxu0 0.0
    %1057 = vmatpush1.msra.mxu0 0.0
    %1058 = vmatprep.subr.mxu0 0.0
    %1059 = vmatpush1.msra.mxu0 0.0
    %1060 = vmatprep.subr.mxu0 0.0
    %1061 = vmatpush1.msra.mxu0 0.0
    %1062 = vmatprep.subr.mxu0 0.0
    %1063 = vmatpush1.msra.mxu0 0.0
    %1064 = vmatprep.subr.mxu0 0.0
    %1065 = vmatpush1.msra.mxu0 0.0
    %1066 = vmatprep.subr.mxu0 0.0
    %1067 = vmatpush1.msra.mxu0 0.0
    %1068 = vmatprep.subr.mxu0 0.0
    %1069 = vmatpush1.msra.mxu0 0.0
    %1070 = vmatprep.subr.mxu0 0.0
    %1071 = vmatpush1.msra.mxu0 0.0
    %1072 = vmatprep.subr.mxu0 0.0
    %1073 = vmatpush1.msra.mxu0 0.0
    %1074 = vmatprep.subr.mxu0 0.0
    %1075 = vmatpush1.msra.mxu0 0.0
    %1076 = vmatprep.subr.mxu0 0.0
    %1077 = vmatpush1.msra.mxu0 0.0
    %1078 = vmatprep.subr.mxu0 0.0
    %1079 = vmatpush1.msra.mxu0 0.0
    %1080 = vmatprep.subr.mxu0 0.0
    %1081 = vmatpush1.msra.mxu0 0.0
    %1082 = vmatprep.subr.mxu0 0.0
    %1083 = vmatpush1.msra.mxu0 0.0
    %1084 = vmatprep.subr.mxu0 0.0
    %1085 = vmatpush1.msra.mxu0 0.0
    %1086 = vmatprep.subr.mxu0 0.0
    %1087 = vmatpush1.msra.mxu0 0.0
    %1088 = vmatprep.subr.mxu0 0.0
    %1089 = vmatpush1.msra.mxu0 0.0
    %1090 = vmatprep.subr.mxu0 0.0
    %1091 = vmatpush1.msra.mxu0 0.0
    %1092 = vmatprep.subr.mxu0 0.0
    %1093 = vmatpush1.msra.mxu0 0.0
    %1094 = vmatprep.subr.mxu0 0.0
    %1095 = vmatpush1.msra.mxu0 0.0
    %1096 = vmatprep.subr.mxu0 0.0
    %1097 = vmatpush1.msra.mxu0 0.0
    %1098 = vmatprep.subr.mxu0 0.0
    %1099 = vmatpush1.msra.mxu0 0.0
    %1100 = vmatprep.subr.mxu0 0.0
    %1101 = vmatpush1.msra.mxu0 0.0
    %1102 = vmatprep.subr.mxu0 0.0
    %1103 = vmatpush1.msra.mxu0 0.0
    %1104 = vmatprep.subr.mxu0 0.0
    %1105 = vmatpush1.msra.mxu0 0.0
    %1106 = vmatprep.subr.mxu0 0.0
    %1107 = vmatpush1.msra.mxu0 0.0
    %1108 = vmatprep.mubr.f32.mxu0 0.0
    %1109 = vmatmul.mubr.f32.gmra.mrb[0].mxu0 %v1042
    %v1110 = vpop.f32.mrb[0].mxu0
    %v1111 = vadd.f32 0.0, %v1110
    %v1112 = vpop.f32.mrb[0].mxu0
    %1113 = vdwg.mxu0
    %v1115 = vsel %vm222, %v871, 0
    %1117 = vmatprep.subr.mxu0 0.0
    %1118 = vmatpush1.msra.mxu0 %v215
    %1119 = vmatprep.subr.mxu0 0.0
    %1120 = vmatpush1.msra.mxu0 %v216
    %1121 = vmatprep.subr.mxu0 0.0
    %1122 = vmatpush1.msra.mxu0 0.0
    %1123 = vmatprep.subr.mxu0 0.0
    %1124 = vmatpush1.msra.mxu0 0.0
    %1125 = vmatprep.subr.mxu0 0.0
    %1126 = vmatpush1.msra.mxu0 0.0
    %1127 = vmatprep.subr.mxu0 0.0
    %1128 = vmatpush1.msra.mxu0 0.0
    %1129 = vmatprep.subr.mxu0 0.0
    %1130 = vmatpush1.msra.mxu0 0.0
    %1131 = vmatprep.subr.mxu0 0.0
    %1132 = vmatpush1.msra.mxu0 0.0
    %1133 = vmatprep.subr.mxu0 0.0
    %1134 = vmatpush1.msra.mxu0 0.0
    %1135 = vmatprep.subr.mxu0 0.0
    %1136 = vmatpush1.msra.mxu0 0.0
    %1137 = vmatprep.subr.mxu0 0.0
    %1138 = vmatpush1.msra.mxu0 0.0
    %1139 = vmatprep.subr.mxu0 0.0
    %1140 = vmatpush1.msra.mxu0 0.0
    %1141 = vmatprep.subr.mxu0 0.0
    %1142 = vmatpush1.msra.mxu0 0.0
    %1143 = vmatprep.subr.mxu0 0.0
    %1144 = vmatpush1.msra.mxu0 0.0
    %1145 = vmatprep.subr.mxu0 0.0
    %1146 = vmatpush1.msra.mxu0 0.0
    %1147 = vmatprep.subr.mxu0 0.0
    %1148 = vmatpush1.msra.mxu0 0.0
    %1149 = vmatprep.subr.mxu0 0.0
    %1150 = vmatpush1.msra.mxu0 0.0
    %1151 = vmatprep.subr.mxu0 0.0
    %1152 = vmatpush1.msra.mxu0 0.0
    %1153 = vmatprep.subr.mxu0 0.0
    %1154 = vmatpush1.msra.mxu0 0.0
    %1155 = vmatprep.subr.mxu0 0.0
    %1156 = vmatpush1.msra.mxu0 0.0
    %1157 = vmatprep.subr.mxu0 0.0
    %1158 = vmatpush1.msra.mxu0 0.0
    %1159 = vmatprep.subr.mxu0 0.0
    %1160 = vmatpush1.msra.mxu0 0.0
    %1161 = vmatprep.subr.mxu0 0.0
    %1162 = vmatpush1.msra.mxu0 0.0
    %1163 = vmatprep.subr.mxu0 0.0
    %1164 = vmatpush1.msra.mxu0 0.0
    %1165 = vmatprep.subr.mxu0 0.0
    %1166 = vmatpush1.msra.mxu0 0.0
    %1167 = vmatprep.subr.mxu0 0.0
    %1168 = vmatpush1.msra.mxu0 0.0
    %1169 = vmatprep.subr.mxu0 0.0
    %1170 = vmatpush1.msra.mxu0 0.0
    %1171 = vmatprep.subr.mxu0 0.0
    %1172 = vmatpush1.msra.mxu0 0.0
    %1173 = vmatprep.subr.mxu0 0.0
    %1174 = vmatpush1.msra.mxu0 0.0
    %1175 = vmatprep.subr.mxu0 0.0
    %1176 = vmatpush1.msra.mxu0 0.0
    %1177 = vmatprep.subr.mxu0 0.0
    %1178 = vmatpush1.msra.mxu0 0.0
    %1179 = vmatprep.subr.mxu0 0.0
    %1180 = vmatpush1.msra.mxu0 0.0
    %1181 = vmatprep.mubr.f32.mxu0 0.0
    %1182 = vmatmul.mubr.f32.gmra.mrb[0].mxu0 %v1115
    %v1183 = vpop.f32.mrb[0].mxu0
    %v1184 = vadd.f32 %v1111, %v1183
    %v1185 = vpop.f32.mrb[0].mxu0
    %1186 = vdwg.mxu0
    %v1187 = vld [vmem:[%s8] sm:$0x1]
    %v1189 = vlaneseq
    %v1190 = vshrl.u32 %v1189, 7
    %v1191 = vsub.s32 0, %v1190
    %v1192 = vrot.slane %v1187, %v1191
    %v1194 = vadd.f32 %v701, %v1192
    %v1195 = vadd.f32 %v1184, %v1192
    %v1196 = vadd.f32 %v1194, %v118
    %v1197 = vadd.f32 %v1195, %v119
    %v1198 = vld [vmem:[%s9] sm:$0x1]
    %v1199 = vld [vmem:[%s10] sm:$0x1]
    %v1200 = vsel %vm76, %v1196, 0.0
    %1201 = vadd.xlane.f32.xlu0 %v1200
    %v1202 = vpop.xlane.xlu0 %1201
    %v1203 = vsel %vm76, %v1197, 0.0
    %1204 = vadd.xlane.f32.xlu0 %v1203
    %v1205 = vpop.xlane.xlu0 %1204
    %v1206 = vmul.f32 %v1202, %v83
    %v1207 = vmul.f32 %v1205, %v83
    %v1208 = vsub.f32 %v1196, %v1206
    %v1209 = vsub.f32 %v1197, %v1207
    %v1210 = vmul.f32 %v1208, %v1208
    %v1211 = vmul.f32 %v1209, %v1209
    %v1212 = vsel %vm76, %v1210, 0.0
    %1213 = vadd.xlane.f32.xlu0 %v1212
    %v1214 = vpop.xlane.xlu0 %1213
    %v1215 = vsel %vm76, %v1211, 0.0
    %1216 = vadd.xlane.f32.xlu0 %v1215
    %v1217 = vpop.xlane.xlu0 %1216
    %v1218 = vmul.f32 %v1214, %v83
    %v1219 = vmul.f32 %v1217, %v83
    %v1220 = vadd.f32 %v1218, 1e-12
    %v1221 = vadd.f32 %v1219, 1e-12
    %v1222 = vrsqrt.pop %v1220
    %v1223 = vrsqrt.pop %v1221
    %v1224 = vmul.f32 %v1208, %v1222
    %v1225 = vmul.f32 %v1209, %v1223
    %v1227 = vlaneseq
    %v1228 = vshrl.u32 %v1227, 7
    %v1229 = vsub.s32 0, %v1228
    %v1230 = vrot.slane %v1198, %v1229
    %v1232 = vmul.f32 %v1224, %v1230
    %v1233 = vmul.f32 %v1225, %v1230
    %v1235 = vlaneseq
    %v1236 = vshrl.u32 %v1235, 7
    %v1237 = vsub.s32 0, %v1236
    %v1238 = vrot.slane %v1199, %v1237
    %v1240 = vadd.f32 %v1232, %v1238
    %v1241 = vadd.f32 %v1233, %v1238
    %v1242 = vld [vmem:[%s11] sm:$0xff]
    %v1243 = vld [vmem:[%s11 + $0x8] sm:$0xff]
    %v1244 = vld [vmem:[%s11 + $0x10] sm:$0xff]
    %v1245 = vld [vmem:[%s11 + $0x18] sm:$0xff]
    %v1246 = vld [vmem:[%s12] sm:$0x1]
    %v1248 = vlaneseq
    %v1249 = vshrl.u32 %v1248, 7
    %v1250 = vsub.s32 0, %v1249
    %v1251 = vrot.slane %v1246, %v1250
    %v1254 = vsel %vm76, %v1240, 0
    %v1257 = vsel %vm76, %v1241, 0
    %1259 = vmatprep.subr.mxu0 0.0
    %1260 = vmatpush1.msra.mxu0 %v1242
    %1261 = vmatprep.subr.mxu0 0.0
    %1262 = vmatpush1.msra.mxu0 %v1243
    %1263 = vmatprep.subr.mxu0 0.0
    %1264 = vmatpush1.msra.mxu0 %v1244
    %1265 = vmatprep.subr.mxu0 0.0
    %1266 = vmatpush1.msra.mxu0 %v1245
    %1267 = vmatprep.subr.mxu0 0.0
    %1268 = vmatpush1.msra.mxu0 0.0
    %1269 = vmatprep.subr.mxu0 0.0
    %1270 = vmatpush1.msra.mxu0 0.0
    %1271 = vmatprep.subr.mxu0 0.0
    %1272 = vmatpush1.msra.mxu0 0.0
    %1273 = vmatprep.subr.mxu0 0.0
    %1274 = vmatpush1.msra.mxu0 0.0
    %1275 = vmatprep.subr.mxu0 0.0
    %1276 = vmatpush1.msra.mxu0 0.0
    %1277 = vmatprep.subr.mxu0 0.0
    %1278 = vmatpush1.msra.mxu0 0.0
    %1279 = vmatprep.subr.mxu0 0.0
    %1280 = vmatpush1.msra.mxu0 0.0
    %1281 = vmatprep.subr.mxu0 0.0
    %1282 = vmatpush1.msra.mxu0 0.0
    %1283 = vmatprep.subr.mxu0 0.0
    %1284 = vmatpush1.msra.mxu0 0.0
    %1285 = vmatprep.subr.mxu0 0.0
    %1286 = vmatpush1.msra.mxu0 0.0
    %1287 = vmatprep.subr.mxu0 0.0
    %1288 = vmatpush1.msra.mxu0 0.0
    %1289 = vmatprep.subr.mxu0 0.0
    %1290 = vmatpush1.msra.mxu0 0.0
    %1291 = vmatprep.subr.mxu0 0.0
    %1292 = vmatpush1.msra.mxu0 0.0
    %1293 = vmatprep.subr.mxu0 0.0
    %1294 = vmatpush1.msra.mxu0 0.0
    %1295 = vmatprep.subr.mxu0 0.0
    %1296 = vmatpush1.msra.mxu0 0.0
    %1297 = vmatprep.subr.mxu0 0.0
    %1298 = vmatpush1.msra.mxu0 0.0
    %1299 = vmatprep.subr.mxu0 0.0
    %1300 = vmatpush1.msra.mxu0 0.0
    %1301 = vmatprep.subr.mxu0 0.0
    %1302 = vmatpush1.msra.mxu0 0.0
    %1303 = vmatprep.subr.mxu0 0.0
    %1304 = vmatpush1.msra.mxu0 0.0
    %1305 = vmatprep.subr.mxu0 0.0
    %1306 = vmatpush1.msra.mxu0 0.0
    %1307 = vmatprep.subr.mxu0 0.0
    %1308 = vmatpush1.msra.mxu0 0.0
    %1309 = vmatprep.subr.mxu0 0.0
    %1310 = vmatpush1.msra.mxu0 0.0
    %1311 = vmatprep.subr.mxu0 0.0
    %1312 = vmatpush1.msra.mxu0 0.0
    %1313 = vmatprep.subr.mxu0 0.0
    %1314 = vmatpush1.msra.mxu0 0.0
    %1315 = vmatprep.subr.mxu0 0.0
    %1316 = vmatpush1.msra.mxu0 0.0
    %1317 = vmatprep.subr.mxu0 0.0
    %1318 = vmatpush1.msra.mxu0 0.0
    %1319 = vmatprep.subr.mxu0 0.0
    %1320 = vmatpush1.msra.mxu0 0.0
    %1321 = vmatprep.subr.mxu0 0.0
    %1322 = vmatpush1.msra.mxu0 0.0
    %1323 = vmatprep.mubr.f32.mxu0 0.0
    %1324 = vmatmul.mubr.f32.gmra.mrb[0].mxu0 %v1254
    %v1325 = vpop.f32.mrb[0].mxu0
    %v1326 = vadd.f32 %v1251, %v1325
    %v1327 = vpop.f32.mrb[0].mxu0
    %1328 = vmatprep.mubr.f32.mxu0 0.0
    %1329 = vmatmul.mubr.f32.gmra.mrb[0].mxu0 %v1257
    %v1330 = vpop.f32.mrb[0].mxu0
    %v1331 = vadd.f32 %v1251, %v1330
    %v1332 = vpop.f32.mrb[0].mxu0
    %1333 = vdwg.mxu0
    %v1334 = vmul.f32 %v1326, %v1326
    %v1335 = vmul.f32 %v1331, %v1331
    %v1336 = vmul.f32 %v1326, %v1334
    %v1337 = vmul.f32 %v1331, %v1335
    %v1338 = vmul.f32 %v1336, 0.044715
    %v1339 = vmul.f32 %v1337, 0.044715
    %v1340 = vadd.f32 %v1326, %v1338
    %v1341 = vadd.f32 %v1331, %v1339
    %v1342 = vmul.f32 %v1340, 0.7978846
    %v1343 = vmul.f32 %v1341, 0.7978846
    %v1344 = vtanh.pop %v1342
    %v1345 = vtanh.pop %v1343
    %v1346 = vadd.f32 %v1344, 1.0
    %v1347 = vadd.f32 %v1345, 1.0
    %v1348 = vmul.f32 %v1346, 0.5
    %v1349 = vmul.f32 %v1347, 0.5
    %v1350 = vmul.f32 %v1326, %v1348
    %v1351 = vmul.f32 %v1331, %v1349
    %v1352 = vld [vmem:[%s13] sm:$0xff]
    %v1353 = vld [vmem:[%s13 + $0x8] sm:$0xff]
    %v1354 = vld [vmem:[%s13 + $0x10] sm:$0xff]
    %v1355 = vld [vmem:[%s13 + $0x18] sm:$0xff]
    %v1356 = vld [vmem:[%s13 + $0x20] sm:$0xff]
    %v1357 = vld [vmem:[%s13 + $0x28] sm:$0xff]
    %v1358 = vld [vmem:[%s13 + $0x30] sm:$0xff]
    %v1359 = vld [vmem:[%s13 + $0x38] sm:$0xff]
    %v1360 = vld [vmem:[%s14] sm:$0x1]
    %v1362 = vlaneseq
    %v1363 = vshrl.u32 %v1362, 7
    %v1364 = vsub.s32 0, %v1363
    %v1365 = vrot.slane %v1360, %v1364
    %vm1367 = vcmask 523264
    %v1369 = vsel %vm1367, %v1350, 0
    %v1372 = vsel %vm1367, %v1351, 0
    %1374 = vmatprep.subr.mxu0 0.0
    %1375 = vmatpush1.msra.mxu0 %v1352
    %1376 = vmatprep.subr.mxu0 0.0
    %1377 = vmatpush1.msra.mxu0 %v1353
    %1378 = vmatprep.subr.mxu0 0.0
    %1379 = vmatpush1.msra.mxu0 %v1354
    %1380 = vmatprep.subr.mxu0 0.0
    %1381 = vmatpush1.msra.mxu0 %v1355
    %1382 = vmatprep.subr.mxu0 0.0
    %1383 = vmatpush1.msra.mxu0 %v1356
    %1384 = vmatprep.subr.mxu0 0.0
    %1385 = vmatpush1.msra.mxu0 %v1357
    %1386 = vmatprep.subr.mxu0 0.0
    %1387 = vmatpush1.msra.mxu0 %v1358
    %1388 = vmatprep.subr.mxu0 0.0
    %1389 = vmatpush1.msra.mxu0 %v1359
    %1390 = vmatprep.subr.mxu0 0.0
    %1391 = vmatpush1.msra.mxu0 0.0
    %1392 = vmatprep.subr.mxu0 0.0
    %1393 = vmatpush1.msra.mxu0 0.0
    %1394 = vmatprep.subr.mxu0 0.0
    %1395 = vmatpush1.msra.mxu0 0.0
    %1396 = vmatprep.subr.mxu0 0.0
    %1397 = vmatpush1.msra.mxu0 0.0
    %1398 = vmatprep.subr.mxu0 0.0
    %1399 = vmatpush1.msra.mxu0 0.0
    %1400 = vmatprep.subr.mxu0 0.0
    %1401 = vmatpush1.msra.mxu0 0.0
    %1402 = vmatprep.subr.mxu0 0.0
    %1403 = vmatpush1.msra.mxu0 0.0
    %1404 = vmatprep.subr.mxu0 0.0
    %1405 = vmatpush1.msra.mxu0 0.0
    %1406 = vmatprep.subr.mxu0 0.0
    %1407 = vmatpush1.msra.mxu0 0.0
    %1408 = vmatprep.subr.mxu0 0.0
    %1409 = vmatpush1.msra.mxu0 0.0
    %1410 = vmatprep.subr.mxu0 0.0
    %1411 = vmatpush1.msra.mxu0 0.0
    %1412 = vmatprep.subr.mxu0 0.0
    %1413 = vmatpush1.msra.mxu0 0.0
    %1414 = vmatprep.subr.mxu0 0.0
    %1415 = vmatpush1.msra.mxu0 0.0
    %1416 = vmatprep.subr.mxu0 0.0
    %1417 = vmatpush1.msra.mxu0 0.0
    %1418 = vmatprep.subr.mxu0 0.0
    %1419 = vmatpush1.msra.mxu0 0.0
    %1420 = vmatprep.subr.mxu0 0.0
    %1421 = vmatpush1.msra.mxu0 0.0
    %1422 = vmatprep.subr.mxu0 0.0
    %1423 = vmatpush1.msra.mxu0 0.0
    %1424 = vmatprep.subr.mxu0 0.0
    %1425 = vmatpush1.msra.mxu0 0.0
    %1426 = vmatprep.subr.mxu0 0.0
    %1427 = vmatpush1.msra.mxu0 0.0
    %1428 = vmatprep.subr.mxu0 0.0
    %1429 = vmatpush1.msra.mxu0 0.0
    %1430 = vmatprep.subr.mxu0 0.0
    %1431 = vmatpush1.msra.mxu0 0.0
    %1432 = vmatprep.subr.mxu0 0.0
    %1433 = vmatpush1.msra.mxu0 0.0
    %1434 = vmatprep.subr.mxu0 0.0
    %1435 = vmatpush1.msra.mxu0 0.0
    %1436 = vmatprep.subr.mxu0 0.0
    %1437 = vmatpush1.msra.mxu0 0.0
    %1438 = vmatprep.mubr.f32.mxu0 0.0
    %1439 = vmatmul.mubr.f32.gmra.mrb[0].mxu0 %v1369
    %v1440 = vpop.f32.mrb[0].mxu0
    %v1441 = vadd.f32 %v1365, %v1440
    %v1442 = vpop.f32.mrb[0].mxu0
    %1443 = vmatprep.mubr.f32.mxu0 0.0
    %1444 = vmatmul.mubr.f32.gmra.mrb[0].mxu0 %v1372
    %v1445 = vpop.f32.mrb[0].mxu0
    %v1446 = vadd.f32 %v1365, %v1445
    %v1447 = vpop.f32.mrb[0].mxu0
    %1448 = vdwg.mxu0
    %v1449 = vadd.f32 %v1441, %v1240
    %v1450 = vadd.f32 %v1446, %v1241
    %v1451 = vld [vmem:[%s15] sm:$0x1]
    %v1452 = vld [vmem:[%s16] sm:$0x1]
    %v1453 = vsel %vm76, %v1449, 0.0
    %1454 = vadd.xlane.f32.xlu0 %v1453
    %v1455 = vpop.xlane.xlu0 %1454
    %v1456 = vsel %vm76, %v1450, 0.0
    %1457 = vadd.xlane.f32.xlu0 %v1456
    %v1458 = vpop.xlane.xlu0 %1457
    %v1459 = vmul.f32 %v1455, %v83
    %v1460 = vmul.f32 %v1458, %v83
    %v1461 = vsub.f32 %v1449, %v1459
    %v1462 = vsub.f32 %v1450, %v1460
    %v1463 = vmul.f32 %v1461, %v1461
    %v1464 = vmul.f32 %v1462, %v1462
    %v1465 = vsel %vm76, %v1463, 0.0
    %1466 = vadd.xlane.f32.xlu0 %v1465
    %v1467 = vpop.xlane.xlu0 %1466
    %v1468 = vsel %vm76, %v1464, 0.0
    %1469 = vadd.xlane.f32.xlu0 %v1468
    %v1470 = vpop.xlane.xlu0 %1469
    %v1471 = vmul.f32 %v1467, %v83
    %v1472 = vmul.f32 %v1470, %v83
    %v1473 = vadd.f32 %v1471, 1e-12
    %v1474 = vadd.f32 %v1472, 1e-12
    %v1475 = vrsqrt.pop %v1473
    %v1476 = vrsqrt.pop %v1474
    %v1477 = vmul.f32 %v1461, %v1475
    %v1478 = vmul.f32 %v1462, %v1476
    %v1480 = vlaneseq
    %v1481 = vshrl.u32 %v1480, 7
    %v1482 = vsub.s32 0, %v1481
    %v1483 = vrot.slane %v1451, %v1482
    %v1485 = vmul.f32 %v1477, %v1483
    %v1486 = vmul.f32 %v1478, %v1483
    %v1488 = vlaneseq
    %v1489 = vshrl.u32 %v1488, 7
    %v1490 = vsub.s32 0, %v1489
    %v1491 = vrot.slane %v1452, %v1490
    %v1493 = vadd.f32 %v1485, %v1491
    %v1494 = vadd.f32 %v1486, %v1491
    %s1495 = scalar_lea.vmem %s5, 32
    %v1496 = vld [vmem:[%s1495] sm:$0xff]
    %v1497 = vld [vmem:[%s1495 + $0x8] sm:$0xff]
    %v1498 = vld [vmem:[%s1495 + $0x10] sm:$0xff]
    %v1499 = vld [vmem:[%s1495 + $0x18] sm:$0xff]
    %s1500 = scalar_lea.vmem %s6, 1
    %v1501 = vld [vmem:[%s1500] sm:$0x1]
    %v1503 = vlaneseq
    %v1504 = vshrl.u32 %v1503, 7
    %v1505 = vsub.s32 0, %v1504
    %v1506 = vrot.slane %v1501, %v1505
    %v1509 = vsel %vm76, %v1493, 0
    %v1512 = vsel %vm76, %v1494, 0
    %1514 = vmatprep.subr.mxu0 0.0
    %1515 = vmatpush1.msra.mxu0 %v1496
    %1516 = vmatprep.subr.mxu0 0.0
    %1517 = vmatpush1.msra.mxu0 %v1497
    %1518 = vmatprep.subr.mxu0 0.0
    %1519 = vmatpush1.msra.mxu0 %v1498
    %1520 = vmatprep.subr.mxu0 0.0
    %1521 = vmatpush1.msra.mxu0 %v1499
    %1522 = vmatprep.subr.mxu0 0.0
    %1523 = vmatpush1.msra.mxu0 0.0
    %1524 = vmatprep.subr.mxu0 0.0
    %1525 = vmatpush1.msra.mxu0 0.0
    %1526 = vmatprep.subr.mxu0 0.0
    %1527 = vmatpush1.msra.mxu0 0.0
    %1528 = vmatprep.subr.mxu0 0.0
    %1529 = vmatpush1.msra.mxu0 0.0
    %1530 = vmatprep.subr.mxu0 0.0
    %1531 = vmatpush1.msra.mxu0 0.0
    %1532 = vmatprep.subr.mxu0 0.0
    %1533 = vmatpush1.msra.mxu0 0.0
    %1534 = vmatprep.subr.mxu0 0.0
    %1535 = vmatpush1.msra.mxu0 0.0
    %1536 = vmatprep.subr.mxu0 0.0
    %1537 = vmatpush1.msra.mxu0 0.0
    %1538 = vmatprep.subr.mxu0 0.0
    %1539 = vmatpush1.msra.mxu0 0.0
    %1540 = vmatprep.subr.mxu0 0.0
    %1541 = vmatpush1.msra.mxu0 0.0
    %1542 = vmatprep.subr.mxu0 0.0
    %1543 = vmatpush1.msra.mxu0 0.0
    %1544 = vmatprep.subr.mxu0 0.0
    %1545 = vmatpush1.msra.mxu0 0.0
    %1546 = vmatprep.subr.mxu0 0.0
    %1547 = vmatpush1.msra.mxu0 0.0
    %1548 = vmatprep.subr.mxu0 0.0
    %1549 = vmatpush1.msra.mxu0 0.0
    %1550 = vmatprep.subr.mxu0 0.0
    %1551 = vmatpush1.msra.mxu0 0.0
    %1552 = vmatprep.subr.mxu0 0.0
    %1553 = vmatpush1.msra.mxu0 0.0
    %1554 = vmatprep.subr.mxu0 0.0
    %1555 = vmatpush1.msra.mxu0 0.0
    %1556 = vmatprep.subr.mxu0 0.0
    %1557 = vmatpush1.msra.mxu0 0.0
    %1558 = vmatprep.subr.mxu0 0.0
    %1559 = vmatpush1.msra.mxu0 0.0
    %1560 = vmatprep.subr.mxu0 0.0
    %1561 = vmatpush1.msra.mxu0 0.0
    %1562 = vmatprep.subr.mxu0 0.0
    %1563 = vmatpush1.msra.mxu0 0.0
    %1564 = vmatprep.subr.mxu0 0.0
    %1565 = vmatpush1.msra.mxu0 0.0
    %1566 = vmatprep.subr.mxu0 0.0
    %1567 = vmatpush1.msra.mxu0 0.0
    %1568 = vmatprep.subr.mxu0 0.0
    %1569 = vmatpush1.msra.mxu0 0.0
    %1570 = vmatprep.subr.mxu0 0.0
    %1571 = vmatpush1.msra.mxu0 0.0
    %1572 = vmatprep.subr.mxu0 0.0
    %1573 = vmatpush1.msra.mxu0 0.0
    %1574 = vmatprep.subr.mxu0 0.0
    %1575 = vmatpush1.msra.mxu0 0.0
    %1576 = vmatprep.subr.mxu0 0.0
    %1577 = vmatpush1.msra.mxu0 0.0
    %1578 = vmatprep.mubr.f32.mxu0 0.0
    %1579 = vmatmul.mubr.f32.gmra.mrb[0].mxu0 %v1509
    %v1580 = vpop.f32.mrb[0].mxu0
    %v1581 = vadd.f32 %v1506, %v1580
    %v1582 = vpop.f32.mrb[0].mxu0
    %1583 = vmatprep.mubr.f32.mxu0 0.0
    %1584 = vmatmul.mubr.f32.gmra.mrb[0].mxu0 %v1512
    %v1585 = vpop.f32.mrb[0].mxu0
    %v1586 = vadd.f32 %v1506, %v1585
    %v1587 = vpop.f32.mrb[0].mxu0
    %1588 = vdwg.mxu0
    %s1589 = scalar_lea.vmem %s7, 32
    %v1590 = vld [vmem:[%s1589] sm:$0xff]
    %v1591 = vld [vmem:[%s1589 + $0x8] sm:$0xff]
    %v1592 = vld [vmem:[%s1589 + $0x10] sm:$0xff]
    %v1593 = vld [vmem:[%s1589 + $0x18] sm:$0xff]
    %1595 = vrot.lane.b32.xlu0 %v1581, 96
    %v1596 = vpop.permute.xlu0 %1595
    %v1597 = vsel %vm222, %v1581, 0
    %v1599 = vsel %vm222, %v1596, 0
    %1601 = vmatprep.subr.mxu0 0.0
    %1602 = vmatpush1.xpose.msra.mxu0 %v1599
    %1603 = vmatprep.subr.mxu0 0.0
    %1604 = vmatpush1.xpose.msra.mxu0 0.0
    %1605 = vmatprep.subr.mxu0 0.0
    %1606 = vmatpush1.xpose.msra.mxu0 0.0
    %1607 = vmatprep.subr.mxu0 0.0
    %1608 = vmatpush1.xpose.msra.mxu0 0.0
    %1609 = vmatprep.subr.mxu0 0.0
    %1610 = vmatpush1.xpose.msra.mxu0 0.0
    %1611 = vmatprep.subr.mxu0 0.0
    %1612 = vmatpush1.xpose.msra.mxu0 0.0
    %1613 = vmatprep.subr.mxu0 0.0
    %1614 = vmatpush1.xpose.msra.mxu0 0.0
    %1615 = vmatprep.subr.mxu0 0.0
    %1616 = vmatpush1.xpose.msra.mxu0 0.0
    %1617 = vmatprep.subr.mxu0 0.0
    %1618 = vmatpush1.xpose.msra.mxu0 0.0
    %1619 = vmatprep.subr.mxu0 0.0
    %1620 = vmatpush1.xpose.msra.mxu0 0.0
    %1621 = vmatprep.subr.mxu0 0.0
    %1622 = vmatpush1.xpose.msra.mxu0 0.0
    %1623 = vmatprep.subr.mxu0 0.0
    %1624 = vmatpush1.xpose.msra.mxu0 0.0
    %1625 = vmatprep.subr.mxu0 0.0
    %1626 = vmatpush1.xpose.msra.mxu0 0.0
    %1627 = vmatprep.subr.mxu0 0.0
    %1628 = vmatpush1.xpose.msra.mxu0 0.0
    %1629 = vmatprep.subr.mxu0 0.0
    %1630 = vmatpush1.xpose.msra.mxu0 0.0
    %1631 = vmatprep.subr.mxu0 0.0
    %1632 = vmatpush1.xpose.msra.mxu0 0.0
    %1633 = vmatprep.subr.mxu0 0.0
    %1634 = vmatpush1.xpose.msra.mxu0 0.0
    %1635 = vmatprep.subr.mxu0 0.0
    %1636 = vmatpush1.xpose.msra.mxu0 0.0
    %1637 = vmatprep.subr.mxu0 0.0
    %1638 = vmatpush1.xpose.msra.mxu0 0.0
    %1639 = vmatprep.subr.mxu0 0.0
    %1640 = vmatpush1.xpose.msra.mxu0 0.0
    %1641 = vmatprep.subr.mxu0 0.0
    %1642 = vmatpush1.xpose.msra.mxu0 0.0
    %1643 = vmatprep.subr.mxu0 0.0
    %1644 = vmatpush1.xpose.msra.mxu0 0.0
    %1645 = vmatprep.subr.mxu0 0.0
    %1646 = vmatpush1.xpose.msra.mxu0 0.0
    %1647 = vmatprep.subr.mxu0 0.0
    %1648 = vmatpush1.xpose.msra.mxu0 0.0
    %1649 = vmatprep.subr.mxu0 0.0
    %1650 = vmatpush1.xpose.msra.mxu0 0.0
    %1651 = vmatprep.subr.mxu0 0.0
    %1652 = vmatpush1.xpose.msra.mxu0 0.0
    %1653 = vmatprep.subr.mxu0 0.0
    %1654 = vmatpush1.xpose.msra.mxu0 0.0
    %1655 = vmatprep.subr.mxu0 0.0
    %1656 = vmatpush1.xpose.msra.mxu0 0.0
    %1657 = vmatprep.subr.mxu0 0.0
    %1658 = vmatpush1.xpose.msra.mxu0 0.0
    %1659 = vmatprep.subr.mxu0 0.0
    %1660 = vmatpush1.xpose.msra.mxu0 0.0
    %1661 = vmatprep.subr.mxu0 0.0
    %1662 = vmatpush1.xpose.msra.mxu0 0.0
    %1663 = vmatprep.subr.mxu0 0.0
    %1664 = vmatpush1.xpose.msra.mxu0 0.0
    %1665 = vmatprep.mubr.f32.mxu0 0.0
    %1666 = vmatmul.mubr.f32.gmra.mrb[0].mxu0 %v1597
    %v1667 = vpop.f32.mrb[0].mxu0
    %v1668 = vadd.f32 0.0, %v1667
    %v1669 = vpop.f32.mrb[0].mxu0
    %1670 = vdwg.mxu0
    %v1671 = vmul.f32 %v1668, 0.25
    %v1672 = vadd.f32 %v1671, %v301
    %v1673 = vsel %vm303, %v1672, -inf
    %1674 = vmax.xlane.f32.xlu0 %v1673
    %v1675 = vpop.xlane.xlu0 %1674
    %v1676 = vsub.f32 %v1672, %v1675
    %v1677 = vmul.f32 %v1676, 1.442695
    %v1678 = vpow.pop %v1677
    %v1679 = vsel %vm303, %v1678, 0.0
    %1680 = vadd.xlane.f32.xlu0 %v1679
    %v1681 = vpop.xlane.xlu0 %1680
    %v1682 = vrcp.pop %v1681
    %v1683 = vmul.f32 %v1678, %v1682
    %1684 = vrot.lane.b32.xlu0 %v1581, 64
    %v1685 = vpop.permute.xlu0 %1684
    %v1688 = vsel %vm303, %v1683, 0
    %1690 = vmatprep.subr.mxu0 0.0
    %1691 = vmatpush1.msra.mxu0 %v1685
    %1692 = vmatprep.subr.mxu0 0.0
    %1693 = vmatpush1.msra.mxu0 0.0
    %1694 = vmatprep.subr.mxu0 0.0
    %1695 = vmatpush1.msra.mxu0 0.0
    %1696 = vmatprep.subr.mxu0 0.0
    %1697 = vmatpush1.msra.mxu0 0.0
    %1698 = vmatprep.subr.mxu0 0.0
    %1699 = vmatpush1.msra.mxu0 0.0
    %1700 = vmatprep.subr.mxu0 0.0
    %1701 = vmatpush1.msra.mxu0 0.0
    %1702 = vmatprep.subr.mxu0 0.0
    %1703 = vmatpush1.msra.mxu0 0.0
    %1704 = vmatprep.subr.mxu0 0.0
    %1705 = vmatpush1.msra.mxu0 0.0
    %1706 = vmatprep.subr.mxu0 0.0
    %1707 = vmatpush1.msra.mxu0 0.0
    %1708 = vmatprep.subr.mxu0 0.0
    %1709 = vmatpush1.msra.mxu0 0.0
    %1710 = vmatprep.subr.mxu0 0.0
    %1711 = vmatpush1.msra.mxu0 0.0
    %1712 = vmatprep.subr.mxu0 0.0
    %1713 = vmatpush1.msra.mxu0 0.0
    %1714 = vmatprep.subr.mxu0 0.0
    %1715 = vmatpush1.msra.mxu0 0.0
    %1716 = vmatprep.subr.mxu0 0.0
    %1717 = vmatpush1.msra.mxu0 0.0
    %1718 = vmatprep.subr.mxu0 0.0
    %1719 = vmatpush1.msra.mxu0 0.0
    %1720 = vmatprep.subr.mxu0 0.0
    %1721 = vmatpush1.msra.mxu0 0.0
    %1722 = vmatprep.subr.mxu0 0.0
    %1723 = vmatpush1.msra.mxu0 0.0
    %1724 = vmatprep.subr.mxu0 0.0
    %1725 = vmatpush1.msra.mxu0 0.0
    %1726 = vmatprep.subr.mxu0 0.0
    %1727 = vmatpush1.msra.mxu0 0.0
    %1728 = vmatprep.subr.mxu0 0.0
    %1729 = vmatpush1.msra.mxu0 0.0
    %1730 = vmatprep.subr.mxu0 0.0
    %1731 = vmatpush1.msra.mxu0 0.0
    %1732 = vmatprep.subr.mxu0 0.0
    %1733 = vmatpush1.msra.mxu0 0.0
    %1734 = vmatprep.subr.mxu0 0.0
    %1735 = vmatpush1.msra.mxu0 0.0
    %1736 = vmatprep.subr.mxu0 0.0
    %1737 = vmatpush1.msra.mxu0 0.0
    %1738 = vmatprep.subr.mxu0 0.0
    %1739 = vmatpush1.msra.mxu0 0.0
    %1740 = vmatprep.subr.mxu0 0.0
    %1741 = vmatpush1.msra.mxu0 0.0
    %1742 = vmatprep.subr.mxu0 0.0
    %1743 = vmatpush1.msra.mxu0 0.0
    %1744 = vmatprep.subr.mxu0 0.0
    %1745 = vmatpush1.msra.mxu0 0.0
    %1746 = vmatprep.subr.mxu0 0.0
    %1747 = vmatpush1.msra.mxu0 0.0
    %1748 = vmatprep.subr.mxu0 0.0
    %1749 = vmatpush1.msra.mxu0 0.0
    %1750 = vmatprep.subr.mxu0 0.0
    %1751 = vmatpush1.msra.mxu0 0.0
    %1752 = vmatprep.subr.mxu0 0.0
    %1753 = vmatpush1.msra.mxu0 0.0
    %1754 = vmatprep.mubr.f32.mxu0 0.0
    %1755 = vmatmul.mubr.f32.gmra.mrb[0].mxu0 %v1688
    %v1756 = vpop.f32.mrb[0].mxu0
    %v1757 = vadd.f32 0.0, %v1756
    %v1758 = vpop.f32.mrb[0].mxu0
    %1759 = vdwg.mxu0
    %1760 = vrot.lane.b32.xlu0 %v1581, 112
    %v1761 = vpop.permute.xlu0 %1760
    %1762 = vrot.lane.b32.xlu0 %v1581, 80
    %v1763 = vpop.permute.xlu0 %1762
    %v1764 = vsel %vm222, %v1761, 0
    %v1766 = vsel %vm222, %v1763, 0
    %1768 = vmatprep.subr.mxu0 0.0
    %1769 = vmatpush1.xpose.msra.mxu0 %v1766
    %1770 = vmatprep.subr.mxu0 0.0
    %1771 = vmatpush1.xpose.msra.mxu0 0.0
    %1772 = vmatprep.subr.mxu0 0.0
    %1773 = vmatpush1.xpose.msra.mxu0 0.0
    %1774 = vmatprep.subr.mxu0 0.0
    %1775 = vmatpush1.xpose.msra.mxu0 0.0
    %1776 = vmatprep.subr.mxu0 0.0
    %1777 = vmatpush1.xpose.msra.mxu0 0.0
    %1778 = vmatprep.subr.mxu0 0.0
    %1779 = vmatpush1.xpose.msra.mxu0 0.0
    %1780 = vmatprep.subr.mxu0 0.0
    %1781 = vmatpush1.xpose.msra.mxu0 0.0
    %1782 = vmatprep.subr.mxu0 0.0
    %1783 = vmatpush1.xpose.msra.mxu0 0.0
    %1784 = vmatprep.subr.mxu0 0.0
    %1785 = vmatpush1.xpose.msra.mxu0 0.0
    %1786 = vmatprep.subr.mxu0 0.0
    %1787 = vmatpush1.xpose.msra.mxu0 0.0
    %1788 = vmatprep.subr.mxu0 0.0
    %1789 = vmatpush1.xpose.msra.mxu0 0.0
    %1790 = vmatprep.subr.mxu0 0.0
    %1791 = vmatpush1.xpose.msra.mxu0 0.0
    %1792 = vmatprep.subr.mxu0 0.0
    %1793 = vmatpush1.xpose.msra.mxu0 0.0
    %1794 = vmatprep.subr.mxu0 0.0
    %1795 = vmatpush1.xpose.msra.mxu0 0.0
    %1796 = vmatprep.subr.mxu0 0.0
    %1797 = vmatpush1.xpose.msra.mxu0 0.0
    %1798 = vmatprep.subr.mxu0 0.0
    %1799 = vmatpush1.xpose.msra.mxu0 0.0
    %1800 = vmatprep.subr.mxu0 0.0
    %1801 = vmatpush1.xpose.msra.mxu0 0.0
    %1802 = vmatprep.subr.mxu0 0.0
    %1803 = vmatpush1.xpose.msra.mxu0 0.0
    %1804 = vmatprep.subr.mxu0 0.0
    %1805 = vmatpush1.xpose.msra.mxu0 0.0
    %1806 = vmatprep.subr.mxu0 0.0
    %1807 = vmatpush1.xpose.msra.mxu0 0.0
    %1808 = vmatprep.subr.mxu0 0.0
    %1809 = vmatpush1.xpose.msra.mxu0 0.0
    %1810 = vmatprep.subr.mxu0 0.0
    %1811 = vmatpush1.xpose.msra.mxu0 0.0
    %1812 = vmatprep.subr.mxu0 0.0
    %1813 = vmatpush1.xpose.msra.mxu0 0.0
    %1814 = vmatprep.subr.mxu0 0.0
    %1815 = vmatpush1.xpose.msra.mxu0 0.0
    %1816 = vmatprep.subr.mxu0 0.0
    %1817 = vmatpush1.xpose.msra.mxu0 0.0
    %1818 = vmatprep.subr.mxu0 0.0
    %1819 = vmatpush1.xpose.msra.mxu0 0.0
    %1820 = vmatprep.subr.mxu0 0.0
    %1821 = vmatpush1.xpose.msra.mxu0 0.0
    %1822 = vmatprep.subr.mxu0 0.0
    %1823 = vmatpush1.xpose.msra.mxu0 0.0
    %1824 = vmatprep.subr.mxu0 0.0
    %1825 = vmatpush1.xpose.msra.mxu0 0.0
    %1826 = vmatprep.subr.mxu0 0.0
    %1827 = vmatpush1.xpose.msra.mxu0 0.0
    %1828 = vmatprep.subr.mxu0 0.0
    %1829 = vmatpush1.xpose.msra.mxu0 0.0
    %1830 = vmatprep.subr.mxu0 0.0
    %1831 = vmatpush1.xpose.msra.mxu0 0.0
    %1832 = vmatprep.mubr.f32.mxu0 0.0
    %1833 = vmatmul.mubr.f32.gmra.mrb[0].mxu0 %v1764
    %v1834 = vpop.f32.mrb[0].mxu0
    %v1835 = vadd.f32 0.0, %v1834
    %v1836 = vpop.f32.mrb[0].mxu0
    %1837 = vdwg.mxu0
    %v1838 = vmul.f32 %v1835, 0.25
    %v1839 = vadd.f32 %v1838, %v301
    %v1840 = vsel %vm303, %v1839, -inf
    %1841 = vmax.xlane.f32.xlu0 %v1840
    %v1842 = vpop.xlane.xlu0 %1841
    %v1843 = vsub.f32 %v1839, %v1842
    %v1844 = vmul.f32 %v1843, 1.442695
    %v1845 = vpow.pop %v1844
    %v1846 = vsel %vm303, %v1845, 0.0
    %1847 = vadd.xlane.f32.xlu0 %v1846
    %v1848 = vpop.xlane.xlu0 %1847
    %v1849 = vrcp.pop %v1848
    %v1850 = vmul.f32 %v1845, %v1849
    %1851 = vrot.lane.b32.xlu0 %v1581, 48
    %v1852 = vpop.permute.xlu0 %1851
    %v1855 = vsel %vm303, %v1850, 0
    %1857 = vmatprep.subr.mxu0 0.0
    %1858 = vmatpush1.msra.mxu0 %v1852
    %1859 = vmatprep.subr.mxu0 0.0
    %1860 = vmatpush1.msra.mxu0 0.0
    %1861 = vmatprep.subr.mxu0 0.0
    %1862 = vmatpush1.msra.mxu0 0.0
    %1863 = vmatprep.subr.mxu0 0.0
    %1864 = vmatpush1.msra.mxu0 0.0
    %1865 = vmatprep.subr.mxu0 0.0
    %1866 = vmatpush1.msra.mxu0 0.0
    %1867 = vmatprep.subr.mxu0 0.0
    %1868 = vmatpush1.msra.mxu0 0.0
    %1869 = vmatprep.subr.mxu0 0.0
    %1870 = vmatpush1.msra.mxu0 0.0
    %1871 = vmatprep.subr.mxu0 0.0
    %1872 = vmatpush1.msra.mxu0 0.0
    %1873 = vmatprep.subr.mxu0 0.0
    %1874 = vmatpush1.msra.mxu0 0.0
    %1875 = vmatprep.subr.mxu0 0.0
    %1876 = vmatpush1.msra.mxu0 0.0
    %1877 = vmatprep.subr.mxu0 0.0
    %1878 = vmatpush1.msra.mxu0 0.0
    %1879 = vmatprep.subr.mxu0 0.0
    %1880 = vmatpush1.msra.mxu0 0.0
    %1881 = vmatprep.subr.mxu0 0.0
    %1882 = vmatpush1.msra.mxu0 0.0
    %1883 = vmatprep.subr.mxu0 0.0
    %1884 = vmatpush1.msra.mxu0 0.0
    %1885 = vmatprep.subr.mxu0 0.0
    %1886 = vmatpush1.msra.mxu0 0.0
    %1887 = vmatprep.subr.mxu0 0.0
    %1888 = vmatpush1.msra.mxu0 0.0
    %1889 = vmatprep.subr.mxu0 0.0
    %1890 = vmatpush1.msra.mxu0 0.0
    %1891 = vmatprep.subr.mxu0 0.0
    %1892 = vmatpush1.msra.mxu0 0.0
    %1893 = vmatprep.subr.mxu0 0.0
    %1894 = vmatpush1.msra.mxu0 0.0
    %1895 = vmatprep.subr.mxu0 0.0
    %1896 = vmatpush1.msra.mxu0 0.0
    %1897 = vmatprep.subr.mxu0 0.0
    %1898 = vmatpush1.msra.mxu0 0.0
    %1899 = vmatprep.subr.mxu0 0.0
    %1900 = vmatpush1.msra.mxu0 0.0
    %1901 = vmatprep.subr.mxu0 0.0
    %1902 = vmatpush1.msra.mxu0 0.0
    %1903 = vmatprep.subr.mxu0 0.0
    %1904 = vmatpush1.msra.mxu0 0.0
    %1905 = vmatprep.subr.mxu0 0.0
    %1906 = vmatpush1.msra.mxu0 0.0
    %1907 = vmatprep.subr.mxu0 0.0
    %1908 = vmatpush1.msra.mxu0 0.0
    %1909 = vmatprep.subr.mxu0 0.0
    %1910 = vmatpush1.msra.mxu0 0.0
    %1911 = vmatprep.subr.mxu0 0.0
    %1912 = vmatpush1.msra.mxu0 0.0
    %1913 = vmatprep.subr.mxu0 0.0
    %1914 = vmatpush1.msra.mxu0 0.0
    %1915 = vmatprep.subr.mxu0 0.0
    %1916 = vmatpush1.msra.mxu0 0.0
    %1917 = vmatprep.subr.mxu0 0.0
    %1918 = vmatpush1.msra.mxu0 0.0
    %1919 = vmatprep.subr.mxu0 0.0
    %1920 = vmatpush1.msra.mxu0 0.0
    %1921 = vmatprep.mubr.f32.mxu0 0.0
    %1922 = vmatmul.mubr.f32.gmra.mrb[0].mxu0 %v1855
    %v1923 = vpop.f32.mrb[0].mxu0
    %v1924 = vadd.f32 0.0, %v1923
    %v1925 = vpop.f32.mrb[0].mxu0
    %1926 = vdwg.mxu0
    %v1928 = vsel %vm222, %v1924, 0
    %1930 = vmatprep.subr.mxu0 0.0
    %1931 = vmatpush1.msra.mxu0 %v1592
    %1932 = vmatprep.subr.mxu0 0.0
    %1933 = vmatpush1.msra.mxu0 %v1593
    %1934 = vmatprep.subr.mxu0 0.0
    %1935 = vmatpush1.msra.mxu0 0.0
    %1936 = vmatprep.subr.mxu0 0.0
    %1937 = vmatpush1.msra.mxu0 0.0
    %1938 = vmatprep.subr.mxu0 0.0
    %1939 = vmatpush1.msra.mxu0 0.0
    %1940 = vmatprep.subr.mxu0 0.0
    %1941 = vmatpush1.msra.mxu0 0.0
    %1942 = vmatprep.subr.mxu0 0.0
    %1943 = vmatpush1.msra.mxu0 0.0
    %1944 = vmatprep.subr.mxu0 0.0
    %1945 = vmatpush1.msra.mxu0 0.0
    %1946 = vmatprep.subr.mxu0 0.0
    %1947 = vmatpush1.msra.mxu0 0.0
    %1948 = vmatprep.subr.mxu0 0.0
    %1949 = vmatpush1.msra.mxu0 0.0
    %1950 = vmatprep.subr.mxu0 0.0
    %1951 = vmatpush1.msra.mxu0 0.0
    %1952 = vmatprep.subr.mxu0 0.0
    %1953 = vmatpush1.msra.mxu0 0.0
    %1954 = vmatprep.subr.mxu0 0.0
    %1955 = vmatpush1.msra.mxu0 0.0
    %1956 = vmatprep.subr.mxu0 0.0
    %1957 = vmatpush1.msra.mxu0 0.0
    %1958 = vmatprep.subr.mxu0 0.0
    %1959 = vmatpush1.msra.mxu0 0.0
    %1960 = vmatprep.subr.mxu0 0.0
    %1961 = vmatpush1.msra.mxu0 0.0
    %1962 = vmatprep.subr.mxu0 0.0
    %1963 = vmatpush1.msra.mxu0 0.0
    %1964 = vmatprep.subr.mxu0 0.0
    %1965 = vmatpush1.msra.mxu0 0.0
    %1966 = vmatprep.subr.mxu0 0.0
    %1967 = vmatpush1.msra.mxu0 0.0
    %1968 = vmatprep.subr.mxu0 0.0
    %1969 = vmatpush1.msra.mxu0 0.0
    %1970 = vmatprep.subr.mxu0 0.0
    %1971 = vmatpush1.msra.mxu0 0.0
    %1972 = vmatprep.subr.mxu0 0.0
    %1973 = vmatpush1.msra.mxu0 0.0
    %1974 = vmatprep.subr.mxu0 0.0
    %1975 = vmatpush1.msra.mxu0 0.0
    %1976 = vmatprep.subr.mxu0 0.0
    %1977 = vmatpush1.msra.mxu0 0.0
    %1978 = vmatprep.subr.mxu0 0.0
    %1979 = vmatpush1.msra.mxu0 0.0
    %1980 = vmatprep.subr.mxu0 0.0
    %1981 = vmatpush1.msra.mxu0 0.0
    %1982 = vmatprep.subr.mxu0 0.0
    %1983 = vmatpush1.msra.mxu0 0.0
    %1984 = vmatprep.subr.mxu0 0.0
    %1985 = vmatpush1.msra.mxu0 0.0
    %1986 = vmatprep.subr.mxu0 0.0
    %1987 = vmatpush1.msra.mxu0 0.0
    %1988 = vmatprep.subr.mxu0 0.0
    %1989 = vmatpush1.msra.mxu0 0.0
    %1990 = vmatprep.subr.mxu0 0.0
    %1991 = vmatpush1.msra.mxu0 0.0
    %1992 = vmatprep.subr.mxu0 0.0
    %1993 = vmatpush1.msra.mxu0 0.0
    %1994 = vmatprep.mubr.f32.mxu0 0.0
    %1995 = vmatmul.mubr.f32.gmra.mrb[0].mxu0 %v1928
    %v1996 = vpop.f32.mrb[0].mxu0
    %v1997 = vadd.f32 0.0, %v1996
    %v1998 = vpop.f32.mrb[0].mxu0
    %1999 = vdwg.mxu0
    %v2001 = vsel %vm222, %v1757, 0
    %2003 = vmatprep.subr.mxu0 0.0
    %2004 = vmatpush1.msra.mxu0 %v1590
    %2005 = vmatprep.subr.mxu0 0.0
    %2006 = vmatpush1.msra.mxu0 %v1591
    %2007 = vmatprep.subr.mxu0 0.0
    %2008 = vmatpush1.msra.mxu0 0.0
    %2009 = vmatprep.subr.mxu0 0.0
    %2010 = vmatpush1.msra.mxu0 0.0
    %2011 = vmatprep.subr.mxu0 0.0
    %2012 = vmatpush1.msra.mxu0 0.0
    %2013 = vmatprep.subr.mxu0 0.0
    %2014 = vmatpush1.msra.mxu0 0.0
    %2015 = vmatprep.subr.mxu0 0.0
    %2016 = vmatpush1.msra.mxu0 0.0
    %2017 = vmatprep.subr.mxu0 0.0
    %2018 = vmatpush1.msra.mxu0 0.0
    %2019 = vmatprep.subr.mxu0 0.0
    %2020 = vmatpush1.msra.mxu0 0.0
    %2021 = vmatprep.subr.mxu0 0.0
    %2022 = vmatpush1.msra.mxu0 0.0
    %2023 = vmatprep.subr.mxu0 0.0
    %2024 = vmatpush1.msra.mxu0 0.0
    %2025 = vmatprep.subr.mxu0 0.0
    %2026 = vmatpush1.msra.mxu0 0.0
    %2027 = vmatprep.subr.mxu0 0.0
    %2028 = vmatpush1.msra.mxu0 0.0
    %2029 = vmatprep.subr.mxu0 0.0
    %2030 = vmatpush1.msra.mxu0 0.0
    %2031 = vmatprep.subr.mxu0 0.0
    %2032 = vmatpush1.msra.mxu0 0.0
    %2033 = vmatprep.subr.mxu0 0.0
    %2034 = vmatpush1.msra.mxu0 0.0
    %2035 = vmatprep.subr.mxu0 0.0
    %2036 = vmatpush1.msra.mxu0 0.0
    %2037 = vmatprep.subr.mxu0 0.0
    %2038 = vmatpush1.msra.mxu0 0.0
    %2039 = vmatprep.subr.mxu0 0.0
    %2040 = vmatpush1.msra.mxu0 0.0
    %2041 = vmatprep.subr.mxu0 0.0
    %2042 = vmatpush1.msra.mxu0 0.0
    %2043 = vmatprep.subr.mxu0 0.0
    %2044 = vmatpush1.msra.mxu0 0.0
    %2045 = vmatprep.subr.mxu0 0.0
    %2046 = vmatpush1.msra.mxu0 0.0
    %2047 = vmatprep.subr.mxu0 0.0
    %2048 = vmatpush1.msra.mxu0 0.0
    %2049 = vmatprep.subr.mxu0 0.0
    %2050 = vmatpush1.msra.mxu0 0.0
    %2051 = vmatprep.subr.mxu0 0.0
    %2052 = vmatpush1.msra.mxu0 0.0
    %2053 = vmatprep.subr.mxu0 0.0
    %2054 = vmatpush1.msra.mxu0 0.0
    %2055 = vmatprep.subr.mxu0 0.0
    %2056 = vmatpush1.msra.mxu0 0.0
    %2057 = vmatprep.subr.mxu0 0.0
    %2058 = vmatpush1.msra.mxu0 0.0
    %2059 = vmatprep.subr.mxu0 0.0
    %2060 = vmatpush1.msra.mxu0 0.0
    %2061 = vmatprep.subr.mxu0 0.0
    %2062 = vmatpush1.msra.mxu0 0.0
    %2063 = vmatprep.subr.mxu0 0.0
    %2064 = vmatpush1.msra.mxu0 0.0
    %2065 = vmatprep.subr.mxu0 0.0
    %2066 = vmatpush1.msra.mxu0 0.0
    %2067 = vmatprep.mubr.f32.mxu0 0.0
    %2068 = vmatmul.mubr.f32.gmra.mrb[0].mxu0 %v2001
    %v2069 = vpop.f32.mrb[0].mxu0
    %v2070 = vadd.f32 %v1997, %v2069
    %v2071 = vpop.f32.mrb[0].mxu0
    %2072 = vdwg.mxu0
    %2074 = vrot.lane.b32.xlu0 %v1586, 96
    %v2075 = vpop.permute.xlu0 %2074
    %v2076 = vsel %vm222, %v1586, 0
    %v2078 = vsel %vm222, %v2075, 0
    %2080 = vmatprep.subr.mxu0 0.0
    %2081 = vmatpush1.xpose.msra.mxu0 %v2078
    %2082 = vmatprep.subr.mxu0 0.0
    %2083 = vmatpush1.xpose.msra.mxu0 0.0
    %2084 = vmatprep.subr.mxu0 0.0
    %2085 = vmatpush1.xpose.msra.mxu0 0.0
    %2086 = vmatprep.subr.mxu0 0.0
    %2087 = vmatpush1.xpose.msra.mxu0 0.0
    %2088 = vmatprep.subr.mxu0 0.0
    %2089 = vmatpush1.xpose.msra.mxu0 0.0
    %2090 = vmatprep.subr.mxu0 0.0
    %2091 = vmatpush1.xpose.msra.mxu0 0.0
    %2092 = vmatprep.subr.mxu0 0.0
    %2093 = vmatpush1.xpose.msra.mxu0 0.0
    %2094 = vmatprep.subr.mxu0 0.0
    %2095 = vmatpush1.xpose.msra.mxu0 0.0
    %2096 = vmatprep.subr.mxu0 0.0
    %2097 = vmatpush1.xpose.msra.mxu0 0.0
    %2098 = vmatprep.subr.mxu0 0.0
    %2099 = vmatpush1.xpose.msra.mxu0 0.0
    %2100 = vmatprep.subr.mxu0 0.0
    %2101 = vmatpush1.xpose.msra.mxu0 0.0
    %2102 = vmatprep.subr.mxu0 0.0
    %2103 = vmatpush1.xpose.msra.mxu0 0.0
    %2104 = vmatprep.subr.mxu0 0.0
    %2105 = vmatpush1.xpose.msra.mxu0 0.0
    %2106 = vmatprep.subr.mxu0 0.0
    %2107 = vmatpush1.xpose.msra.mxu0 0.0
    %2108 = vmatprep.subr.mxu0 0.0
    %2109 = vmatpush1.xpose.msra.mxu0 0.0
    %2110 = vmatprep.subr.mxu0 0.0
    %2111 = vmatpush1.xpose.msra.mxu0 0.0
    %2112 = vmatprep.subr.mxu0 0.0
    %2113 = vmatpush1.xpose.msra.mxu0 0.0
    %2114 = vmatprep.subr.mxu0 0.0
    %2115 = vmatpush1.xpose.msra.mxu0 0.0
    %2116 = vmatprep.subr.mxu0 0.0
    %2117 = vmatpush1.xpose.msra.mxu0 0.0
    %2118 = vmatprep.subr.mxu0 0.0
    %2119 = vmatpush1.xpose.msra.mxu0 0.0
    %2120 = vmatprep.subr.mxu0 0.0
    %2121 = vmatpush1.xpose.msra.mxu0 0.0
    %2122 = vmatprep.subr.mxu0 0.0
    %2123 = vmatpush1.xpose.msra.mxu0 0.0
    %2124 = vmatprep.subr.mxu0 0.0
    %2125 = vmatpush1.xpose.msra.mxu0 0.0
    %2126 = vmatprep.subr.mxu0 0.0
    %2127 = vmatpush1.xpose.msra.mxu0 0.0
    %2128 = vmatprep.subr.mxu0 0.0
    %2129 = vmatpush1.xpose.msra.mxu0 0.0
    %2130 = vmatprep.subr.mxu0 0.0
    %2131 = vmatpush1.xpose.msra.mxu0 0.0
    %2132 = vmatprep.subr.mxu0 0.0
    %2133 = vmatpush1.xpose.msra.mxu0 0.0
    %2134 = vmatprep.subr.mxu0 0.0
    %2135 = vmatpush1.xpose.msra.mxu0 0.0
    %2136 = vmatprep.subr.mxu0 0.0
    %2137 = vmatpush1.xpose.msra.mxu0 0.0
    %2138 = vmatprep.subr.mxu0 0.0
    %2139 = vmatpush1.xpose.msra.mxu0 0.0
    %2140 = vmatprep.subr.mxu0 0.0
    %2141 = vmatpush1.xpose.msra.mxu0 0.0
    %2142 = vmatprep.subr.mxu0 0.0
    %2143 = vmatpush1.xpose.msra.mxu0 0.0
    %2144 = vmatprep.mubr.f32.mxu0 0.0
    %2145 = vmatmul.mubr.f32.gmra.mrb[0].mxu0 %v2076
    %v2146 = vpop.f32.mrb[0].mxu0
    %v2147 = vadd.f32 0.0, %v2146
    %v2148 = vpop.f32.mrb[0].mxu0
    %2149 = vdwg.mxu0
    %v2150 = vmul.f32 %v2147, 0.25
    %v2151 = vadd.f32 %v2150, %v785
    %v2152 = vsel %vm303, %v2151, -inf
    %2153 = vmax.xlane.f32.xlu0 %v2152
    %v2154 = vpop.xlane.xlu0 %2153
    %v2155 = vsub.f32 %v2151, %v2154
    %v2156 = vmul.f32 %v2155, 1.442695
    %v2157 = vpow.pop %v2156
    %v2158 = vsel %vm303, %v2157, 0.0
    %2159 = vadd.xlane.f32.xlu0 %v2158
    %v2160 = vpop.xlane.xlu0 %2159
    %v2161 = vrcp.pop %v2160
    %v2162 = vmul.f32 %v2157, %v2161
    %2163 = vrot.lane.b32.xlu0 %v1586, 64
    %v2164 = vpop.permute.xlu0 %2163
    %v2167 = vsel %vm303, %v2162, 0
    %2169 = vmatprep.subr.mxu0 0.0
    %2170 = vmatpush1.msra.mxu0 %v2164
    %2171 = vmatprep.subr.mxu0 0.0
    %2172 = vmatpush1.msra.mxu0 0.0
    %2173 = vmatprep.subr.mxu0 0.0
    %2174 = vmatpush1.msra.mxu0 0.0
    %2175 = vmatprep.subr.mxu0 0.0
    %2176 = vmatpush1.msra.mxu0 0.0
    %2177 = vmatprep.subr.mxu0 0.0
    %2178 = vmatpush1.msra.mxu0 0.0
    %2179 = vmatprep.subr.mxu0 0.0
    %2180 = vmatpush1.msra.mxu0 0.0
    %2181 = vmatprep.subr.mxu0 0.0
    %2182 = vmatpush1.msra.mxu0 0.0
    %2183 = vmatprep.subr.mxu0 0.0
    %2184 = vmatpush1.msra.mxu0 0.0
    %2185 = vmatprep.subr.mxu0 0.0
    %2186 = vmatpush1.msra.mxu0 0.0
    %2187 = vmatprep.subr.mxu0 0.0
    %2188 = vmatpush1.msra.mxu0 0.0
    %2189 = vmatprep.subr.mxu0 0.0
    %2190 = vmatpush1.msra.mxu0 0.0
    %2191 = vmatprep.subr.mxu0 0.0
    %2192 = vmatpush1.msra.mxu0 0.0
    %2193 = vmatprep.subr.mxu0 0.0
    %2194 = vmatpush1.msra.mxu0 0.0
    %2195 = vmatprep.subr.mxu0 0.0
    %2196 = vmatpush1.msra.mxu0 0.0
    %2197 = vmatprep.subr.mxu0 0.0
    %2198 = vmatpush1.msra.mxu0 0.0
    %2199 = vmatprep.subr.mxu0 0.0
    %2200 = vmatpush1.msra.mxu0 0.0
    %2201 = vmatprep.subr.mxu0 0.0
    %2202 = vmatpush1.msra.mxu0 0.0
    %2203 = vmatprep.subr.mxu0 0.0
    %2204 = vmatpush1.msra.mxu0 0.0
    %2205 = vmatprep.subr.mxu0 0.0
    %2206 = vmatpush1.msra.mxu0 0.0
    %2207 = vmatprep.subr.mxu0 0.0
    %2208 = vmatpush1.msra.mxu0 0.0
    %2209 = vmatprep.subr.mxu0 0.0
    %2210 = vmatpush1.msra.mxu0 0.0
    %2211 = vmatprep.subr.mxu0 0.0
    %2212 = vmatpush1.msra.mxu0 0.0
    %2213 = vmatprep.subr.mxu0 0.0
    %2214 = vmatpush1.msra.mxu0 0.0
    %2215 = vmatprep.subr.mxu0 0.0
    %2216 = vmatpush1.msra.mxu0 0.0
    %2217 = vmatprep.subr.mxu0 0.0
    %2218 = vmatpush1.msra.mxu0 0.0
    %2219 = vmatprep.subr.mxu0 0.0
    %2220 = vmatpush1.msra.mxu0 0.0
    %2221 = vmatprep.subr.mxu0 0.0
    %2222 = vmatpush1.msra.mxu0 0.0
    %2223 = vmatprep.subr.mxu0 0.0
    %2224 = vmatpush1.msra.mxu0 0.0
    %2225 = vmatprep.subr.mxu0 0.0
    %2226 = vmatpush1.msra.mxu0 0.0
    %2227 = vmatprep.subr.mxu0 0.0
    %2228 = vmatpush1.msra.mxu0 0.0
    %2229 = vmatprep.subr.mxu0 0.0
    %2230 = vmatpush1.msra.mxu0 0.0
    %2231 = vmatprep.subr.mxu0 0.0
    %2232 = vmatpush1.msra.mxu0 0.0
    %2233 = vmatprep.mubr.f32.mxu0 0.0
    %2234 = vmatmul.mubr.f32.gmra.mrb[0].mxu0 %v2167
    %v2235 = vpop.f32.mrb[0].mxu0
    %v2236 = vadd.f32 0.0, %v2235
    %v2237 = vpop.f32.mrb[0].mxu0
    %2238 = vdwg.mxu0
    %2239 = vrot.lane.b32.xlu0 %v1586, 112
    %v2240 = vpop.permute.xlu0 %2239
    %2241 = vrot.lane.b32.xlu0 %v1586, 80
    %v2242 = vpop.permute.xlu0 %2241
    %v2243 = vsel %vm222, %v2240, 0
    %v2245 = vsel %vm222, %v2242, 0
    %2247 = vmatprep.subr.mxu0 0.0
    %2248 = vmatpush1.xpose.msra.mxu0 %v2245
    %2249 = vmatprep.subr.mxu0 0.0
    %2250 = vmatpush1.xpose.msra.mxu0 0.0
    %2251 = vmatprep.subr.mxu0 0.0
    %2252 = vmatpush1.xpose.msra.mxu0 0.0
    %2253 = vmatprep.subr.mxu0 0.0
    %2254 = vmatpush1.xpose.msra.mxu0 0.0
    %2255 = vmatprep.subr.mxu0 0.0
    %2256 = vmatpush1.xpose.msra.mxu0 0.0
    %2257 = vmatprep.subr.mxu0 0.0
    %2258 = vmatpush1.xpose.msra.mxu0 0.0
    %2259 = vmatprep.subr.mxu0 0.0
    %2260 = vmatpush1.xpose.msra.mxu0 0.0
    %2261 = vmatprep.subr.mxu0 0.0
    %2262 = vmatpush1.xpose.msra.mxu0 0.0
    %2263 = vmatprep.subr.mxu0 0.0
    %2264 = vmatpush1.xpose.msra.mxu0 0.0
    %2265 = vmatprep.subr.mxu0 0.0
    %2266 = vmatpush1.xpose.msra.mxu0 0.0
    %2267 = vmatprep.subr.mxu0 0.0
    %2268 = vmatpush1.xpose.msra.mxu0 0.0
    %2269 = vmatprep.subr.mxu0 0.0
    %2270 = vmatpush1.xpose.msra.mxu0 0.0
    %2271 = vmatprep.subr.mxu0 0.0
    %2272 = vmatpush1.xpose.msra.mxu0 0.0
    %2273 = vmatprep.subr.mxu0 0.0
    %2274 = vmatpush1.xpose.msra.mxu0 0.0
    %2275 = vmatprep.subr.mxu0 0.0
    %2276 = vmatpush1.xpose.msra.mxu0 0.0
    %2277 = vmatprep.subr.mxu0 0.0
    %2278 = vmatpush1.xpose.msra.mxu0 0.0
    %2279 = vmatprep.subr.mxu0 0.0
    %2280 = vmatpush1.xpose.msra.mxu0 0.0
    %2281 = vmatprep.subr.mxu0 0.0
    %2282 = vmatpush1.xpose.msra.mxu0 0.0
    %2283 = vmatprep.subr.mxu0 0.0
    %2284 = vmatpush1.xpose.msra.mxu0 0.0
    %2285 = vmatprep.subr.mxu0 0.0
    %2286 = vmatpush1.xpose.msra.mxu0 0.0
    %2287 = vmatprep.subr.mxu0 0.0
    %2288 = vmatpush1.xpose.msra.mxu0 0.0
    %2289 = vmatprep.subr.mxu0 0.0
    %2290 = vmatpush1.xpose.msra.mxu0 0.0
    %2291 = vmatprep.subr.mxu0 0.0
    %2292 = vmatpush1.xpose.msra.mxu0 0.0
    %2293 = vmatprep.subr.mxu0 0.0
    %2294 = vmatpush1.xpose.msra.mxu0 0.0
    %2295 = vmatprep.subr.mxu0 0.0
    %2296 = vmatpush1.xpose.msra.mxu0 0.0
    %2297 = vmatprep.subr.mxu0 0.0
    %2298 = vmatpush1.xpose.msra.mxu0 0.0
    %2299 = vmatprep.subr.mxu0 0.0
    %2300 = vmatpush1.xpose.msra.mxu0 0.0
    %2301 = vmatprep.subr.mxu0 0.0
    %2302 = vmatpush1.xpose.msra.mxu0 0.0
    %2303 = vmatprep.subr.mxu0 0.0
    %2304 = vmatpush1.xpose.msra.mxu0 0.0
    %2305 = vmatprep.subr.mxu0 0.0
    %2306 = vmatpush1.xpose.msra.mxu0 0.0
    %2307 = vmatprep.subr.mxu0 0.0
    %2308 = vmatpush1.xpose.msra.mxu0 0.0
    %2309 = vmatprep.subr.mxu0 0.0
    %2310 = vmatpush1.xpose.msra.mxu0 0.0
    %2311 = vmatprep.mubr.f32.mxu0 0.0
    %2312 = vmatmul.mubr.f32.gmra.mrb[0].mxu0 %v2243
    %v2313 = vpop.f32.mrb[0].mxu0
    %v2314 = vadd.f32 0.0, %v2313
    %v2315 = vpop.f32.mrb[0].mxu0
    %2316 = vdwg.mxu0
    %v2317 = vmul.f32 %v2314, 0.25
    %v2318 = vadd.f32 %v2317, %v785
    %v2319 = vsel %vm303, %v2318, -inf
    %2320 = vmax.xlane.f32.xlu0 %v2319
    %v2321 = vpop.xlane.xlu0 %2320
    %v2322 = vsub.f32 %v2318, %v2321
    %v2323 = vmul.f32 %v2322, 1.442695
    %v2324 = vpow.pop %v2323
    %v2325 = vsel %vm303, %v2324, 0.0
    %2326 = vadd.xlane.f32.xlu0 %v2325
    %v2327 = vpop.xlane.xlu0 %2326
    %v2328 = vrcp.pop %v2327
    %v2329 = vmul.f32 %v2324, %v2328
    %2330 = vrot.lane.b32.xlu0 %v1586, 48
    %v2331 = vpop.permute.xlu0 %2330
    %v2334 = vsel %vm303, %v2329, 0
    %2336 = vmatprep.subr.mxu0 0.0
    %2337 = vmatpush1.msra.mxu0 %v2331
    %2338 = vmatprep.subr.mxu0 0.0
    %2339 = vmatpush1.msra.mxu0 0.0
    %2340 = vmatprep.subr.mxu0 0.0
    %2341 = vmatpush1.msra.mxu0 0.0
    %2342 = vmatprep.subr.mxu0 0.0
    %2343 = vmatpush1.msra.mxu0 0.0
    %2344 = vmatprep.subr.mxu0 0.0
    %2345 = vmatpush1.msra.mxu0 0.0
    %2346 = vmatprep.subr.mxu0 0.0
    %2347 = vmatpush1.msra.mxu0 0.0
    %2348 = vmatprep.subr.mxu0 0.0
    %2349 = vmatpush1.msra.mxu0 0.0
    %2350 = vmatprep.subr.mxu0 0.0
    %2351 = vmatpush1.msra.mxu0 0.0
    %2352 = vmatprep.subr.mxu0 0.0
    %2353 = vmatpush1.msra.mxu0 0.0
    %2354 = vmatprep.subr.mxu0 0.0
    %2355 = vmatpush1.msra.mxu0 0.0
    %2356 = vmatprep.subr.mxu0 0.0
    %2357 = vmatpush1.msra.mxu0 0.0
    %2358 = vmatprep.subr.mxu0 0.0
    %2359 = vmatpush1.msra.mxu0 0.0
    %2360 = vmatprep.subr.mxu0 0.0
    %2361 = vmatpush1.msra.mxu0 0.0
    %2362 = vmatprep.subr.mxu0 0.0
    %2363 = vmatpush1.msra.mxu0 0.0
    %2364 = vmatprep.subr.mxu0 0.0
    %2365 = vmatpush1.msra.mxu0 0.0
    %2366 = vmatprep.subr.mxu0 0.0
    %2367 = vmatpush1.msra.mxu0 0.0
    %2368 = vmatprep.subr.mxu0 0.0
    %2369 = vmatpush1.msra.mxu0 0.0
    %2370 = vmatprep.subr.mxu0 0.0
    %2371 = vmatpush1.msra.mxu0 0.0
    %2372 = vmatprep.subr.mxu0 0.0
    %2373 = vmatpush1.msra.mxu0 0.0
    %2374 = vmatprep.subr.mxu0 0.0
    %2375 = vmatpush1.msra.mxu0 0.0
    %2376 = vmatprep.subr.mxu0 0.0
    %2377 = vmatpush1.msra.mxu0 0.0
    %2378 = vmatprep.subr.mxu0 0.0
    %2379 = vmatpush1.msra.mxu0 0.0
    %2380 = vmatprep.subr.mxu0 0.0
    %2381 = vmatpush1.msra.mxu0 0.0
    %2382 = vmatprep.subr.mxu0 0.0
    %2383 = vmatpush1.msra.mxu0 0.0
    %2384 = vmatprep.subr.mxu0 0.0
    %2385 = vmatpush1.msra.mxu0 0.0
    %2386 = vmatprep.subr.mxu0 0.0
    %2387 = vmatpush1.msra.mxu0 0.0
    %2388 = vmatprep.subr.mxu0 0.0
    %2389 = vmatpush1.msra.mxu0 0.0
    %2390 = vmatprep.subr.mxu0 0.0
    %2391 = vmatpush1.msra.mxu0 0.0
    %2392 = vmatprep.subr.mxu0 0.0
    %2393 = vmatpush1.msra.mxu0 0.0
    %2394 = vmatprep.subr.mxu0 0.0
    %2395 = vmatpush1.msra.mxu0 0.0
    %2396 = vmatprep.subr.mxu0 0.0
    %2397 = vmatpush1.msra.mxu0 0.0
    %2398 = vmatprep.subr.mxu0 0.0
    %2399 = vmatpush1.msra.mxu0 0.0
    %2400 = vmatprep.mubr.f32.mxu0 0.0
    %2401 = vmatmul.mubr.f32.gmra.mrb[0].mxu0 %v2334
    %v2402 = vpop.f32.mrb[0].mxu0
    %v2403 = vadd.f32 0.0, %v2402
    %v2404 = vpop.f32.mrb[0].mxu0
    %2405 = vdwg.mxu0
    %v2407 = vsel %vm222, %v2403, 0
    %2409 = vmatprep.subr.mxu0 0.0
    %2410 = vmatpush1.msra.mxu0 %v1592
    %2411 = vmatprep.subr.mxu0 0.0
    %2412 = vmatpush1.msra.mxu0 %v1593
    %2413 = vmatprep.subr.mxu0 0.0
    %2414 = vmatpush1.msra.mxu0 0.0
    %2415 = vmatprep.subr.mxu0 0.0
    %2416 = vmatpush1.msra.mxu0 0.0
    %2417 = vmatprep.subr.mxu0 0.0
    %2418 = vmatpush1.msra.mxu0 0.0
    %2419 = vmatprep.subr.mxu0 0.0
    %2420 = vmatpush1.msra.mxu0 0.0
    %2421 = vmatprep.subr.mxu0 0.0
    %2422 = vmatpush1.msra.mxu0 0.0
    %2423 = vmatprep.subr.mxu0 0.0
    %2424 = vmatpush1.msra.mxu0 0.0
    %2425 = vmatprep.subr.mxu0 0.0
    %2426 = vmatpush1.msra.mxu0 0.0
    %2427 = vmatprep.subr.mxu0 0.0
    %2428 = vmatpush1.msra.mxu0 0.0
    %2429 = vmatprep.subr.mxu0 0.0
    %2430 = vmatpush1.msra.mxu0 0.0
    %2431 = vmatprep.subr.mxu0 0.0
    %2432 = vmatpush1.msra.mxu0 0.0
    %2433 = vmatprep.subr.mxu0 0.0
    %2434 = vmatpush1.msra.mxu0 0.0
    %2435 = vmatprep.subr.mxu0 0.0
    %2436 = vmatpush1.msra.mxu0 0.0
    %2437 = vmatprep.subr.mxu0 0.0
    %2438 = vmatpush1.msra.mxu0 0.0
    %2439 = vmatprep.subr.mxu0 0.0
    %2440 = vmatpush1.msra.mxu0 0.0
    %2441 = vmatprep.subr.mxu0 0.0
    %2442 = vmatpush1.msra.mxu0 0.0
    %2443 = vmatprep.subr.mxu0 0.0
    %2444 = vmatpush1.msra.mxu0 0.0
    %2445 = vmatprep.subr.mxu0 0.0
    %2446 = vmatpush1.msra.mxu0 0.0
    %2447 = vmatprep.subr.mxu0 0.0
    %2448 = vmatpush1.msra.mxu0 0.0
    %2449 = vmatprep.subr.mxu0 0.0
    %2450 = vmatpush1.msra.mxu0 0.0
    %2451 = vmatprep.subr.mxu0 0.0
    %2452 = vmatpush1.msra.mxu0 0.0
    %2453 = vmatprep.subr.mxu0 0.0
    %2454 = vmatpush1.msra.mxu0 0.0
    %2455 = vmatprep.subr.mxu0 0.0
    %2456 = vmatpush1.msra.mxu0 0.0
    %2457 = vmatprep.subr.mxu0 0.0
    %2458 = vmatpush1.msra.mxu0 0.0
    %2459 = vmatprep.subr.mxu0 0.0
    %2460 = vmatpush1.msra.mxu0 0.0
    %2461 = vmatprep.subr.mxu0 0.0
    %2462 = vmatpush1.msra.mxu0 0.0
    %2463 = vmatprep.subr.mxu0 0.0
    %2464 = vmatpush1.msra.mxu0 0.0
    %2465 = vmatprep.subr.mxu0 0.0
    %2466 = vmatpush1.msra.mxu0 0.0
    %2467 = vmatprep.subr.mxu0 0.0
    %2468 = vmatpush1.msra.mxu0 0.0
    %2469 = vmatprep.subr.mxu0 0.0
    %2470 = vmatpush1.msra.mxu0 0.0
    %2471 = vmatprep.subr.mxu0 0.0
    %2472 = vmatpush1.msra.mxu0 0.0
    %2473 = vmatprep.mubr.f32.mxu0 0.0
    %2474 = vmatmul.mubr.f32.gmra.mrb[0].mxu0 %v2407
    %v2475 = vpop.f32.mrb[0].mxu0
    %v2476 = vadd.f32 0.0, %v2475
    %v2477 = vpop.f32.mrb[0].mxu0
    %2478 = vdwg.mxu0
    %v2480 = vsel %vm222, %v2236, 0
    %2482 = vmatprep.subr.mxu0 0.0
    %2483 = vmatpush1.msra.mxu0 %v1590
    %2484 = vmatprep.subr.mxu0 0.0
    %2485 = vmatpush1.msra.mxu0 %v1591
    %2486 = vmatprep.subr.mxu0 0.0
    %2487 = vmatpush1.msra.mxu0 0.0
    %2488 = vmatprep.subr.mxu0 0.0
    %2489 = vmatpush1.msra.mxu0 0.0
    %2490 = vmatprep.subr.mxu0 0.0
    %2491 = vmatpush1.msra.mxu0 0.0
    %2492 = vmatprep.subr.mxu0 0.0
    %2493 = vmatpush1.msra.mxu0 0.0
    %2494 = vmatprep.subr.mxu0 0.0
    %2495 = vmatpush1.msra.mxu0 0.0
    %2496 = vmatprep.subr.mxu0 0.0
    %2497 = vmatpush1.msra.mxu0 0.0
    %2498 = vmatprep.subr.mxu0 0.0
    %2499 = vmatpush1.msra.mxu0 0.0
    %2500 = vmatprep.subr.mxu0 0.0
    %2501 = vmatpush1.msra.mxu0 0.0
    %2502 = vmatprep.subr.mxu0 0.0
    %2503 = vmatpush1.msra.mxu0 0.0
    %2504 = vmatprep.subr.mxu0 0.0
    %2505 = vmatpush1.msra.mxu0 0.0
    %2506 = vmatprep.subr.mxu0 0.0
    %2507 = vmatpush1.msra.mxu0 0.0
    %2508 = vmatprep.subr.mxu0 0.0
    %2509 = vmatpush1.msra.mxu0 0.0
    %2510 = vmatprep.subr.mxu0 0.0
    %2511 = vmatpush1.msra.mxu0 0.0
    %2512 = vmatprep.subr.mxu0 0.0
    %2513 = vmatpush1.msra.mxu0 0.0
    %2514 = vmatprep.subr.mxu0 0.0
    %2515 = vmatpush1.msra.mxu0 0.0
    %2516 = vmatprep.subr.mxu0 0.0
    %2517 = vmatpush1.msra.mxu0 0.0
    %2518 = vmatprep.subr.mxu0 0.0
    %2519 = vmatpush1.msra.mxu0 0.0
    %2520 = vmatprep.subr.mxu0 0.0
    %2521 = vmatpush1.msra.mxu0 0.0
    %2522 = vmatprep.subr.mxu0 0.0
    %2523 = vmatpush1.msra.mxu0 0.0
    %2524 = vmatprep.subr.mxu0 0.0
    %2525 = vmatpush1.msra.mxu0 0.0
    %2526 = vmatprep.subr.mxu0 0.0
    %2527 = vmatpush1.msra.mxu0 0.0
    %2528 = vmatprep.subr.mxu0 0.0
    %2529 = vmatpush1.msra.mxu0 0.0
    %2530 = vmatprep.subr.mxu0 0.0
    %2531 = vmatpush1.msra.mxu0 0.0
    %2532 = vmatprep.subr.mxu0 0.0
    %2533 = vmatpush1.msra.mxu0 0.0
    %2534 = vmatprep.subr.mxu0 0.0
    %2535 = vmatpush1.msra.mxu0 0.0
    %2536 = vmatprep.subr.mxu0 0.0
    %2537 = vmatpush1.msra.mxu0 0.0
    %2538 = vmatprep.subr.mxu0 0.0
    %2539 = vmatpush1.msra.mxu0 0.0
    %2540 = vmatprep.subr.mxu0 0.0
    %2541 = vmatpush1.msra.mxu0 0.0
    %2542 = vmatprep.subr.mxu0 0.0
    %2543 = vmatpush1.msra.mxu0 0.0
    %2544 = vmatprep.subr.mxu0 0.0
    %2545 = vmatpush1.msra.mxu0 0.0
    %2546 = vmatprep.mubr.f32.mxu0 0.0
    %2547 = vmatmul.mubr.f32.gmra.mrb[0].mxu0 %v2480
    %v2548 = vpop.f32.mrb[0].mxu0
    %v2549 = vadd.f32 %v2476, %v2548
    %v2550 = vpop.f32.mrb[0].mxu0
    %2551 = vdwg.mxu0
    %s2552 = scalar_lea.vmem %s8, 1
    %v2553 = vld [vmem:[%s2552] sm:$0x1]
    %v2555 = vlaneseq
    %v2556 = vshrl.u32 %v2555, 7
    %v2557 = vsub.s32 0, %v2556
    %v2558 = vrot.slane %v2553, %v2557
    %v2560 = vadd.f32 %v2070, %v2558
    %v2561 = vadd.f32 %v2549, %v2558
    %v2562 = vadd.f32 %v2560, %v1493
    %v2563 = vadd.f32 %v2561, %v1494
    %s2564 = scalar_lea.vmem %s9, 1
    %v2565 = vld [vmem:[%s2564] sm:$0x1]
    %s2566 = scalar_lea.vmem %s10, 1
    %v2567 = vld [vmem:[%s2566] sm:$0x1]
    %v2568 = vsel %vm76, %v2562, 0.0
    %2569 = vadd.xlane.f32.xlu0 %v2568
    %v2570 = vpop.xlane.xlu0 %2569
    %v2571 = vsel %vm76, %v2563, 0.0
    %2572 = vadd.xlane.f32.xlu0 %v2571
    %v2573 = vpop.xlane.xlu0 %2572
    %v2574 = vmul.f32 %v2570, %v83
    %v2575 = vmul.f32 %v2573, %v83
    %v2576 = vsub.f32 %v2562, %v2574
    %v2577 = vsub.f32 %v2563, %v2575
    %v2578 = vmul.f32 %v2576, %v2576
    %v2579 = vmul.f32 %v2577, %v2577
    %v2580 = vsel %vm76, %v2578, 0.0
    %2581 = vadd.xlane.f32.xlu0 %v2580
    %v2582 = vpop.xlane.xlu0 %2581
    %v2583 = vsel %vm76, %v2579, 0.0
    %2584 = vadd.xlane.f32.xlu0 %v2583
    %v2585 = vpop.xlane.xlu0 %2584
    %v2586 = vmul.f32 %v2582, %v83
    %v2587 = vmul.f32 %v2585, %v83
    %v2588 = vadd.f32 %v2586, 1e-12
    %v2589 = vadd.f32 %v2587, 1e-12
    %v2590 = vrsqrt.pop %v2588
    %v2591 = vrsqrt.pop %v2589
    %v2592 = vmul.f32 %v2576, %v2590
    %v2593 = vmul.f32 %v2577, %v2591
    %v2595 = vlaneseq
    %v2596 = vshrl.u32 %v2595, 7
    %v2597 = vsub.s32 0, %v2596
    %v2598 = vrot.slane %v2565, %v2597
    %v2600 = vmul.f32 %v2592, %v2598
    %v2601 = vmul.f32 %v2593, %v2598
    %v2603 = vlaneseq
    %v2604 = vshrl.u32 %v2603, 7
    %v2605 = vsub.s32 0, %v2604
    %v2606 = vrot.slane %v2567, %v2605
    %v2608 = vadd.f32 %v2600, %v2606
    %v2609 = vadd.f32 %v2601, %v2606
    %s2610 = scalar_lea.vmem %s11, 32
    %v2611 = vld [vmem:[%s2610] sm:$0xff]
    %v2612 = vld [vmem:[%s2610 + $0x8] sm:$0xff]
    %v2613 = vld [vmem:[%s2610 + $0x10] sm:$0xff]
    %v2614 = vld [vmem:[%s2610 + $0x18] sm:$0xff]
    %s2615 = scalar_lea.vmem %s12, 1
    %v2616 = vld [vmem:[%s2615] sm:$0x1]
    %v2618 = vlaneseq
    %v2619 = vshrl.u32 %v2618, 7
    %v2620 = vsub.s32 0, %v2619
    %v2621 = vrot.slane %v2616, %v2620
    %v2624 = vsel %vm76, %v2608, 0
    %v2627 = vsel %vm76, %v2609, 0
    %2629 = vmatprep.subr.mxu0 0.0
    %2630 = vmatpush1.msra.mxu0 %v2611
    %2631 = vmatprep.subr.mxu0 0.0
    %2632 = vmatpush1.msra.mxu0 %v2612
    %2633 = vmatprep.subr.mxu0 0.0
    %2634 = vmatpush1.msra.mxu0 %v2613
    %2635 = vmatprep.subr.mxu0 0.0
    %2636 = vmatpush1.msra.mxu0 %v2614
    %2637 = vmatprep.subr.mxu0 0.0
    %2638 = vmatpush1.msra.mxu0 0.0
    %2639 = vmatprep.subr.mxu0 0.0
    %2640 = vmatpush1.msra.mxu0 0.0
    %2641 = vmatprep.subr.mxu0 0.0
    %2642 = vmatpush1.msra.mxu0 0.0
    %2643 = vmatprep.subr.mxu0 0.0
    %2644 = vmatpush1.msra.mxu0 0.0
    %2645 = vmatprep.subr.mxu0 0.0
    %2646 = vmatpush1.msra.mxu0 0.0
    %2647 = vmatprep.subr.mxu0 0.0
    %2648 = vmatpush1.msra.mxu0 0.0
    %2649 = vmatprep.subr.mxu0 0.0
    %2650 = vmatpush1.msra.mxu0 0.0
    %2651 = vmatprep.subr.mxu0 0.0
    %2652 = vmatpush1.msra.mxu0 0.0
    %2653 = vmatprep.subr.mxu0 0.0
    %2654 = vmatpush1.msra.mxu0 0.0
    %2655 = vmatprep.subr.mxu0 0.0
    %2656 = vmatpush1.msra.mxu0 0.0
    %2657 = vmatprep.subr.mxu0 0.0
    %2658 = vmatpush1.msra.mxu0 0.0
    %2659 = vmatprep.subr.mxu0 0.0
    %2660 = vmatpush1.msra.mxu0 0.0
    %2661 = vmatprep.subr.mxu0 0.0
    %2662 = vmatpush1.msra.mxu0 0.0
    %2663 = vmatprep.subr.mxu0 0.0
    %2664 = vmatpush1.msra.mxu0 0.0
    %2665 = vmatprep.subr.mxu0 0.0
    %2666 = vmatpush1.msra.mxu0 0.0
    %2667 = vmatprep.subr.mxu0 0.0
    %2668 = vmatpush1.msra.mxu0 0.0
    %2669 = vmatprep.subr.mxu0 0.0
    %2670 = vmatpush1.msra.mxu0 0.0
    %2671 = vmatprep.subr.mxu0 0.0
    %2672 = vmatpush1.msra.mxu0 0.0
    %2673 = vmatprep.subr.mxu0 0.0
    %2674 = vmatpush1.msra.mxu0 0.0
    %2675 = vmatprep.subr.mxu0 0.0
    %2676 = vmatpush1.msra.mxu0 0.0
    %2677 = vmatprep.subr.mxu0 0.0
    %2678 = vmatpush1.msra.mxu0 0.0
    %2679 = vmatprep.subr.mxu0 0.0
    %2680 = vmatpush1.msra.mxu0 0.0
    %2681 = vmatprep.subr.mxu0 0.0
    %2682 = vmatpush1.msra.mxu0 0.0
    %2683 = vmatprep.subr.mxu0 0.0
    %2684 = vmatpush1.msra.mxu0 0.0
    %2685 = vmatprep.subr.mxu0 0.0
    %2686 = vmatpush1.msra.mxu0 0.0
    %2687 = vmatprep.subr.mxu0 0.0
    %2688 = vmatpush1.msra.mxu0 0.0
    %2689 = vmatprep.subr.mxu0 0.0
    %2690 = vmatpush1.msra.mxu0 0.0
    %2691 = vmatprep.subr.mxu0 0.0
    %2692 = vmatpush1.msra.mxu0 0.0
    %2693 = vmatprep.mubr.f32.mxu0 0.0
    %2694 = vmatmul.mubr.f32.gmra.mrb[0].mxu0 %v2624
    %v2695 = vpop.f32.mrb[0].mxu0
    %v2696 = vadd.f32 %v2621, %v2695
    %v2697 = vpop.f32.mrb[0].mxu0
    %2698 = vmatprep.mubr.f32.mxu0 0.0
    %2699 = vmatmul.mubr.f32.gmra.mrb[0].mxu0 %v2627
    %v2700 = vpop.f32.mrb[0].mxu0
    %v2701 = vadd.f32 %v2621, %v2700
    %v2702 = vpop.f32.mrb[0].mxu0
    %2703 = vdwg.mxu0
    %v2704 = vmul.f32 %v2696, %v2696
    %v2705 = vmul.f32 %v2701, %v2701
    %v2706 = vmul.f32 %v2696, %v2704
    %v2707 = vmul.f32 %v2701, %v2705
    %v2708 = vmul.f32 %v2706, 0.044715
    %v2709 = vmul.f32 %v2707, 0.044715
    %v2710 = vadd.f32 %v2696, %v2708
    %v2711 = vadd.f32 %v2701, %v2709
    %v2712 = vmul.f32 %v2710, 0.7978846
    %v2713 = vmul.f32 %v2711, 0.7978846
    %v2714 = vtanh.pop %v2712
    %v2715 = vtanh.pop %v2713
    %v2716 = vadd.f32 %v2714, 1.0
    %v2717 = vadd.f32 %v2715, 1.0
    %v2718 = vmul.f32 %v2716, 0.5
    %v2719 = vmul.f32 %v2717, 0.5
    %v2720 = vmul.f32 %v2696, %v2718
    %v2721 = vmul.f32 %v2701, %v2719
    %s2722 = scalar_lea.vmem %s13, 64
    %v2723 = vld [vmem:[%s2722] sm:$0xff]
    %v2724 = vld [vmem:[%s2722 + $0x8] sm:$0xff]
    %v2725 = vld [vmem:[%s2722 + $0x10] sm:$0xff]
    %v2726 = vld [vmem:[%s2722 + $0x18] sm:$0xff]
    %v2727 = vld [vmem:[%s2722 + $0x20] sm:$0xff]
    %v2728 = vld [vmem:[%s2722 + $0x28] sm:$0xff]
    %v2729 = vld [vmem:[%s2722 + $0x30] sm:$0xff]
    %v2730 = vld [vmem:[%s2722 + $0x38] sm:$0xff]
    %s2731 = scalar_lea.vmem %s14, 1
    %v2732 = vld [vmem:[%s2731] sm:$0x1]
    %v2734 = vlaneseq
    %v2735 = vshrl.u32 %v2734, 7
    %v2736 = vsub.s32 0, %v2735
    %v2737 = vrot.slane %v2732, %v2736
    %v2740 = vsel %vm1367, %v2720, 0
    %v2743 = vsel %vm1367, %v2721, 0
    %2745 = vmatprep.subr.mxu0 0.0
    %2746 = vmatpush1.msra.mxu0 %v2723
    %2747 = vmatprep.subr.mxu0 0.0
    %2748 = vmatpush1.msra.mxu0 %v2724
    %2749 = vmatprep.subr.mxu0 0.0
    %2750 = vmatpush1.msra.mxu0 %v2725
    %2751 = vmatprep.subr.mxu0 0.0
    %2752 = vmatpush1.msra.mxu0 %v2726
    %2753 = vmatprep.subr.mxu0 0.0
    %2754 = vmatpush1.msra.mxu0 %v2727
    %2755 = vmatprep.subr.mxu0 0.0
    %2756 = vmatpush1.msra.mxu0 %v2728
    %2757 = vmatprep.subr.mxu0 0.0
    %2758 = vmatpush1.msra.mxu0 %v2729
    %2759 = vmatprep.subr.mxu0 0.0
    %2760 = vmatpush1.msra.mxu0 %v2730
    %2761 = vmatprep.subr.mxu0 0.0
    %2762 = vmatpush1.msra.mxu0 0.0
    %2763 = vmatprep.subr.mxu0 0.0
    %2764 = vmatpush1.msra.mxu0 0.0
    %2765 = vmatprep.subr.mxu0 0.0
    %2766 = vmatpush1.msra.mxu0 0.0
    %2767 = vmatprep.subr.mxu0 0.0
    %2768 = vmatpush1.msra.mxu0 0.0
    %2769 = vmatprep.subr.mxu0 0.0
    %2770 = vmatpush1.msra.mxu0 0.0
    %2771 = vmatprep.subr.mxu0 0.0
    %2772 = vmatpush1.msra.mxu0 0.0
    %2773 = vmatprep.subr.mxu0 0.0
    %2774 = vmatpush1.msra.mxu0 0.0
    %2775 = vmatprep.subr.mxu0 0.0
    %2776 = vmatpush1.msra.mxu0 0.0
    %2777 = vmatprep.subr.mxu0 0.0
    %2778 = vmatpush1.msra.mxu0 0.0
    %2779 = vmatprep.subr.mxu0 0.0
    %2780 = vmatpush1.msra.mxu0 0.0
    %2781 = vmatprep.subr.mxu0 0.0
    %2782 = vmatpush1.msra.mxu0 0.0
    %2783 = vmatprep.subr.mxu0 0.0
    %2784 = vmatpush1.msra.mxu0 0.0
    %2785 = vmatprep.subr.mxu0 0.0
    %2786 = vmatpush1.msra.mxu0 0.0
    %2787 = vmatprep.subr.mxu0 0.0
    %2788 = vmatpush1.msra.mxu0 0.0
    %2789 = vmatprep.subr.mxu0 0.0
    %2790 = vmatpush1.msra.mxu0 0.0
    %2791 = vmatprep.subr.mxu0 0.0
    %2792 = vmatpush1.msra.mxu0 0.0
    %2793 = vmatprep.subr.mxu0 0.0
    %2794 = vmatpush1.msra.mxu0 0.0
    %2795 = vmatprep.subr.mxu0 0.0
    %2796 = vmatpush1.msra.mxu0 0.0
    %2797 = vmatprep.subr.mxu0 0.0
    %2798 = vmatpush1.msra.mxu0 0.0
    %2799 = vmatprep.subr.mxu0 0.0
    %2800 = vmatpush1.msra.mxu0 0.0
    %2801 = vmatprep.subr.mxu0 0.0
    %2802 = vmatpush1.msra.mxu0 0.0
    %2803 = vmatprep.subr.mxu0 0.0
    %2804 = vmatpush1.msra.mxu0 0.0
    %2805 = vmatprep.subr.mxu0 0.0
    %2806 = vmatpush1.msra.mxu0 0.0
    %2807 = vmatprep.subr.mxu0 0.0
    %2808 = vmatpush1.msra.mxu0 0.0
    %2809 = vmatprep.mubr.f32.mxu0 0.0
    %2810 = vmatmul.mubr.f32.gmra.mrb[0].mxu0 %v2740
    %v2811 = vpop.f32.mrb[0].mxu0
    %v2812 = vadd.f32 %v2737, %v2811
    %v2813 = vpop.f32.mrb[0].mxu0
    %2814 = vmatprep.mubr.f32.mxu0 0.0
    %2815 = vmatmul.mubr.f32.gmra.mrb[0].mxu0 %v2743
    %v2816 = vpop.f32.mrb[0].mxu0
    %v2817 = vadd.f32 %v2737, %v2816
    %v2818 = vpop.f32.mrb[0].mxu0
    %2819 = vdwg.mxu0
    %v2820 = vadd.f32 %v2812, %v2608
    %v2821 = vadd.f32 %v2817, %v2609
    %s2822 = scalar_lea.vmem %s15, 1
    %v2823 = vld [vmem:[%s2822] sm:$0x1]
    %s2824 = scalar_lea.vmem %s16, 1
    %v2825 = vld [vmem:[%s2824] sm:$0x1]
    %v2826 = vsel %vm76, %v2820, 0.0
    %2827 = vadd.xlane.f32.xlu0 %v2826
    %v2828 = vpop.xlane.xlu0 %2827
    %v2829 = vsel %vm76, %v2821, 0.0
    %2830 = vadd.xlane.f32.xlu0 %v2829
    %v2831 = vpop.xlane.xlu0 %2830
    %v2832 = vmul.f32 %v2828, %v83
    %v2833 = vmul.f32 %v2831, %v83
    %v2834 = vsub.f32 %v2820, %v2832
    %v2835 = vsub.f32 %v2821, %v2833
    %v2836 = vmul.f32 %v2834, %v2834
    %v2837 = vmul.f32 %v2835, %v2835
    %v2838 = vsel %vm76, %v2836, 0.0
    %2839 = vadd.xlane.f32.xlu0 %v2838
    %v2840 = vpop.xlane.xlu0 %2839
    %v2841 = vsel %vm76, %v2837, 0.0
    %2842 = vadd.xlane.f32.xlu0 %v2841
    %v2843 = vpop.xlane.xlu0 %2842
    %v2844 = vmul.f32 %v2840, %v83
    %v2845 = vmul.f32 %v2843, %v83
    %v2846 = vadd.f32 %v2844, 1e-12
    %v2847 = vadd.f32 %v2845, 1e-12
    %v2848 = vrsqrt.pop %v2846
    %v2849 = vrsqrt.pop %v2847
    %v2850 = vmul.f32 %v2834, %v2848
    %v2851 = vmul.f32 %v2835, %v2849
    %v2853 = vlaneseq
    %v2854 = vshrl.u32 %v2853, 7
    %v2855 = vsub.s32 0, %v2854
    %v2856 = vrot.slane %v2823, %v2855
    %v2858 = vmul.f32 %v2850, %v2856
    %v2859 = vmul.f32 %v2851, %v2856
    %v2861 = vlaneseq
    %v2862 = vshrl.u32 %v2861, 7
    %v2863 = vsub.s32 0, %v2862
    %v2864 = vrot.slane %v2825, %v2863
    %v2866 = vadd.f32 %v2858, %v2864
    %v2867 = vadd.f32 %v2859, %v2864
    %v2868 = vlaneseq
    %v2869 = vand.u32 %v2868, 127
    %v2870 = vlaneseq
    %v2871 = vshrl.u32 %v2870, 7
    %v2872 = vmul.u32 %v2871, 8
    %vm2873 = vcmp.eq.s32.totalorder %v2869, %v2872
    %v2874 = vsel %vm2873, 1, 0
    %v2875 = vcvt.s32.f32 %v2874
    %v2877 = vsel %vm222, %v2875, 0
    %2879 = vmatprep.subr.mxu0 0.0
    %2880 = vmatpush1.msra.mxu0 %v2866
    %2881 = vmatprep.subr.mxu0 0.0
    %2882 = vmatpush1.msra.mxu0 %v2867
    %2883 = vmatprep.subr.mxu0 0.0
    %2884 = vmatpush1.msra.mxu0 0.0
    %2885 = vmatprep.subr.mxu0 0.0
    %2886 = vmatpush1.msra.mxu0 0.0
    %2887 = vmatprep.subr.mxu0 0.0
    %2888 = vmatpush1.msra.mxu0 0.0
    %2889 = vmatprep.subr.mxu0 0.0
    %2890 = vmatpush1.msra.mxu0 0.0
    %2891 = vmatprep.subr.mxu0 0.0
    %2892 = vmatpush1.msra.mxu0 0.0
    %2893 = vmatprep.subr.mxu0 0.0
    %2894 = vmatpush1.msra.mxu0 0.0
    %2895 = vmatprep.subr.mxu0 0.0
    %2896 = vmatpush1.msra.mxu0 0.0
    %2897 = vmatprep.subr.mxu0 0.0
    %2898 = vmatpush1.msra.mxu0 0.0
    %2899 = vmatprep.subr.mxu0 0.0
    %2900 = vmatpush1.msra.mxu0 0.0
    %2901 = vmatprep.subr.mxu0 0.0
    %2902 = vmatpush1.msra.mxu0 0.0
    %2903 = vmatprep.subr.mxu0 0.0
    %2904 = vmatpush1.msra.mxu0 0.0
    %2905 = vmatprep.subr.mxu0 0.0
    %2906 = vmatpush1.msra.mxu0 0.0
    %2907 = vmatprep.subr.mxu0 0.0
    %2908 = vmatpush1.msra.mxu0 0.0
    %2909 = vmatprep.subr.mxu0 0.0
    %2910 = vmatpush1.msra.mxu0 0.0
    %2911 = vmatprep.subr.mxu0 0.0
    %2912 = vmatpush1.msra.mxu0 0.0
    %2913 = vmatprep.subr.mxu0 0.0
    %2914 = vmatpush1.msra.mxu0 0.0
    %2915 = vmatprep.subr.mxu0 0.0
    %2916 = vmatpush1.msra.mxu0 0.0
    %2917 = vmatprep.subr.mxu0 0.0
    %2918 = vmatpush1.msra.mxu0 0.0
    %2919 = vmatprep.subr.mxu0 0.0
    %2920 = vmatpush1.msra.mxu0 0.0
    %2921 = vmatprep.subr.mxu0 0.0
    %2922 = vmatpush1.msra.mxu0 0.0
    %2923 = vmatprep.subr.mxu0 0.0
    %2924 = vmatpush1.msra.mxu0 0.0
    %2925 = vmatprep.subr.mxu0 0.0
    %2926 = vmatpush1.msra.mxu0 0.0
    %2927 = vmatprep.subr.mxu0 0.0
    %2928 = vmatpush1.msra.mxu0 0.0
    %2929 = vmatprep.subr.mxu0 0.0
    %2930 = vmatpush1.msra.mxu0 0.0
    %2931 = vmatprep.subr.mxu0 0.0
    %2932 = vmatpush1.msra.mxu0 0.0
    %2933 = vmatprep.subr.mxu0 0.0
    %2934 = vmatpush1.msra.mxu0 0.0
    %2935 = vmatprep.subr.mxu0 0.0
    %2936 = vmatpush1.msra.mxu0 0.0
    %2937 = vmatprep.subr.mxu0 0.0
    %2938 = vmatpush1.msra.mxu0 0.0
    %2939 = vmatprep.subr.mxu0 0.0
    %2940 = vmatpush1.msra.mxu0 0.0
    %2941 = vmatprep.subr.mxu0 0.0
    %2942 = vmatpush1.msra.mxu0 0.0
    %2943 = vmatprep.mubr.f32.mxu0 0.0
    %2944 = vmatmul.mubr.f32.gmra.mrb[0].mxu0 %v2877
    %v2945 = vpop.f32.mrb[0].mxu0
    %v2946 = vadd.f32 0.0, %v2945
    %v2947 = vpop.f32.mrb[0].mxu0
    %2948 = vdwg.mxu0
    %v2949 = vld [vmem:[%s17] sm:$0xff]
    %v2950 = vld [vmem:[%s17 + $0x8] sm:$0xff]
    %v2951 = vld [vmem:[%s17 + $0x10] sm:$0xff]
    %v2952 = vld [vmem:[%s17 + $0x18] sm:$0xff]
    %v2953 = vld [vmem:[%s18] sm:$0x1]
    %v2955 = vlaneseq
    %v2956 = vshrl.u32 %v2955, 7
    %v2957 = vsub.s32 0, %v2956
    %v2958 = vrot.slane %v2953, %v2957
    %v2961 = vsel %vm76, %v2946, 0
    %2963 = vmatprep.subr.mxu0 0.0
    %2964 = vmatpush1.msra.mxu0 %v2949
    %2965 = vmatprep.subr.mxu0 0.0
    %2966 = vmatpush1.msra.mxu0 %v2950
    %2967 = vmatprep.subr.mxu0 0.0
    %2968 = vmatpush1.msra.mxu0 %v2951
    %2969 = vmatprep.subr.mxu0 0.0
    %2970 = vmatpush1.msra.mxu0 %v2952
    %2971 = vmatprep.subr.mxu0 0.0
    %2972 = vmatpush1.msra.mxu0 0.0
    %2973 = vmatprep.subr.mxu0 0.0
    %2974 = vmatpush1.msra.mxu0 0.0
    %2975 = vmatprep.subr.mxu0 0.0
    %2976 = vmatpush1.msra.mxu0 0.0
    %2977 = vmatprep.subr.mxu0 0.0
    %2978 = vmatpush1.msra.mxu0 0.0
    %2979 = vmatprep.subr.mxu0 0.0
    %2980 = vmatpush1.msra.mxu0 0.0
    %2981 = vmatprep.subr.mxu0 0.0
    %2982 = vmatpush1.msra.mxu0 0.0
    %2983 = vmatprep.subr.mxu0 0.0
    %2984 = vmatpush1.msra.mxu0 0.0
    %2985 = vmatprep.subr.mxu0 0.0
    %2986 = vmatpush1.msra.mxu0 0.0
    %2987 = vmatprep.subr.mxu0 0.0
    %2988 = vmatpush1.msra.mxu0 0.0
    %2989 = vmatprep.subr.mxu0 0.0
    %2990 = vmatpush1.msra.mxu0 0.0
    %2991 = vmatprep.subr.mxu0 0.0
    %2992 = vmatpush1.msra.mxu0 0.0
    %2993 = vmatprep.subr.mxu0 0.0
    %2994 = vmatpush1.msra.mxu0 0.0
    %2995 = vmatprep.subr.mxu0 0.0
    %2996 = vmatpush1.msra.mxu0 0.0
    %2997 = vmatprep.subr.mxu0 0.0
    %2998 = vmatpush1.msra.mxu0 0.0
    %2999 = vmatprep.subr.mxu0 0.0
    %3000 = vmatpush1.msra.mxu0 0.0
    %3001 = vmatprep.subr.mxu0 0.0
    %3002 = vmatpush1.msra.mxu0 0.0
    %3003 = vmatprep.subr.mxu0 0.0
    %3004 = vmatpush1.msra.mxu0 0.0
    %3005 = vmatprep.subr.mxu0 0.0
    %3006 = vmatpush1.msra.mxu0 0.0
    %3007 = vmatprep.subr.mxu0 0.0
    %3008 = vmatpush1.msra.mxu0 0.0
    %3009 = vmatprep.subr.mxu0 0.0
    %3010 = vmatpush1.msra.mxu0 0.0
    %3011 = vmatprep.subr.mxu0 0.0
    %3012 = vmatpush1.msra.mxu0 0.0
    %3013 = vmatprep.subr.mxu0 0.0
    %3014 = vmatpush1.msra.mxu0 0.0
    %3015 = vmatprep.subr.mxu0 0.0
    %3016 = vmatpush1.msra.mxu0 0.0
    %3017 = vmatprep.subr.mxu0 0.0
    %3018 = vmatpush1.msra.mxu0 0.0
    %3019 = vmatprep.subr.mxu0 0.0
    %3020 = vmatpush1.msra.mxu0 0.0
    %3021 = vmatprep.subr.mxu0 0.0
    %3022 = vmatpush1.msra.mxu0 0.0
    %3023 = vmatprep.subr.mxu0 0.0
    %3024 = vmatpush1.msra.mxu0 0.0
    %3025 = vmatprep.subr.mxu0 0.0
    %3026 = vmatpush1.msra.mxu0 0.0
    %3027 = vmatprep.mubr.f32.mxu0 0.0
    %3028 = vmatmul.mubr.f32.gmra.mrb[0].mxu0 %v2961
    %v3029 = vpop.f32.mrb[0].mxu0
    %v3030 = vadd.f32 %v2958, %v3029
    %v3031 = vpop.f32.mrb[0].mxu0
    %3032 = vdwg.mxu0
    %v3033 = vtanh.pop %v3030
    %v3034 = vld [vmem:[%s19] sm:$0xff]
    %v3035 = vld [vmem:[%s19 + $0x8] sm:$0xff]
    %v3036 = vld [vmem:[%s19 + $0x10] sm:$0xff]
    %v3037 = vld [vmem:[%s19 + $0x18] sm:$0xff]
    %v3038 = vld [vmem:[%s20] sm:$0x1]
    %v3040 = vlaneseq
    %v3041 = vshrl.u32 %v3040, 7
    %v3042 = vsub.s32 0, %v3041
    %v3043 = vrot.slane %v3038, %v3042
    %v3046 = vsel %vm76, %v3033, 0
    %3048 = vmatprep.subr.mxu0 0.0
    %3049 = vmatpush1.msra.mxu0 %v3034
    %3050 = vmatprep.subr.mxu0 0.0
    %3051 = vmatpush1.msra.mxu0 %v3035
    %3052 = vmatprep.subr.mxu0 0.0
    %3053 = vmatpush1.msra.mxu0 %v3036
    %3054 = vmatprep.subr.mxu0 0.0
    %3055 = vmatpush1.msra.mxu0 %v3037
    %3056 = vmatprep.subr.mxu0 0.0
    %3057 = vmatpush1.msra.mxu0 0.0
    %3058 = vmatprep.subr.mxu0 0.0
    %3059 = vmatpush1.msra.mxu0 0.0
    %3060 = vmatprep.subr.mxu0 0.0
    %3061 = vmatpush1.msra.mxu0 0.0
    %3062 = vmatprep.subr.mxu0 0.0
    %3063 = vmatpush1.msra.mxu0 0.0
    %3064 = vmatprep.subr.mxu0 0.0
    %3065 = vmatpush1.msra.mxu0 0.0
    %3066 = vmatprep.subr.mxu0 0.0
    %3067 = vmatpush1.msra.mxu0 0.0
    %3068 = vmatprep.subr.mxu0 0.0
    %3069 = vmatpush1.msra.mxu0 0.0
    %3070 = vmatprep.subr.mxu0 0.0
    %3071 = vmatpush1.msra.mxu0 0.0
    %3072 = vmatprep.subr.mxu0 0.0
    %3073 = vmatpush1.msra.mxu0 0.0
    %3074 = vmatprep.subr.mxu0 0.0
    %3075 = vmatpush1.msra.mxu0 0.0
    %3076 = vmatprep.subr.mxu0 0.0
    %3077 = vmatpush1.msra.mxu0 0.0
    %3078 = vmatprep.subr.mxu0 0.0
    %3079 = vmatpush1.msra.mxu0 0.0
    %3080 = vmatprep.subr.mxu0 0.0
    %3081 = vmatpush1.msra.mxu0 0.0
    %3082 = vmatprep.subr.mxu0 0.0
    %3083 = vmatpush1.msra.mxu0 0.0
    %3084 = vmatprep.subr.mxu0 0.0
    %3085 = vmatpush1.msra.mxu0 0.0
    %3086 = vmatprep.subr.mxu0 0.0
    %3087 = vmatpush1.msra.mxu0 0.0
    %3088 = vmatprep.subr.mxu0 0.0
    %3089 = vmatpush1.msra.mxu0 0.0
    %3090 = vmatprep.subr.mxu0 0.0
    %3091 = vmatpush1.msra.mxu0 0.0
    %3092 = vmatprep.subr.mxu0 0.0
    %3093 = vmatpush1.msra.mxu0 0.0
    %3094 = vmatprep.subr.mxu0 0.0
    %3095 = vmatpush1.msra.mxu0 0.0
    %3096 = vmatprep.subr.mxu0 0.0
    %3097 = vmatpush1.msra.mxu0 0.0
    %3098 = vmatprep.subr.mxu0 0.0
    %3099 = vmatpush1.msra.mxu0 0.0
    %3100 = vmatprep.subr.mxu0 0.0
    %3101 = vmatpush1.msra.mxu0 0.0
    %3102 = vmatprep.subr.mxu0 0.0
    %3103 = vmatpush1.msra.mxu0 0.0
    %3104 = vmatprep.subr.mxu0 0.0
    %3105 = vmatpush1.msra.mxu0 0.0
    %3106 = vmatprep.subr.mxu0 0.0
    %3107 = vmatpush1.msra.mxu0 0.0
    %3108 = vmatprep.subr.mxu0 0.0
    %3109 = vmatpush1.msra.mxu0 0.0
    %3110 = vmatprep.subr.mxu0 0.0
    %3111 = vmatpush1.msra.mxu0 0.0
    %3112 = vmatprep.mubr.f32.mxu0 0.0
    %3113 = vmatmul.mubr.f32.gmra.mrb[0].mxu0 %v3046
    %v3114 = vpop.f32.mrb[0].mxu0
    %v3115 = vadd.f32 %v3043, %v3114
    %v3116 = vpop.f32.mrb[0].mxu0
    %3117 = vdwg.mxu0
    %v3118 = vxor.u32 %v3115, 2147483648
    %v3119 = vmul.f32 %v3118, 1.442695
    %v3120 = vpow.pop %v3119
    %v3121 = vadd.f32 %v3120, 1.0
    %v3122 = vrcp.pop %v3121
    %v3123 = vmul.f32 1.0, %v3122
    %vm3124 = vcmask 17408
    %3125 = vst.msk [vmem:[#allocation2] sm:$0x3] %vm3124, %v3123
    %v3126 = vld [vmem:[%s2] sm:$0x3]
    %v3127 = vlog2.pop %v3123
    %v3128 = vmul.f32 %v3127, 0.6931472
    %v3129 = vmax.f32 %v3128, -100.0
    %v3130 = vsub.f32 1.0, %v3123
    %v3131 = vlog2.pop %v3130
    %v3132 = vmul.f32 %v3131, 0.6931472
    %v3133 = vmax.f32 %v3132, -100.0
    %v3134 = vmul.f32 %v3126, %v3129
    %v3135 = vsub.f32 1.0, %v3126
    %v3136 = vmul.f32 %v3135, %v3133
    %v3137 = vadd.f32 %v3134, %v3136
    %v3138 = vsel %vm3124, %v3137, 0.0
    %3139 = vadd.xlane.f32.xlu0 %v3138
    %v3140 = vpop.xlane.xlu0 %3139
    %v3141 = vrot.slane %v3140, 4
    %v3142 = vadd.f32 %v3140, %v3141
    %v3143 = vrot.slane %v3142, 2
    %v3144 = vadd.f32 %v3142, %v3143
    %v3145 = vrot.slane %v3144, 1
    %v3146 = vadd.f32 %v3144, %v3145
    %s3147 = vtos %v3146
    %v3148 = vstv %s3147
    %v3149 = vrcp.pop 6.0
    %v3150 = vmul.f32 %v3148, %v3149
    %v3151 = vsub.f32 0.0, %v3150
    %vm3152 = vcmask 0
    %3153 = vst.msk [vmem:[#allocation4] sm:$0x1] %vm3152, %v3151
    // Predicated region
    $region86: #{bert_classifier_forward.1} parent=1 // pred_check
      _
    $region87: #{bert_classifier_forward.1} parent=1 // pred_check_branch
      %3155 = sbr.rel (0) target = $region89
    $region88: #{bert_classifier_forward.1} parent=1 // pred_region
      %s3157 = ssub.s32 32, 32
      %3158 = vsyncadd [#allocation3], %s3157
      %s3160 = sshll.u32 [#allocation2], 4
      %s3161 = int_to_ptr.vmem [resolvable:$true] %s3160
      %3163 = dma.vmem_to_hbm [thread:$0]  %s3161, 32, %s21, [#allocation3]
    $region89: #{bert_classifier_forward.1} parent=1 // pred_fallthru
      _
    // Predicated region
    $region90: #{bert_classifier_forward.1} parent=1 // pred_check
      _
    $region91: #{bert_classifier_forward.1} parent=1 // pred_check_branch
      %3165 = sbr.rel (0) target = $region93
    $region92: #{bert_classifier_forward.1} parent=1 // pred_region
      %s3167 = ssub.s32 16, 16
      %3168 = vsyncadd [#allocation5], %s3167
      %s3170 = sshll.u32 [#allocation4], 4
      %s3171 = int_to_ptr.vmem [resolvable:$true] %s3170
      %3173 = dma.vmem_to_hbm [thread:$0]  %s3171, 16, %s22, [#allocation5]
    $region93: #{bert_classifier_forward.1} parent=1 // pred_fallthru
      _
    // Predicated region
    $region94: #{bert_classifier_forward.1} parent=1 // pred_check
      _
    $region95: #{bert_classifier_forward.1} parent=1 // pred_check_branch
      %3175 = sbr.rel (0) target = $region97
    $region96: #{bert_classifier_forward.1} parent=1 // pred_region
      %3176 = dma.done [#allocation3], 32
    $region97: #{bert_classifier_forward.1} parent=1 // pred_fallthru
      _
    // Predicated region
    $region98: #{bert_classifier_forward.1} parent=1 // pred_check
      _
    $region99: #{bert_classifier_forward.1} parent=1 // pred_check_branch
      %3178 = sbr.rel (0) target = $region101
    $region100: #{bert_classifier_forward.1} parent=1 // pred_region
      %3179 = dma.done [#allocation5], 16
    $region101: #{bert_classifier_forward.1} parent=1 // pred_fallthru
      _
    %3180 = vsyncpa [#allocation3], 1
    %3181 = vsyncpa [#allocation5], 1

</llo_original>
